<compile_context>
chip_gen: v6e
topology: v6e:2x2x1
jax: 0.10.0
libtpu: 0.0.40
codegen_flags: <defaults>
</compile_context>

<pallas_src>
import math
import jax
import jax.numpy as jnp
from jax.experimental import pallas as pl
from jax.experimental.pallas import tpu as pltpu

# ---------------- small synthetic config ----------------
VOCAB = 100
SEQ = 8
HIDDEN = 32
N_HEADS = 4
HEAD_DIM = HIDDEN // N_HEADS
FFN = 64
N_LAYERS = 2
NUM_LABELS = 2
BATCH = 2
ROWS = BATCH * SEQ
LN_EPS = 1e-12

# ---------------- packed-slab layout (row offsets; matrix blocks 8-aligned) ----
# encoder slab: (N_LAYERS, ENC_ROWS, ENC_LANES) float32
E_WQ, E_WK, E_WV, E_WO = 0, 32, 64, 96            # (H, H) each
E_WF1 = 128                                        # (H, FFN)
E_WF2 = 160                                        # (FFN, H)
E_VEC = 224                                        # bias / LN rows (one per row)
(V_BQ, V_BK, V_BV, V_BO, V_G1, V_BE1, V_BF1, V_BF2, V_G2, V_BE2) = range(10)
ENC_ROWS, ENC_LANES = 240, 64

# misc slab: (MISC_ROWS, MISC_LANES) float32
VOCAB_PAD = 104                                    # vocab rows padded to 8-multiple
M_EMB = 0                                          # word embeddings
M_POS = 104                                        # positional embeddings (SEQ rows)
M_EMB_G, M_EMB_B = 112, 113                        # embedding LayerNorm
M_Q = 114                                          # learned decoder query
M_DBQ, M_DBK, M_DBV, M_DBO, M_LINB = 115, 116, 117, 118, 119
M_DWQ, M_DWK, M_DWV, M_DWO, M_LINW = 120, 152, 184, 216, 248
MISC_ROWS, MISC_LANES = 280, 32


def _layer_norm(x, gamma, beta, eps=LN_EPS):
    mu = jnp.mean(x, axis=-1, keepdims=True)
    var = jnp.mean((x - mu) ** 2, axis=-1, keepdims=True)
    return (x - mu) * jax.lax.rsqrt(var + eps) * gamma + beta


# ---------------- the fused kernel ----------------
def senti_kernel(ids_ref, mask_ref, enc_ref, misc_ref, out_ref):
    f32 = jnp.float32

    # ---- embeddings: one-hot gather + positional + LayerNorm ----
    ids = ids_ref[...]                                                  # (B*S, 1) i32
    onehot = (ids == jax.lax.broadcasted_iota(
        jnp.int32, (ROWS, VOCAB_PAD), 1)).astype(f32)                   # (B*S, Vp)
    emb = jnp.dot(onehot, misc_ref[M_EMB:M_EMB + VOCAB_PAD, :],
                  preferred_element_type=f32)                           # (B*S, H)
    pos = misc_ref[M_POS:M_POS + SEQ, :]                                # (S, H)
    emb = (emb.reshape(BATCH, SEQ, HIDDEN) + pos[None, :, :]).reshape(ROWS, HIDDEN)
    x = _layer_norm(emb, misc_ref[M_EMB_G:M_EMB_G + 1, :],
                    misc_ref[M_EMB_B:M_EMB_B + 1, :])                   # (B*S, H)

    # additive key-padding mask, shaped to broadcast against (B, Sq, Sk, NH)
    mask_add = (1.0 - mask_ref[...].astype(f32)) * (-1e9)               # (B,1,S,1)

    # per-head indicator matrices (built once from iota, reused every layer):
    #   head_sum[d, h] = 1 iff lane d belongs to head h   (per-head score sums)
    #   head_rep[h, d] = head_sum^T                        (per-head prob broadcast)
    lane = jax.lax.broadcasted_iota(jnp.int32, (HIDDEN, N_HEADS), 0)
    head = jax.lax.broadcasted_iota(jnp.int32, (HIDDEN, N_HEADS), 1)
    head_sum = jnp.logical_and(lane >= head * HEAD_DIM,
                               lane < (head + 1) * HEAD_DIM).astype(f32)
    lane_r = jax.lax.broadcasted_iota(jnp.int32, (N_HEADS, HIDDEN), 1)
    head_r = jax.lax.broadcasted_iota(jnp.int32, (N_HEADS, HIDDEN), 0)
    head_rep = jnp.logical_and(lane_r >= head_r * HEAD_DIM,
                               lane_r < (head_r + 1) * HEAD_DIM).astype(f32)

    scale = 1.0 / math.sqrt(HEAD_DIM)

    # ---- encoder: static unroll over the (tiny) layer count ----
    for l in range(N_LAYERS):
        wq = enc_ref[l, E_WQ:E_WQ + HIDDEN, :HIDDEN]
        wk = enc_ref[l, E_WK:E_WK + HIDDEN, :HIDDEN]
        wv = enc_ref[l, E_WV:E_WV + HIDDEN, :HIDDEN]
        wo = enc_ref[l, E_WO:E_WO + HIDDEN, :HIDDEN]
        wf1 = enc_ref[l, E_WF1:E_WF1 + HIDDEN, :FFN]
        wf2 = enc_ref[l, E_WF2:E_WF2 + FFN, :HIDDEN]
        bq = enc_ref[l, E_VEC + V_BQ:E_VEC + V_BQ + 1, :HIDDEN]
        bk = enc_ref[l, E_VEC + V_BK:E_VEC + V_BK + 1, :HIDDEN]
        bv = enc_ref[l, E_VEC + V_BV:E_VEC + V_BV + 1, :HIDDEN]
        bo = enc_ref[l, E_VEC + V_BO:E_VEC + V_BO + 1, :HIDDEN]
        g1 = enc_ref[l, E_VEC + V_G1:E_VEC + V_G1 + 1, :HIDDEN]
        be1 = enc_ref[l, E_VEC + V_BE1:E_VEC + V_BE1 + 1, :HIDDEN]
        bf1 = enc_ref[l, E_VEC + V_BF1:E_VEC + V_BF1 + 1, :FFN]
        bf2 = enc_ref[l, E_VEC + V_BF2:E_VEC + V_BF2 + 1, :HIDDEN]
        g2 = enc_ref[l, E_VEC + V_G2:E_VEC + V_G2 + 1, :HIDDEN]
        be2 = enc_ref[l, E_VEC + V_BE2:E_VEC + V_BE2 + 1, :HIDDEN]

        # Q/K/V: three lane-aligned (H,H) matmuls against the resident activation
        q = (jnp.dot(x, wq, preferred_element_type=f32) + bq).reshape(BATCH, SEQ, HIDDEN)
        k = (jnp.dot(x, wk, preferred_element_type=f32) + bk).reshape(BATCH, SEQ, HIDDEN)
        v = (jnp.dot(x, wv, preferred_element_type=f32) + bv).reshape(BATCH, SEQ, HIDDEN)

        # scores: VPU outer product over (query, key) + per-head lane-group sum
        prod = q[:, :, None, :] * k[:, None, :, :]                       # (B,Sq,Sk,H)
        s = jnp.dot(prod.reshape(ROWS * SEQ, HIDDEN), head_sum,
                    preferred_element_type=f32)                          # (B*Sq*Sk, NH)
        s = s.reshape(BATCH, SEQ, SEQ, N_HEADS) * scale + mask_add
        s = s - jnp.max(s, axis=2, keepdims=True)                        # softmax over keys
        e = jnp.exp(s)
        p = e / jnp.sum(e, axis=2, keepdims=True)

        # context: broadcast per-head probs back onto head lanes, weight V, sum keys
        p_rep = jnp.dot(p.reshape(ROWS * SEQ, N_HEADS), head_rep,
                        preferred_element_type=f32).reshape(BATCH, SEQ, SEQ, HIDDEN)
        ctx = jnp.sum(p_rep * v[:, None, :, :], axis=2).reshape(ROWS, HIDDEN)

        attn_out = jnp.dot(ctx, wo, preferred_element_type=f32) + bo
        h1 = _layer_norm(x + attn_out, g1, be1)

        ff = jnp.dot(h1, wf1, preferred_element_type=f32) + bf1
        ff = jax.nn.gelu(ff, approximate=True)
        ff = jnp.dot(ff, wf2, preferred_element_type=f32) + bf2
        x = _layer_norm(h1 + ff, g2, be2)                                # (B*S, H)

    # ---- decoder head: learned-query single-head cross-attention + linear + sigmoid
    dwq = misc_ref[M_DWQ:M_DWQ + HIDDEN, :]
    dwk = misc_ref[M_DWK:M_DWK + HIDDEN, :]
    dwv = misc_ref[M_DWV:M_DWV + HIDDEN, :]
    dwo = misc_ref[M_DWO:M_DWO + HIDDEN, :]
    qv = (jnp.dot(misc_ref[M_Q:M_Q + 1, :], dwq, preferred_element_type=f32)
          + misc_ref[M_DBQ:M_DBQ + 1, :])                                # (1, H)
    kk = (jnp.dot(x, dwk, preferred_element_type=f32)
          + misc_ref[M_DBK:M_DBK + 1, :]).reshape(BATCH, SEQ, HIDDEN)
    vv = (jnp.dot(x, dwv, preferred_element_type=f32)
          + misc_ref[M_DBV:M_DBV + 1, :]).reshape(BATCH, SEQ, HIDDEN)
    s = jnp.sum(kk * qv, axis=-1, keepdims=True) * (1.0 / math.sqrt(HIDDEN))  # (B,S,1)
    s = s - jnp.max(s, axis=1, keepdims=True)
    e = jnp.exp(s)
    p = e / jnp.sum(e, axis=1, keepdims=True)
    ctx = jnp.sum(p * vv, axis=1)                                         # (B, H)
    attn = (jnp.dot(ctx, dwo, preferred_element_type=f32)
            + misc_ref[M_DBO:M_DBO + 1, :])
    logits = (jnp.dot(attn, misc_ref[M_LINW:M_LINW + HIDDEN, :NUM_LABELS],
                      preferred_element_type=f32)
              + misc_ref[M_LINB:M_LINB + 1, :NUM_LABELS])
    out_ref[...] = jax.nn.sigmoid(logits)                                 # (B, NUM_LABELS)


# ---------------- host-side parameter packing ----------------
def pack_params(params):
    f32 = jnp.float32
    enc = jnp.zeros((N_LAYERS, ENC_ROWS, ENC_LANES), f32)
    for l, lp in enumerate(params["layers"]):
        enc = enc.at[l, E_WQ:E_WQ + HIDDEN, :HIDDEN].set(lp["wq"])
        enc = enc.at[l, E_WK:E_WK + HIDDEN, :HIDDEN].set(lp["wk"])
        enc = enc.at[l, E_WV:E_WV + HIDDEN, :HIDDEN].set(lp["wv"])
        enc = enc.at[l, E_WO:E_WO + HIDDEN, :HIDDEN].set(lp["wo"])
        enc = enc.at[l, E_WF1:E_WF1 + HIDDEN, :FFN].set(lp["wf1"])
        enc = enc.at[l, E_WF2:E_WF2 + FFN, :HIDDEN].set(lp["wf2"])
        for off, name, width in ((V_BQ, "bq", HIDDEN), (V_BK, "bk", HIDDEN),
                                 (V_BV, "bv", HIDDEN), (V_BO, "bo", HIDDEN),
                                 (V_G1, "g1", HIDDEN), (V_BE1, "be1", HIDDEN),
                                 (V_BF1, "bf1", FFN), (V_BF2, "bf2", HIDDEN),
                                 (V_G2, "g2", HIDDEN), (V_BE2, "be2", HIDDEN)):
            enc = enc.at[l, E_VEC + off, :width].set(lp[name][0])

    misc = jnp.zeros((MISC_ROWS, MISC_LANES), f32)
    misc = misc.at[M_EMB:M_EMB + VOCAB, :].set(params["word_emb"])
    misc = misc.at[M_POS:M_POS + SEQ, :].set(params["pos_emb"])
    misc = misc.at[M_EMB_G, :].set(params["emb_g"][0])
    misc = misc.at[M_EMB_B, :].set(params["emb_be"][0])
    misc = misc.at[M_Q, :].set(params["Q"][0])
    misc = misc.at[M_DBQ, :].set(params["dec_bq"][0])
    misc = misc.at[M_DBK, :].set(params["dec_bk"][0])
    misc = misc.at[M_DBV, :].set(params["dec_bv"][0])
    misc = misc.at[M_DBO, :].set(params["dec_bo"][0])
    misc = misc.at[M_LINB, :NUM_LABELS].set(params["lin_b"][0])
    misc = misc.at[M_DWQ:M_DWQ + HIDDEN, :].set(params["dec_wq"])
    misc = misc.at[M_DWK:M_DWK + HIDDEN, :].set(params["dec_wk"])
    misc = misc.at[M_DWV:M_DWV + HIDDEN, :].set(params["dec_wv"])
    misc = misc.at[M_DWO:M_DWO + HIDDEN, :].set(params["dec_wo"])
    misc = misc.at[M_LINW:M_LINW + HIDDEN, :NUM_LABELS].set(params["lin_w"])
    return enc, misc


def run_fused(input_ids, attention_mask, enc_slab, misc_slab):
    # host-side reshapes only (layout-identical bitcasts), no arithmetic
    ids = input_ids.reshape(ROWS, 1).astype(jnp.int32)
    mask = attention_mask.reshape(BATCH, 1, SEQ, 1).astype(jnp.int32)
    vmem = pl.BlockSpec(memory_space=pltpu.MemorySpace.VMEM)
    return pl.pallas_call(
        senti_kernel,
        out_shape=jax.ShapeDtypeStruct((BATCH, NUM_LABELS), jnp.float32),
        in_specs=[vmem, vmem, vmem, vmem],
        out_specs=vmem,
    )(ids, mask, enc_slab, misc_slab)


def senti_distilbert_forward(params, input_ids, attention_mask):
    enc_slab, misc_slab = pack_params(params)
    return run_fused(input_ids, attention_mask, enc_slab, misc_slab)


# ---------------- pure-JAX reference (sanity check) ----------------
def ref_forward(params, input_ids, attention_mask):
    x = params["word_emb"][input_ids] + params["pos_emb"][None, :SEQ, :]
    x = _layer_norm(x, params["emb_g"], params["emb_be"])
    mask_add = (1.0 - attention_mask.astype(jnp.float32))[:, None, :] * (-1e9)

    scale = 1.0 / math.sqrt(HEAD_DIM)
    B = x.shape[0]
    for lp in params["layers"]:
        q = (x @ lp["wq"] + lp["bq"]).reshape(B, SEQ, N_HEADS, HEAD_DIM)
        k = (x @ lp["wk"] + lp["bk"]).reshape(B, SEQ, N_HEADS, HEAD_DIM)
        v = (x @ lp["wv"] + lp["bv"]).reshape(B, SEQ, N_HEADS, HEAD_DIM)
        s = jnp.einsum("bqhd,bkhd->bhqk", q, k) * scale + mask_add[:, None, :, :]
        p = jax.nn.softmax(s, axis=-1)
        ctx = jnp.einsum("bhqk,bkhd->bqhd", p, v).reshape(B, SEQ, HIDDEN)
        attn_out = ctx @ lp["wo"] + lp["bo"]
        h1 = _layer_norm(x + attn_out, lp["g1"], lp["be1"])
        ff = jax.nn.gelu(h1 @ lp["wf1"] + lp["bf1"], approximate=True) @ lp["wf2"] + lp["bf2"]
        x = _layer_norm(h1 + ff, lp["g2"], lp["be2"])

    q = params["Q"] @ params["dec_wq"] + params["dec_bq"]
    k = x @ params["dec_wk"] + params["dec_bk"]
    v = x @ params["dec_wv"] + params["dec_bv"]
    s = jnp.einsum("ld,bsd->bls", q, k) / math.sqrt(HIDDEN)
    p = jax.nn.softmax(s, axis=-1)
    ctx = jnp.einsum("bls,bsd->bld", p, v)
    out = (ctx @ params["dec_wo"] + params["dec_bo"])[:, 0, :]
    return jax.nn.sigmoid(out @ params["lin_w"] + params["lin_b"])


# ---------------- deterministic parameter init ----------------
def init_params(key):
    ks = iter(jax.random.split(key, 64))
    w = lambda shape, s=0.02: (jax.random.normal(next(ks), shape, jnp.float32) * s)
    layers = []
    for _ in range(N_LAYERS):
        layers.append(dict(
            wq=w((HIDDEN, HIDDEN)), bq=jnp.zeros((1, HIDDEN), jnp.float32),
            wk=w((HIDDEN, HIDDEN)), bk=jnp.zeros((1, HIDDEN), jnp.float32),
            wv=w((HIDDEN, HIDDEN)), bv=jnp.zeros((1, HIDDEN), jnp.float32),
            wo=w((HIDDEN, HIDDEN)), bo=jnp.zeros((1, HIDDEN), jnp.float32),
            g1=jnp.ones((1, HIDDEN), jnp.float32), be1=jnp.zeros((1, HIDDEN), jnp.float32),
            wf1=w((HIDDEN, FFN)), bf1=jnp.zeros((1, FFN), jnp.float32),
            wf2=w((FFN, HIDDEN)), bf2=jnp.zeros((1, HIDDEN), jnp.float32),
            g2=jnp.ones((1, HIDDEN), jnp.float32), be2=jnp.zeros((1, HIDDEN), jnp.float32),
        ))
    return dict(
        word_emb=w((VOCAB, HIDDEN)), pos_emb=w((SEQ, HIDDEN)),
        emb_g=jnp.ones((1, HIDDEN), jnp.float32), emb_be=jnp.zeros((1, HIDDEN), jnp.float32),
        layers=layers,
        Q=jax.random.normal(next(ks), (1, HIDDEN), jnp.float32),   # torch.randn
        dec_wq=w((HIDDEN, HIDDEN)), dec_bq=jnp.zeros((1, HIDDEN), jnp.float32),
        dec_wk=w((HIDDEN, HIDDEN)), dec_bk=jnp.zeros((1, HIDDEN), jnp.float32),
        dec_wv=w((HIDDEN, HIDDEN)), dec_bv=jnp.zeros((1, HIDDEN), jnp.float32),
        dec_wo=w((HIDDEN, HIDDEN)), dec_bo=jnp.zeros((1, HIDDEN), jnp.float32),
        lin_w=w((HIDDEN, NUM_LABELS)), lin_b=jnp.zeros((1, NUM_LABELS), jnp.float32),
    )


if __name__ == "__main__":
    key = jax.random.PRNGKey(0)
    kp, ki = jax.random.split(key)
    params = init_params(kp)

    input_ids = jax.random.randint(ki, (BATCH, SEQ), 0, VOCAB, dtype=jnp.int32)
    attention_mask = jnp.array([[1, 1, 1, 1, 1, 1, 1, 1],
                                [1, 1, 1, 1, 1, 0, 0, 0]], dtype=jnp.int32)

    out = senti_distilbert_forward(params, input_ids, attention_mask)
    out = jax.block_until_ready(out)

    ref = jax.block_until_ready(ref_forward(params, input_ids, attention_mask))
    assert out.shape == (BATCH, NUM_LABELS)
    # exact softmax division now; residual tolerance covers MXU precision-order differences
    assert jnp.allclose(out, ref, atol=1e-3, rtol=1e-3), (out, ref)

    print("KERNEL_OK")
</pallas_src>

<mosaic_0001>
module attributes {stable_mosaic.version = 11 : i64} {
  func.func @senti_kernel(%arg0: memref<16x1xi32, #tpu.memory_space<vmem>>, %arg1: memref<2x1x8x1xi32, #tpu.memory_space<vmem>>, %arg2: memref<2x240x64xf32, #tpu.memory_space<vmem>>, %arg3: memref<280x32xf32, #tpu.memory_space<vmem>>, %arg4: memref<2x2xf32, #tpu.memory_space<vmem>>) attributes {dimension_semantics = [], scalar_prefetch = 0 : i64, scratch_operands = 0 : i64, tpu.core_type = #tpu.core_type<tc>} {
    %c0 = arith.constant 0 : index
    %c0_0 = arith.constant 0 : index
    %0 = vector.load %arg0[%c0, %c0_0] : memref<16x1xi32, #tpu.memory_space<vmem>>, vector<16x1xi32>
    %1 = tpu.iota {dimensions = array<i32: 1>} : vector<16x104xi32>
    %2 = vector.broadcast %0 : vector<16x1xi32> to vector<16x104xi32>
    %3 = arith.cmpi eq, %2, %1 : vector<16x104xi32>
    %4 = arith.extui %3 : vector<16x104xi1> to vector<16x104xi32>
    %5 = arith.sitofp %4 : vector<16x104xi32> to vector<16x104xf32>
    %c0_1 = arith.constant 0 : index
    %c0_2 = arith.constant 0 : index
    %6 = vector.load %arg3[%c0_1, %c0_2] : memref<280x32xf32, #tpu.memory_space<vmem>>, vector<104x32xf32>
    %cst = arith.constant dense<0.000000e+00> : vector<16x32xf32>
    %7 = tpu.matmul %5, %6, %cst {dimension_numbers = #tpu.dot_dimension_numbers<[1], [0], [0], [1], [0, 0, 1, 1], [], []>} : vector<16x104xf32>, vector<104x32xf32>, vector<16x32xf32> -> vector<16x32xf32>
    %c104 = arith.constant 104 : index
    %c0_3 = arith.constant 0 : index
    %8 = vector.load %arg3[%c104, %c0_3] : memref<280x32xf32, #tpu.memory_space<vmem>>, vector<8x32xf32>
    %9 = vector.shape_cast %7 : vector<16x32xf32> to vector<2x8x32xf32>
    %10 = vector.shape_cast %8 : vector<8x32xf32> to vector<1x8x32xf32>
    %11 = vector.broadcast %10 : vector<1x8x32xf32> to vector<2x8x32xf32>
    %12 = arith.addf %9, %11 : vector<2x8x32xf32>
    %13 = vector.shape_cast %12 : vector<2x8x32xf32> to vector<16x32xf32>
    %c112 = arith.constant 112 : index
    %c0_4 = arith.constant 0 : index
    %14 = vector.load %arg3[%c112, %c0_4] : memref<280x32xf32, #tpu.memory_space<vmem>>, vector<1x32xf32>
    %c113 = arith.constant 113 : index
    %c0_5 = arith.constant 0 : index
    %15 = vector.load %arg3[%c113, %c0_5] : memref<280x32xf32, #tpu.memory_space<vmem>>, vector<1x32xf32>
    %cst_6 = arith.constant dense<0.000000e+00> : vector<16xf32>
    %16 = vector.multi_reduction <add>, %13, %cst_6 [1] : vector<16x32xf32> to vector<16xf32>
    %17 = vector.shape_cast %16 : vector<16xf32> to vector<16x1xf32>
    %cst_7 = arith.constant 3.200000e+01 : f32
    %18 = vector.broadcast %cst_7 : f32 to vector<16x1xf32>
    %19 = arith.divf %17, %18 : vector<16x1xf32>
    %20 = vector.broadcast %19 : vector<16x1xf32> to vector<16x32xf32>
    %21 = arith.subf %13, %20 : vector<16x32xf32>
    %22 = arith.mulf %21, %21 : vector<16x32xf32>
    %cst_8 = arith.constant dense<0.000000e+00> : vector<16xf32>
    %23 = vector.multi_reduction <add>, %22, %cst_8 [1] : vector<16x32xf32> to vector<16xf32>
    %24 = vector.shape_cast %23 : vector<16xf32> to vector<16x1xf32>
    %cst_9 = arith.constant 3.200000e+01 : f32
    %25 = vector.broadcast %cst_9 : f32 to vector<16x1xf32>
    %26 = arith.divf %24, %25 : vector<16x1xf32>
    %27 = vector.broadcast %19 : vector<16x1xf32> to vector<16x32xf32>
    %28 = arith.subf %13, %27 : vector<16x32xf32>
    %cst_10 = arith.constant 9.99999996E-13 : f32
    %29 = vector.broadcast %cst_10 : f32 to vector<16x1xf32>
    %30 = arith.addf %26, %29 : vector<16x1xf32>
    %31 = math.rsqrt %30 : vector<16x1xf32>
    %32 = vector.broadcast %31 : vector<16x1xf32> to vector<16x32xf32>
    %33 = arith.mulf %28, %32 : vector<16x32xf32>
    %34 = vector.broadcast %14 : vector<1x32xf32> to vector<16x32xf32>
    %35 = arith.mulf %33, %34 : vector<16x32xf32>
    %36 = vector.broadcast %15 : vector<1x32xf32> to vector<16x32xf32>
    %37 = arith.addf %35, %36 : vector<16x32xf32>
    %c0_11 = arith.constant 0 : index
    %c0_12 = arith.constant 0 : index
    %c0_13 = arith.constant 0 : index
    %c0_14 = arith.constant 0 : index
    %38 = vector.load %arg1[%c0_11, %c0_12, %c0_13, %c0_14] : memref<2x1x8x1xi32, #tpu.memory_space<vmem>>, vector<2x1x8x1xi32>
    %39 = arith.sitofp %38 : vector<2x1x8x1xi32> to vector<2x1x8x1xf32>
    %cst_15 = arith.constant 1.000000e+00 : f32
    %40 = vector.broadcast %cst_15 : f32 to vector<2x1x8x1xf32>
    %41 = arith.subf %40, %39 : vector<2x1x8x1xf32>
    %cst_16 = arith.constant -1.000000e+09 : f32
    %42 = vector.broadcast %cst_16 : f32 to vector<2x1x8x1xf32>
    %43 = arith.mulf %41, %42 : vector<2x1x8x1xf32>
    %44 = tpu.iota {dimensions = array<i32: 0>} : vector<32x4xi32>
    %45 = tpu.iota {dimensions = array<i32: 1>} : vector<32x4xi32>
    %c8_i32 = arith.constant 8 : i32
    %46 = vector.broadcast %c8_i32 : i32 to vector<32x4xi32>
    %47 = arith.muli %45, %46 : vector<32x4xi32>
    %48 = arith.cmpi sge, %44, %47 : vector<32x4xi32>
    %c1_i32 = arith.constant 1 : i32
    %49 = vector.broadcast %c1_i32 : i32 to vector<32x4xi32>
    %50 = arith.addi %45, %49 : vector<32x4xi32>
    %c8_i32_17 = arith.constant 8 : i32
    %51 = vector.broadcast %c8_i32_17 : i32 to vector<32x4xi32>
    %52 = arith.muli %50, %51 : vector<32x4xi32>
    %53 = arith.cmpi slt, %44, %52 : vector<32x4xi32>
    %54 = arith.andi %48, %53 : vector<32x4xi1>
    %55 = arith.extui %54 : vector<32x4xi1> to vector<32x4xi32>
    %56 = arith.sitofp %55 : vector<32x4xi32> to vector<32x4xf32>
    %57 = tpu.iota {dimensions = array<i32: 1>} : vector<4x32xi32>
    %58 = tpu.iota {dimensions = array<i32: 0>} : vector<4x32xi32>
    %c8_i32_18 = arith.constant 8 : i32
    %59 = vector.broadcast %c8_i32_18 : i32 to vector<4x32xi32>
    %60 = arith.muli %58, %59 : vector<4x32xi32>
    %61 = arith.cmpi sge, %57, %60 : vector<4x32xi32>
    %c1_i32_19 = arith.constant 1 : i32
    %62 = vector.broadcast %c1_i32_19 : i32 to vector<4x32xi32>
    %63 = arith.addi %58, %62 : vector<4x32xi32>
    %c8_i32_20 = arith.constant 8 : i32
    %64 = vector.broadcast %c8_i32_20 : i32 to vector<4x32xi32>
    %65 = arith.muli %63, %64 : vector<4x32xi32>
    %66 = arith.cmpi slt, %57, %65 : vector<4x32xi32>
    %67 = arith.andi %61, %66 : vector<4x32xi1>
    %68 = arith.extui %67 : vector<4x32xi1> to vector<4x32xi32>
    %69 = arith.sitofp %68 : vector<4x32xi32> to vector<4x32xf32>
    %c0_21 = arith.constant 0 : index
    %c0_22 = arith.constant 0 : index
    %c0_23 = arith.constant 0 : index
    %70 = vector.load %arg2[%c0_21, %c0_22, %c0_23] : memref<2x240x64xf32, #tpu.memory_space<vmem>>, vector<1x32x32xf32>
    %71 = vector.shape_cast %70 : vector<1x32x32xf32> to vector<32x32xf32>
    %c0_24 = arith.constant 0 : index
    %c32 = arith.constant 32 : index
    %c0_25 = arith.constant 0 : index
    %72 = vector.load %arg2[%c0_24, %c32, %c0_25] : memref<2x240x64xf32, #tpu.memory_space<vmem>>, vector<1x32x32xf32>
    %73 = vector.shape_cast %72 : vector<1x32x32xf32> to vector<32x32xf32>
    %c0_26 = arith.constant 0 : index
    %c64 = arith.constant 64 : index
    %c0_27 = arith.constant 0 : index
    %74 = vector.load %arg2[%c0_26, %c64, %c0_27] : memref<2x240x64xf32, #tpu.memory_space<vmem>>, vector<1x32x32xf32>
    %75 = vector.shape_cast %74 : vector<1x32x32xf32> to vector<32x32xf32>
    %c0_28 = arith.constant 0 : index
    %c96 = arith.constant 96 : index
    %c0_29 = arith.constant 0 : index
    %76 = vector.load %arg2[%c0_28, %c96, %c0_29] : memref<2x240x64xf32, #tpu.memory_space<vmem>>, vector<1x32x32xf32>
    %77 = vector.shape_cast %76 : vector<1x32x32xf32> to vector<32x32xf32>
    %c0_30 = arith.constant 0 : index
    %c128 = arith.constant 128 : index
    %c0_31 = arith.constant 0 : index
    %78 = vector.load %arg2[%c0_30, %c128, %c0_31] : memref<2x240x64xf32, #tpu.memory_space<vmem>>, vector<1x32x64xf32>
    %79 = vector.shape_cast %78 : vector<1x32x64xf32> to vector<32x64xf32>
    %c0_32 = arith.constant 0 : index
    %c160 = arith.constant 160 : index
    %c0_33 = arith.constant 0 : index
    %80 = vector.load %arg2[%c0_32, %c160, %c0_33] : memref<2x240x64xf32, #tpu.memory_space<vmem>>, vector<1x64x32xf32>
    %81 = vector.shape_cast %80 : vector<1x64x32xf32> to vector<64x32xf32>
    %c0_34 = arith.constant 0 : index
    %c224 = arith.constant 224 : index
    %c0_35 = arith.constant 0 : index
    %82 = vector.load %arg2[%c0_34, %c224, %c0_35] : memref<2x240x64xf32, #tpu.memory_space<vmem>>, vector<1x1x32xf32>
    %83 = vector.shape_cast %82 : vector<1x1x32xf32> to vector<1x32xf32>
    %c0_36 = arith.constant 0 : index
    %c225 = arith.constant 225 : index
    %c0_37 = arith.constant 0 : index
    %84 = vector.load %arg2[%c0_36, %c225, %c0_37] : memref<2x240x64xf32, #tpu.memory_space<vmem>>, vector<1x1x32xf32>
    %85 = vector.shape_cast %84 : vector<1x1x32xf32> to vector<1x32xf32>
    %c0_38 = arith.constant 0 : index
    %c226 = arith.constant 226 : index
    %c0_39 = arith.constant 0 : index
    %86 = vector.load %arg2[%c0_38, %c226, %c0_39] : memref<2x240x64xf32, #tpu.memory_space<vmem>>, vector<1x1x32xf32>
    %87 = vector.shape_cast %86 : vector<1x1x32xf32> to vector<1x32xf32>
    %c0_40 = arith.constant 0 : index
    %c227 = arith.constant 227 : index
    %c0_41 = arith.constant 0 : index
    %88 = vector.load %arg2[%c0_40, %c227, %c0_41] : memref<2x240x64xf32, #tpu.memory_space<vmem>>, vector<1x1x32xf32>
    %89 = vector.shape_cast %88 : vector<1x1x32xf32> to vector<1x32xf32>
    %c0_42 = arith.constant 0 : index
    %c228 = arith.constant 228 : index
    %c0_43 = arith.constant 0 : index
    %90 = vector.load %arg2[%c0_42, %c228, %c0_43] : memref<2x240x64xf32, #tpu.memory_space<vmem>>, vector<1x1x32xf32>
    %91 = vector.shape_cast %90 : vector<1x1x32xf32> to vector<1x32xf32>
    %c0_44 = arith.constant 0 : index
    %c229 = arith.constant 229 : index
    %c0_45 = arith.constant 0 : index
    %92 = vector.load %arg2[%c0_44, %c229, %c0_45] : memref<2x240x64xf32, #tpu.memory_space<vmem>>, vector<1x1x32xf32>
    %93 = vector.shape_cast %92 : vector<1x1x32xf32> to vector<1x32xf32>
    %c0_46 = arith.constant 0 : index
    %c230 = arith.constant 230 : index
    %c0_47 = arith.constant 0 : index
    %94 = vector.load %arg2[%c0_46, %c230, %c0_47] : memref<2x240x64xf32, #tpu.memory_space<vmem>>, vector<1x1x64xf32>
    %95 = vector.shape_cast %94 : vector<1x1x64xf32> to vector<1x64xf32>
    %c0_48 = arith.constant 0 : index
    %c231 = arith.constant 231 : index
    %c0_49 = arith.constant 0 : index
    %96 = vector.load %arg2[%c0_48, %c231, %c0_49] : memref<2x240x64xf32, #tpu.memory_space<vmem>>, vector<1x1x32xf32>
    %97 = vector.shape_cast %96 : vector<1x1x32xf32> to vector<1x32xf32>
    %c0_50 = arith.constant 0 : index
    %c232 = arith.constant 232 : index
    %c0_51 = arith.constant 0 : index
    %98 = vector.load %arg2[%c0_50, %c232, %c0_51] : memref<2x240x64xf32, #tpu.memory_space<vmem>>, vector<1x1x32xf32>
    %99 = vector.shape_cast %98 : vector<1x1x32xf32> to vector<1x32xf32>
    %c0_52 = arith.constant 0 : index
    %c233 = arith.constant 233 : index
    %c0_53 = arith.constant 0 : index
    %100 = vector.load %arg2[%c0_52, %c233, %c0_53] : memref<2x240x64xf32, #tpu.memory_space<vmem>>, vector<1x1x32xf32>
    %101 = vector.shape_cast %100 : vector<1x1x32xf32> to vector<1x32xf32>
    %cst_54 = arith.constant dense<0.000000e+00> : vector<16x32xf32>
    %102 = tpu.matmul %37, %71, %cst_54 {dimension_numbers = #tpu.dot_dimension_numbers<[1], [0], [0], [1], [0, 0, 1, 1], [], []>} : vector<16x32xf32>, vector<32x32xf32>, vector<16x32xf32> -> vector<16x32xf32>
    %103 = vector.broadcast %83 : vector<1x32xf32> to vector<16x32xf32>
    %104 = arith.addf %102, %103 : vector<16x32xf32>
    %105 = vector.shape_cast %104 : vector<16x32xf32> to vector<2x8x32xf32>
    %cst_55 = arith.constant dense<0.000000e+00> : vector<16x32xf32>
    %106 = tpu.matmul %37, %73, %cst_55 {dimension_numbers = #tpu.dot_dimension_numbers<[1], [0], [0], [1], [0, 0, 1, 1], [], []>} : vector<16x32xf32>, vector<32x32xf32>, vector<16x32xf32> -> vector<16x32xf32>
    %107 = vector.broadcast %85 : vector<1x32xf32> to vector<16x32xf32>
    %108 = arith.addf %106, %107 : vector<16x32xf32>
    %109 = vector.shape_cast %108 : vector<16x32xf32> to vector<2x8x32xf32>
    %cst_56 = arith.constant dense<0.000000e+00> : vector<16x32xf32>
    %110 = tpu.matmul %37, %75, %cst_56 {dimension_numbers = #tpu.dot_dimension_numbers<[1], [0], [0], [1], [0, 0, 1, 1], [], []>} : vector<16x32xf32>, vector<32x32xf32>, vector<16x32xf32> -> vector<16x32xf32>
    %111 = vector.broadcast %87 : vector<1x32xf32> to vector<16x32xf32>
    %112 = arith.addf %110, %111 : vector<16x32xf32>
    %113 = vector.shape_cast %112 : vector<16x32xf32> to vector<2x8x32xf32>
    %114 = vector.shape_cast %105 : vector<2x8x32xf32> to vector<2x8x1x32xf32>
    %115 = vector.shape_cast %109 : vector<2x8x32xf32> to vector<2x1x8x32xf32>
    %116 = vector.broadcast %114 : vector<2x8x1x32xf32> to vector<2x8x8x32xf32>
    %117 = vector.broadcast %115 : vector<2x1x8x32xf32> to vector<2x8x8x32xf32>
    %118 = arith.mulf %116, %117 : vector<2x8x8x32xf32>
    %119 = vector.shape_cast %118 : vector<2x8x8x32xf32> to vector<128x32xf32>
    %cst_57 = arith.constant dense<0.000000e+00> : vector<128x4xf32>
    %120 = tpu.matmul %119, %56, %cst_57 {dimension_numbers = #tpu.dot_dimension_numbers<[1], [0], [0], [1], [0, 0, 1, 1], [], []>} : vector<128x32xf32>, vector<32x4xf32>, vector<128x4xf32> -> vector<128x4xf32>
    %121 = vector.shape_cast %120 : vector<128x4xf32> to vector<2x8x8x4xf32>
    %cst_58 = arith.constant 0.353553385 : f32
    %122 = vector.broadcast %cst_58 : f32 to vector<2x8x8x4xf32>
    %123 = arith.mulf %121, %122 : vector<2x8x8x4xf32>
    %124 = vector.broadcast %43 : vector<2x1x8x1xf32> to vector<2x8x8x4xf32>
    %125 = arith.addf %123, %124 : vector<2x8x8x4xf32>
    %cst_59 = arith.constant dense<0xFF800000> : vector<2x8x4xf32>
    %126 = vector.multi_reduction <maximumf>, %125, %cst_59 [2] : vector<2x8x8x4xf32> to vector<2x8x4xf32>
    %127 = vector.shape_cast %126 : vector<2x8x4xf32> to vector<2x8x1x4xf32>
    %128 = vector.broadcast %127 : vector<2x8x1x4xf32> to vector<2x8x8x4xf32>
    %129 = arith.subf %125, %128 : vector<2x8x8x4xf32>
    %130 = math.exp %129 : vector<2x8x8x4xf32>
    %cst_60 = arith.constant dense<0.000000e+00> : vector<2x8x4xf32>
    %131 = vector.multi_reduction <add>, %130, %cst_60 [2] : vector<2x8x8x4xf32> to vector<2x8x4xf32>
    %132 = vector.shape_cast %131 : vector<2x8x4xf32> to vector<2x8x1x4xf32>
    %133 = vector.broadcast %132 : vector<2x8x1x4xf32> to vector<2x8x8x4xf32>
    %134 = arith.divf %130, %133 : vector<2x8x8x4xf32>
    %135 = vector.shape_cast %134 : vector<2x8x8x4xf32> to vector<128x4xf32>
    %cst_61 = arith.constant dense<0.000000e+00> : vector<128x32xf32>
    %136 = tpu.matmul %135, %69, %cst_61 {dimension_numbers = #tpu.dot_dimension_numbers<[1], [0], [0], [1], [0, 0, 1, 1], [], []>} : vector<128x4xf32>, vector<4x32xf32>, vector<128x32xf32> -> vector<128x32xf32>
    %137 = vector.shape_cast %136 : vector<128x32xf32> to vector<2x8x8x32xf32>
    %138 = vector.shape_cast %113 : vector<2x8x32xf32> to vector<2x1x8x32xf32>
    %139 = vector.broadcast %138 : vector<2x1x8x32xf32> to vector<2x8x8x32xf32>
    %140 = arith.mulf %137, %139 : vector<2x8x8x32xf32>
    %cst_62 = arith.constant dense<0.000000e+00> : vector<2x8x32xf32>
    %141 = vector.multi_reduction <add>, %140, %cst_62 [2] : vector<2x8x8x32xf32> to vector<2x8x32xf32>
    %142 = vector.shape_cast %141 : vector<2x8x32xf32> to vector<16x32xf32>
    %cst_63 = arith.constant dense<0.000000e+00> : vector<16x32xf32>
    %143 = tpu.matmul %142, %77, %cst_63 {dimension_numbers = #tpu.dot_dimension_numbers<[1], [0], [0], [1], [0, 0, 1, 1], [], []>} : vector<16x32xf32>, vector<32x32xf32>, vector<16x32xf32> -> vector<16x32xf32>
    %144 = vector.broadcast %89 : vector<1x32xf32> to vector<16x32xf32>
    %145 = arith.addf %143, %144 : vector<16x32xf32>
    %146 = arith.addf %37, %145 : vector<16x32xf32>
    %cst_64 = arith.constant dense<0.000000e+00> : vector<16xf32>
    %147 = vector.multi_reduction <add>, %146, %cst_64 [1] : vector<16x32xf32> to vector<16xf32>
    %148 = vector.shape_cast %147 : vector<16xf32> to vector<16x1xf32>
    %cst_65 = arith.constant 3.200000e+01 : f32
    %149 = vector.broadcast %cst_65 : f32 to vector<16x1xf32>
    %150 = arith.divf %148, %149 : vector<16x1xf32>
    %151 = vector.broadcast %150 : vector<16x1xf32> to vector<16x32xf32>
    %152 = arith.subf %146, %151 : vector<16x32xf32>
    %153 = arith.mulf %152, %152 : vector<16x32xf32>
    %cst_66 = arith.constant dense<0.000000e+00> : vector<16xf32>
    %154 = vector.multi_reduction <add>, %153, %cst_66 [1] : vector<16x32xf32> to vector<16xf32>
    %155 = vector.shape_cast %154 : vector<16xf32> to vector<16x1xf32>
    %cst_67 = arith.constant 3.200000e+01 : f32
    %156 = vector.broadcast %cst_67 : f32 to vector<16x1xf32>
    %157 = arith.divf %155, %156 : vector<16x1xf32>
    %158 = vector.broadcast %150 : vector<16x1xf32> to vector<16x32xf32>
    %159 = arith.subf %146, %158 : vector<16x32xf32>
    %cst_68 = arith.constant 9.99999996E-13 : f32
    %160 = vector.broadcast %cst_68 : f32 to vector<16x1xf32>
    %161 = arith.addf %157, %160 : vector<16x1xf32>
    %162 = math.rsqrt %161 : vector<16x1xf32>
    %163 = vector.broadcast %162 : vector<16x1xf32> to vector<16x32xf32>
    %164 = arith.mulf %159, %163 : vector<16x32xf32>
    %165 = vector.broadcast %91 : vector<1x32xf32> to vector<16x32xf32>
    %166 = arith.mulf %164, %165 : vector<16x32xf32>
    %167 = vector.broadcast %93 : vector<1x32xf32> to vector<16x32xf32>
    %168 = arith.addf %166, %167 : vector<16x32xf32>
    %cst_69 = arith.constant dense<0.000000e+00> : vector<16x64xf32>
    %169 = tpu.matmul %168, %79, %cst_69 {dimension_numbers = #tpu.dot_dimension_numbers<[1], [0], [0], [1], [0, 0, 1, 1], [], []>} : vector<16x32xf32>, vector<32x64xf32>, vector<16x64xf32> -> vector<16x64xf32>
    %170 = vector.broadcast %95 : vector<1x64xf32> to vector<16x64xf32>
    %171 = arith.addf %169, %170 : vector<16x64xf32>
    %172 = arith.mulf %171, %171 : vector<16x64xf32>
    %173 = arith.mulf %171, %172 : vector<16x64xf32>
    %cst_70 = arith.constant 4.471500e-02 : f32
    %174 = vector.broadcast %cst_70 : f32 to vector<16x64xf32>
    %175 = arith.mulf %174, %173 : vector<16x64xf32>
    %176 = arith.addf %171, %175 : vector<16x64xf32>
    %cst_71 = arith.constant 0.797884583 : f32
    %177 = vector.broadcast %cst_71 : f32 to vector<16x64xf32>
    %178 = arith.mulf %177, %176 : vector<16x64xf32>
    %179 = math.tanh %178 : vector<16x64xf32>
    %cst_72 = arith.constant 1.000000e+00 : f32
    %180 = vector.broadcast %cst_72 : f32 to vector<16x64xf32>
    %181 = arith.addf %180, %179 : vector<16x64xf32>
    %cst_73 = arith.constant 5.000000e-01 : f32
    %182 = vector.broadcast %cst_73 : f32 to vector<16x64xf32>
    %183 = arith.mulf %182, %181 : vector<16x64xf32>
    %184 = arith.mulf %171, %183 : vector<16x64xf32>
    %cst_74 = arith.constant dense<0.000000e+00> : vector<16x32xf32>
    %185 = tpu.matmul %184, %81, %cst_74 {dimension_numbers = #tpu.dot_dimension_numbers<[1], [0], [0], [1], [0, 0, 1, 1], [], []>} : vector<16x64xf32>, vector<64x32xf32>, vector<16x32xf32> -> vector<16x32xf32>
    %186 = vector.broadcast %97 : vector<1x32xf32> to vector<16x32xf32>
    %187 = arith.addf %185, %186 : vector<16x32xf32>
    %188 = arith.addf %168, %187 : vector<16x32xf32>
    %cst_75 = arith.constant dense<0.000000e+00> : vector<16xf32>
    %189 = vector.multi_reduction <add>, %188, %cst_75 [1] : vector<16x32xf32> to vector<16xf32>
    %190 = vector.shape_cast %189 : vector<16xf32> to vector<16x1xf32>
    %cst_76 = arith.constant 3.200000e+01 : f32
    %191 = vector.broadcast %cst_76 : f32 to vector<16x1xf32>
    %192 = arith.divf %190, %191 : vector<16x1xf32>
    %193 = vector.broadcast %192 : vector<16x1xf32> to vector<16x32xf32>
    %194 = arith.subf %188, %193 : vector<16x32xf32>
    %195 = arith.mulf %194, %194 : vector<16x32xf32>
    %cst_77 = arith.constant dense<0.000000e+00> : vector<16xf32>
    %196 = vector.multi_reduction <add>, %195, %cst_77 [1] : vector<16x32xf32> to vector<16xf32>
    %197 = vector.shape_cast %196 : vector<16xf32> to vector<16x1xf32>
    %cst_78 = arith.constant 3.200000e+01 : f32
    %198 = vector.broadcast %cst_78 : f32 to vector<16x1xf32>
    %199 = arith.divf %197, %198 : vector<16x1xf32>
    %200 = vector.broadcast %192 : vector<16x1xf32> to vector<16x32xf32>
    %201 = arith.subf %188, %200 : vector<16x32xf32>
    %cst_79 = arith.constant 9.99999996E-13 : f32
    %202 = vector.broadcast %cst_79 : f32 to vector<16x1xf32>
    %203 = arith.addf %199, %202 : vector<16x1xf32>
    %204 = math.rsqrt %203 : vector<16x1xf32>
    %205 = vector.broadcast %204 : vector<16x1xf32> to vector<16x32xf32>
    %206 = arith.mulf %201, %205 : vector<16x32xf32>
    %207 = vector.broadcast %99 : vector<1x32xf32> to vector<16x32xf32>
    %208 = arith.mulf %206, %207 : vector<16x32xf32>
    %209 = vector.broadcast %101 : vector<1x32xf32> to vector<16x32xf32>
    %210 = arith.addf %208, %209 : vector<16x32xf32>
    %c1 = arith.constant 1 : index
    %c0_80 = arith.constant 0 : index
    %c0_81 = arith.constant 0 : index
    %211 = vector.load %arg2[%c1, %c0_80, %c0_81] : memref<2x240x64xf32, #tpu.memory_space<vmem>>, vector<1x32x32xf32>
    %212 = vector.shape_cast %211 : vector<1x32x32xf32> to vector<32x32xf32>
    %c1_82 = arith.constant 1 : index
    %c32_83 = arith.constant 32 : index
    %c0_84 = arith.constant 0 : index
    %213 = vector.load %arg2[%c1_82, %c32_83, %c0_84] : memref<2x240x64xf32, #tpu.memory_space<vmem>>, vector<1x32x32xf32>
    %214 = vector.shape_cast %213 : vector<1x32x32xf32> to vector<32x32xf32>
    %c1_85 = arith.constant 1 : index
    %c64_86 = arith.constant 64 : index
    %c0_87 = arith.constant 0 : index
    %215 = vector.load %arg2[%c1_85, %c64_86, %c0_87] : memref<2x240x64xf32, #tpu.memory_space<vmem>>, vector<1x32x32xf32>
    %216 = vector.shape_cast %215 : vector<1x32x32xf32> to vector<32x32xf32>
    %c1_88 = arith.constant 1 : index
    %c96_89 = arith.constant 96 : index
    %c0_90 = arith.constant 0 : index
    %217 = vector.load %arg2[%c1_88, %c96_89, %c0_90] : memref<2x240x64xf32, #tpu.memory_space<vmem>>, vector<1x32x32xf32>
    %218 = vector.shape_cast %217 : vector<1x32x32xf32> to vector<32x32xf32>
    %c1_91 = arith.constant 1 : index
    %c128_92 = arith.constant 128 : index
    %c0_93 = arith.constant 0 : index
    %219 = vector.load %arg2[%c1_91, %c128_92, %c0_93] : memref<2x240x64xf32, #tpu.memory_space<vmem>>, vector<1x32x64xf32>
    %220 = vector.shape_cast %219 : vector<1x32x64xf32> to vector<32x64xf32>
    %c1_94 = arith.constant 1 : index
    %c160_95 = arith.constant 160 : index
    %c0_96 = arith.constant 0 : index
    %221 = vector.load %arg2[%c1_94, %c160_95, %c0_96] : memref<2x240x64xf32, #tpu.memory_space<vmem>>, vector<1x64x32xf32>
    %222 = vector.shape_cast %221 : vector<1x64x32xf32> to vector<64x32xf32>
    %c1_97 = arith.constant 1 : index
    %c224_98 = arith.constant 224 : index
    %c0_99 = arith.constant 0 : index
    %223 = vector.load %arg2[%c1_97, %c224_98, %c0_99] : memref<2x240x64xf32, #tpu.memory_space<vmem>>, vector<1x1x32xf32>
    %224 = vector.shape_cast %223 : vector<1x1x32xf32> to vector<1x32xf32>
    %c1_100 = arith.constant 1 : index
    %c225_101 = arith.constant 225 : index
    %c0_102 = arith.constant 0 : index
    %225 = vector.load %arg2[%c1_100, %c225_101, %c0_102] : memref<2x240x64xf32, #tpu.memory_space<vmem>>, vector<1x1x32xf32>
    %226 = vector.shape_cast %225 : vector<1x1x32xf32> to vector<1x32xf32>
    %c1_103 = arith.constant 1 : index
    %c226_104 = arith.constant 226 : index
    %c0_105 = arith.constant 0 : index
    %227 = vector.load %arg2[%c1_103, %c226_104, %c0_105] : memref<2x240x64xf32, #tpu.memory_space<vmem>>, vector<1x1x32xf32>
    %228 = vector.shape_cast %227 : vector<1x1x32xf32> to vector<1x32xf32>
    %c1_106 = arith.constant 1 : index
    %c227_107 = arith.constant 227 : index
    %c0_108 = arith.constant 0 : index
    %229 = vector.load %arg2[%c1_106, %c227_107, %c0_108] : memref<2x240x64xf32, #tpu.memory_space<vmem>>, vector<1x1x32xf32>
    %230 = vector.shape_cast %229 : vector<1x1x32xf32> to vector<1x32xf32>
    %c1_109 = arith.constant 1 : index
    %c228_110 = arith.constant 228 : index
    %c0_111 = arith.constant 0 : index
    %231 = vector.load %arg2[%c1_109, %c228_110, %c0_111] : memref<2x240x64xf32, #tpu.memory_space<vmem>>, vector<1x1x32xf32>
    %232 = vector.shape_cast %231 : vector<1x1x32xf32> to vector<1x32xf32>
    %c1_112 = arith.constant 1 : index
    %c229_113 = arith.constant 229 : index
    %c0_114 = arith.constant 0 : index
    %233 = vector.load %arg2[%c1_112, %c229_113, %c0_114] : memref<2x240x64xf32, #tpu.memory_space<vmem>>, vector<1x1x32xf32>
    %234 = vector.shape_cast %233 : vector<1x1x32xf32> to vector<1x32xf32>
    %c1_115 = arith.constant 1 : index
    %c230_116 = arith.constant 230 : index
    %c0_117 = arith.constant 0 : index
    %235 = vector.load %arg2[%c1_115, %c230_116, %c0_117] : memref<2x240x64xf32, #tpu.memory_space<vmem>>, vector<1x1x64xf32>
    %236 = vector.shape_cast %235 : vector<1x1x64xf32> to vector<1x64xf32>
    %c1_118 = arith.constant 1 : index
    %c231_119 = arith.constant 231 : index
    %c0_120 = arith.constant 0 : index
    %237 = vector.load %arg2[%c1_118, %c231_119, %c0_120] : memref<2x240x64xf32, #tpu.memory_space<vmem>>, vector<1x1x32xf32>
    %238 = vector.shape_cast %237 : vector<1x1x32xf32> to vector<1x32xf32>
    %c1_121 = arith.constant 1 : index
    %c232_122 = arith.constant 232 : index
    %c0_123 = arith.constant 0 : index
    %239 = vector.load %arg2[%c1_121, %c232_122, %c0_123] : memref<2x240x64xf32, #tpu.memory_space<vmem>>, vector<1x1x32xf32>
    %240 = vector.shape_cast %239 : vector<1x1x32xf32> to vector<1x32xf32>
    %c1_124 = arith.constant 1 : index
    %c233_125 = arith.constant 233 : index
    %c0_126 = arith.constant 0 : index
    %241 = vector.load %arg2[%c1_124, %c233_125, %c0_126] : memref<2x240x64xf32, #tpu.memory_space<vmem>>, vector<1x1x32xf32>
    %242 = vector.shape_cast %241 : vector<1x1x32xf32> to vector<1x32xf32>
    %cst_127 = arith.constant dense<0.000000e+00> : vector<16x32xf32>
    %243 = tpu.matmul %210, %212, %cst_127 {dimension_numbers = #tpu.dot_dimension_numbers<[1], [0], [0], [1], [0, 0, 1, 1], [], []>} : vector<16x32xf32>, vector<32x32xf32>, vector<16x32xf32> -> vector<16x32xf32>
    %244 = vector.broadcast %224 : vector<1x32xf32> to vector<16x32xf32>
    %245 = arith.addf %243, %244 : vector<16x32xf32>
    %246 = vector.shape_cast %245 : vector<16x32xf32> to vector<2x8x32xf32>
    %cst_128 = arith.constant dense<0.000000e+00> : vector<16x32xf32>
    %247 = tpu.matmul %210, %214, %cst_128 {dimension_numbers = #tpu.dot_dimension_numbers<[1], [0], [0], [1], [0, 0, 1, 1], [], []>} : vector<16x32xf32>, vector<32x32xf32>, vector<16x32xf32> -> vector<16x32xf32>
    %248 = vector.broadcast %226 : vector<1x32xf32> to vector<16x32xf32>
    %249 = arith.addf %247, %248 : vector<16x32xf32>
    %250 = vector.shape_cast %249 : vector<16x32xf32> to vector<2x8x32xf32>
    %cst_129 = arith.constant dense<0.000000e+00> : vector<16x32xf32>
    %251 = tpu.matmul %210, %216, %cst_129 {dimension_numbers = #tpu.dot_dimension_numbers<[1], [0], [0], [1], [0, 0, 1, 1], [], []>} : vector<16x32xf32>, vector<32x32xf32>, vector<16x32xf32> -> vector<16x32xf32>
    %252 = vector.broadcast %228 : vector<1x32xf32> to vector<16x32xf32>
    %253 = arith.addf %251, %252 : vector<16x32xf32>
    %254 = vector.shape_cast %253 : vector<16x32xf32> to vector<2x8x32xf32>
    %255 = vector.shape_cast %246 : vector<2x8x32xf32> to vector<2x8x1x32xf32>
    %256 = vector.shape_cast %250 : vector<2x8x32xf32> to vector<2x1x8x32xf32>
    %257 = vector.broadcast %255 : vector<2x8x1x32xf32> to vector<2x8x8x32xf32>
    %258 = vector.broadcast %256 : vector<2x1x8x32xf32> to vector<2x8x8x32xf32>
    %259 = arith.mulf %257, %258 : vector<2x8x8x32xf32>
    %260 = vector.shape_cast %259 : vector<2x8x8x32xf32> to vector<128x32xf32>
    %cst_130 = arith.constant dense<0.000000e+00> : vector<128x4xf32>
    %261 = tpu.matmul %260, %56, %cst_130 {dimension_numbers = #tpu.dot_dimension_numbers<[1], [0], [0], [1], [0, 0, 1, 1], [], []>} : vector<128x32xf32>, vector<32x4xf32>, vector<128x4xf32> -> vector<128x4xf32>
    %262 = vector.shape_cast %261 : vector<128x4xf32> to vector<2x8x8x4xf32>
    %cst_131 = arith.constant 0.353553385 : f32
    %263 = vector.broadcast %cst_131 : f32 to vector<2x8x8x4xf32>
    %264 = arith.mulf %262, %263 : vector<2x8x8x4xf32>
    %265 = vector.broadcast %43 : vector<2x1x8x1xf32> to vector<2x8x8x4xf32>
    %266 = arith.addf %264, %265 : vector<2x8x8x4xf32>
    %cst_132 = arith.constant dense<0xFF800000> : vector<2x8x4xf32>
    %267 = vector.multi_reduction <maximumf>, %266, %cst_132 [2] : vector<2x8x8x4xf32> to vector<2x8x4xf32>
    %268 = vector.shape_cast %267 : vector<2x8x4xf32> to vector<2x8x1x4xf32>
    %269 = vector.broadcast %268 : vector<2x8x1x4xf32> to vector<2x8x8x4xf32>
    %270 = arith.subf %266, %269 : vector<2x8x8x4xf32>
    %271 = math.exp %270 : vector<2x8x8x4xf32>
    %cst_133 = arith.constant dense<0.000000e+00> : vector<2x8x4xf32>
    %272 = vector.multi_reduction <add>, %271, %cst_133 [2] : vector<2x8x8x4xf32> to vector<2x8x4xf32>
    %273 = vector.shape_cast %272 : vector<2x8x4xf32> to vector<2x8x1x4xf32>
    %274 = vector.broadcast %273 : vector<2x8x1x4xf32> to vector<2x8x8x4xf32>
    %275 = arith.divf %271, %274 : vector<2x8x8x4xf32>
    %276 = vector.shape_cast %275 : vector<2x8x8x4xf32> to vector<128x4xf32>
    %cst_134 = arith.constant dense<0.000000e+00> : vector<128x32xf32>
    %277 = tpu.matmul %276, %69, %cst_134 {dimension_numbers = #tpu.dot_dimension_numbers<[1], [0], [0], [1], [0, 0, 1, 1], [], []>} : vector<128x4xf32>, vector<4x32xf32>, vector<128x32xf32> -> vector<128x32xf32>
    %278 = vector.shape_cast %277 : vector<128x32xf32> to vector<2x8x8x32xf32>
    %279 = vector.shape_cast %254 : vector<2x8x32xf32> to vector<2x1x8x32xf32>
    %280 = vector.broadcast %279 : vector<2x1x8x32xf32> to vector<2x8x8x32xf32>
    %281 = arith.mulf %278, %280 : vector<2x8x8x32xf32>
    %cst_135 = arith.constant dense<0.000000e+00> : vector<2x8x32xf32>
    %282 = vector.multi_reduction <add>, %281, %cst_135 [2] : vector<2x8x8x32xf32> to vector<2x8x32xf32>
    %283 = vector.shape_cast %282 : vector<2x8x32xf32> to vector<16x32xf32>
    %cst_136 = arith.constant dense<0.000000e+00> : vector<16x32xf32>
    %284 = tpu.matmul %283, %218, %cst_136 {dimension_numbers = #tpu.dot_dimension_numbers<[1], [0], [0], [1], [0, 0, 1, 1], [], []>} : vector<16x32xf32>, vector<32x32xf32>, vector<16x32xf32> -> vector<16x32xf32>
    %285 = vector.broadcast %230 : vector<1x32xf32> to vector<16x32xf32>
    %286 = arith.addf %284, %285 : vector<16x32xf32>
    %287 = arith.addf %210, %286 : vector<16x32xf32>
    %cst_137 = arith.constant dense<0.000000e+00> : vector<16xf32>
    %288 = vector.multi_reduction <add>, %287, %cst_137 [1] : vector<16x32xf32> to vector<16xf32>
    %289 = vector.shape_cast %288 : vector<16xf32> to vector<16x1xf32>
    %cst_138 = arith.constant 3.200000e+01 : f32
    %290 = vector.broadcast %cst_138 : f32 to vector<16x1xf32>
    %291 = arith.divf %289, %290 : vector<16x1xf32>
    %292 = vector.broadcast %291 : vector<16x1xf32> to vector<16x32xf32>
    %293 = arith.subf %287, %292 : vector<16x32xf32>
    %294 = arith.mulf %293, %293 : vector<16x32xf32>
    %cst_139 = arith.constant dense<0.000000e+00> : vector<16xf32>
    %295 = vector.multi_reduction <add>, %294, %cst_139 [1] : vector<16x32xf32> to vector<16xf32>
    %296 = vector.shape_cast %295 : vector<16xf32> to vector<16x1xf32>
    %cst_140 = arith.constant 3.200000e+01 : f32
    %297 = vector.broadcast %cst_140 : f32 to vector<16x1xf32>
    %298 = arith.divf %296, %297 : vector<16x1xf32>
    %299 = vector.broadcast %291 : vector<16x1xf32> to vector<16x32xf32>
    %300 = arith.subf %287, %299 : vector<16x32xf32>
    %cst_141 = arith.constant 9.99999996E-13 : f32
    %301 = vector.broadcast %cst_141 : f32 to vector<16x1xf32>
    %302 = arith.addf %298, %301 : vector<16x1xf32>
    %303 = math.rsqrt %302 : vector<16x1xf32>
    %304 = vector.broadcast %303 : vector<16x1xf32> to vector<16x32xf32>
    %305 = arith.mulf %300, %304 : vector<16x32xf32>
    %306 = vector.broadcast %232 : vector<1x32xf32> to vector<16x32xf32>
    %307 = arith.mulf %305, %306 : vector<16x32xf32>
    %308 = vector.broadcast %234 : vector<1x32xf32> to vector<16x32xf32>
    %309 = arith.addf %307, %308 : vector<16x32xf32>
    %cst_142 = arith.constant dense<0.000000e+00> : vector<16x64xf32>
    %310 = tpu.matmul %309, %220, %cst_142 {dimension_numbers = #tpu.dot_dimension_numbers<[1], [0], [0], [1], [0, 0, 1, 1], [], []>} : vector<16x32xf32>, vector<32x64xf32>, vector<16x64xf32> -> vector<16x64xf32>
    %311 = vector.broadcast %236 : vector<1x64xf32> to vector<16x64xf32>
    %312 = arith.addf %310, %311 : vector<16x64xf32>
    %313 = arith.mulf %312, %312 : vector<16x64xf32>
    %314 = arith.mulf %312, %313 : vector<16x64xf32>
    %cst_143 = arith.constant 4.471500e-02 : f32
    %315 = vector.broadcast %cst_143 : f32 to vector<16x64xf32>
    %316 = arith.mulf %315, %314 : vector<16x64xf32>
    %317 = arith.addf %312, %316 : vector<16x64xf32>
    %cst_144 = arith.constant 0.797884583 : f32
    %318 = vector.broadcast %cst_144 : f32 to vector<16x64xf32>
    %319 = arith.mulf %318, %317 : vector<16x64xf32>
    %320 = math.tanh %319 : vector<16x64xf32>
    %cst_145 = arith.constant 1.000000e+00 : f32
    %321 = vector.broadcast %cst_145 : f32 to vector<16x64xf32>
    %322 = arith.addf %321, %320 : vector<16x64xf32>
    %cst_146 = arith.constant 5.000000e-01 : f32
    %323 = vector.broadcast %cst_146 : f32 to vector<16x64xf32>
    %324 = arith.mulf %323, %322 : vector<16x64xf32>
    %325 = arith.mulf %312, %324 : vector<16x64xf32>
    %cst_147 = arith.constant dense<0.000000e+00> : vector<16x32xf32>
    %326 = tpu.matmul %325, %222, %cst_147 {dimension_numbers = #tpu.dot_dimension_numbers<[1], [0], [0], [1], [0, 0, 1, 1], [], []>} : vector<16x64xf32>, vector<64x32xf32>, vector<16x32xf32> -> vector<16x32xf32>
    %327 = vector.broadcast %238 : vector<1x32xf32> to vector<16x32xf32>
    %328 = arith.addf %326, %327 : vector<16x32xf32>
    %329 = arith.addf %309, %328 : vector<16x32xf32>
    %cst_148 = arith.constant dense<0.000000e+00> : vector<16xf32>
    %330 = vector.multi_reduction <add>, %329, %cst_148 [1] : vector<16x32xf32> to vector<16xf32>
    %331 = vector.shape_cast %330 : vector<16xf32> to vector<16x1xf32>
    %cst_149 = arith.constant 3.200000e+01 : f32
    %332 = vector.broadcast %cst_149 : f32 to vector<16x1xf32>
    %333 = arith.divf %331, %332 : vector<16x1xf32>
    %334 = vector.broadcast %333 : vector<16x1xf32> to vector<16x32xf32>
    %335 = arith.subf %329, %334 : vector<16x32xf32>
    %336 = arith.mulf %335, %335 : vector<16x32xf32>
    %cst_150 = arith.constant dense<0.000000e+00> : vector<16xf32>
    %337 = vector.multi_reduction <add>, %336, %cst_150 [1] : vector<16x32xf32> to vector<16xf32>
    %338 = vector.shape_cast %337 : vector<16xf32> to vector<16x1xf32>
    %cst_151 = arith.constant 3.200000e+01 : f32
    %339 = vector.broadcast %cst_151 : f32 to vector<16x1xf32>
    %340 = arith.divf %338, %339 : vector<16x1xf32>
    %341 = vector.broadcast %333 : vector<16x1xf32> to vector<16x32xf32>
    %342 = arith.subf %329, %341 : vector<16x32xf32>
    %cst_152 = arith.constant 9.99999996E-13 : f32
    %343 = vector.broadcast %cst_152 : f32 to vector<16x1xf32>
    %344 = arith.addf %340, %343 : vector<16x1xf32>
    %345 = math.rsqrt %344 : vector<16x1xf32>
    %346 = vector.broadcast %345 : vector<16x1xf32> to vector<16x32xf32>
    %347 = arith.mulf %342, %346 : vector<16x32xf32>
    %348 = vector.broadcast %240 : vector<1x32xf32> to vector<16x32xf32>
    %349 = arith.mulf %347, %348 : vector<16x32xf32>
    %350 = vector.broadcast %242 : vector<1x32xf32> to vector<16x32xf32>
    %351 = arith.addf %349, %350 : vector<16x32xf32>
    %c120 = arith.constant 120 : index
    %c0_153 = arith.constant 0 : index
    %352 = vector.load %arg3[%c120, %c0_153] : memref<280x32xf32, #tpu.memory_space<vmem>>, vector<32x32xf32>
    %c152 = arith.constant 152 : index
    %c0_154 = arith.constant 0 : index
    %353 = vector.load %arg3[%c152, %c0_154] : memref<280x32xf32, #tpu.memory_space<vmem>>, vector<32x32xf32>
    %c184 = arith.constant 184 : index
    %c0_155 = arith.constant 0 : index
    %354 = vector.load %arg3[%c184, %c0_155] : memref<280x32xf32, #tpu.memory_space<vmem>>, vector<32x32xf32>
    %c216 = arith.constant 216 : index
    %c0_156 = arith.constant 0 : index
    %355 = vector.load %arg3[%c216, %c0_156] : memref<280x32xf32, #tpu.memory_space<vmem>>, vector<32x32xf32>
    %c114 = arith.constant 114 : index
    %c0_157 = arith.constant 0 : index
    %356 = vector.load %arg3[%c114, %c0_157] : memref<280x32xf32, #tpu.memory_space<vmem>>, vector<1x32xf32>
    %cst_158 = arith.constant dense<0.000000e+00> : vector<1x32xf32>
    %357 = tpu.matmul %356, %352, %cst_158 {dimension_numbers = #tpu.dot_dimension_numbers<[1], [0], [0], [1], [0, 0, 1, 1], [], []>} : vector<1x32xf32>, vector<32x32xf32>, vector<1x32xf32> -> vector<1x32xf32>
    %c115 = arith.constant 115 : index
    %c0_159 = arith.constant 0 : index
    %358 = vector.load %arg3[%c115, %c0_159] : memref<280x32xf32, #tpu.memory_space<vmem>>, vector<1x32xf32>
    %359 = arith.addf %357, %358 : vector<1x32xf32>
    %cst_160 = arith.constant dense<0.000000e+00> : vector<16x32xf32>
    %360 = tpu.matmul %351, %353, %cst_160 {dimension_numbers = #tpu.dot_dimension_numbers<[1], [0], [0], [1], [0, 0, 1, 1], [], []>} : vector<16x32xf32>, vector<32x32xf32>, vector<16x32xf32> -> vector<16x32xf32>
    %c116 = arith.constant 116 : index
    %c0_161 = arith.constant 0 : index
    %361 = vector.load %arg3[%c116, %c0_161] : memref<280x32xf32, #tpu.memory_space<vmem>>, vector<1x32xf32>
    %362 = vector.broadcast %361 : vector<1x32xf32> to vector<16x32xf32>
    %363 = arith.addf %360, %362 : vector<16x32xf32>
    %364 = vector.shape_cast %363 : vector<16x32xf32> to vector<2x8x32xf32>
    %cst_162 = arith.constant dense<0.000000e+00> : vector<16x32xf32>
    %365 = tpu.matmul %351, %354, %cst_162 {dimension_numbers = #tpu.dot_dimension_numbers<[1], [0], [0], [1], [0, 0, 1, 1], [], []>} : vector<16x32xf32>, vector<32x32xf32>, vector<16x32xf32> -> vector<16x32xf32>
    %c117 = arith.constant 117 : index
    %c0_163 = arith.constant 0 : index
    %366 = vector.load %arg3[%c117, %c0_163] : memref<280x32xf32, #tpu.memory_space<vmem>>, vector<1x32xf32>
    %367 = vector.broadcast %366 : vector<1x32xf32> to vector<16x32xf32>
    %368 = arith.addf %365, %367 : vector<16x32xf32>
    %369 = vector.shape_cast %368 : vector<16x32xf32> to vector<2x8x32xf32>
    %370 = vector.shape_cast %359 : vector<1x32xf32> to vector<1x1x32xf32>
    %371 = vector.broadcast %370 : vector<1x1x32xf32> to vector<2x8x32xf32>
    %372 = arith.mulf %364, %371 : vector<2x8x32xf32>
    %cst_164 = arith.constant dense<0.000000e+00> : vector<2x8xf32>
    %373 = vector.multi_reduction <add>, %372, %cst_164 [2] : vector<2x8x32xf32> to vector<2x8xf32>
    %374 = vector.shape_cast %373 : vector<2x8xf32> to vector<2x8x1xf32>
    %cst_165 = arith.constant 0.176776692 : f32
    %375 = vector.broadcast %cst_165 : f32 to vector<2x8x1xf32>
    %376 = arith.mulf %374, %375 : vector<2x8x1xf32>
    %cst_166 = arith.constant dense<0xFF800000> : vector<2x1xf32>
    %377 = vector.multi_reduction <maximumf>, %376, %cst_166 [1] : vector<2x8x1xf32> to vector<2x1xf32>
    %378 = vector.shape_cast %377 : vector<2x1xf32> to vector<2x1x1xf32>
    %379 = vector.broadcast %378 : vector<2x1x1xf32> to vector<2x8x1xf32>
    %380 = arith.subf %376, %379 : vector<2x8x1xf32>
    %381 = math.exp %380 : vector<2x8x1xf32>
    %cst_167 = arith.constant dense<0.000000e+00> : vector<2x1xf32>
    %382 = vector.multi_reduction <add>, %381, %cst_167 [1] : vector<2x8x1xf32> to vector<2x1xf32>
    %383 = vector.shape_cast %382 : vector<2x1xf32> to vector<2x1x1xf32>
    %384 = vector.broadcast %383 : vector<2x1x1xf32> to vector<2x8x1xf32>
    %385 = arith.divf %381, %384 : vector<2x8x1xf32>
    %386 = vector.broadcast %385 : vector<2x8x1xf32> to vector<2x8x32xf32>
    %387 = arith.mulf %386, %369 : vector<2x8x32xf32>
    %cst_168 = arith.constant dense<0.000000e+00> : vector<2x32xf32>
    %388 = vector.multi_reduction <add>, %387, %cst_168 [1] : vector<2x8x32xf32> to vector<2x32xf32>
    %cst_169 = arith.constant dense<0.000000e+00> : vector<2x32xf32>
    %389 = tpu.matmul %388, %355, %cst_169 {dimension_numbers = #tpu.dot_dimension_numbers<[1], [0], [0], [1], [0, 0, 1, 1], [], []>} : vector<2x32xf32>, vector<32x32xf32>, vector<2x32xf32> -> vector<2x32xf32>
    %c118 = arith.constant 118 : index
    %c0_170 = arith.constant 0 : index
    %390 = vector.load %arg3[%c118, %c0_170] : memref<280x32xf32, #tpu.memory_space<vmem>>, vector<1x32xf32>
    %391 = vector.broadcast %390 : vector<1x32xf32> to vector<2x32xf32>
    %392 = arith.addf %389, %391 : vector<2x32xf32>
    %c248 = arith.constant 248 : index
    %c0_171 = arith.constant 0 : index
    %393 = vector.load %arg3[%c248, %c0_171] : memref<280x32xf32, #tpu.memory_space<vmem>>, vector<32x2xf32>
    %cst_172 = arith.constant dense<0.000000e+00> : vector<2x2xf32>
    %394 = tpu.matmul %392, %393, %cst_172 {dimension_numbers = #tpu.dot_dimension_numbers<[1], [0], [0], [1], [0, 0, 1, 1], [], []>} : vector<2x32xf32>, vector<32x2xf32>, vector<2x2xf32> -> vector<2x2xf32>
    %c119 = arith.constant 119 : index
    %c0_173 = arith.constant 0 : index
    %395 = vector.load %arg3[%c119, %c0_173] : memref<280x32xf32, #tpu.memory_space<vmem>>, vector<1x2xf32>
    %396 = vector.broadcast %395 : vector<1x2xf32> to vector<2x2xf32>
    %397 = arith.addf %394, %396 : vector<2x2xf32>
    %398 = arith.negf %397 : vector<2x2xf32>
    %399 = math.exp %398 : vector<2x2xf32>
    %cst_174 = arith.constant 1.000000e+00 : f32
    %400 = vector.broadcast %cst_174 : f32 to vector<2x2xf32>
    %401 = arith.addf %400, %399 : vector<2x2xf32>
    %402 = arith.divf %400, %401 : vector<2x2xf32>
    %c0_175 = arith.constant 0 : index
    %c0_176 = arith.constant 0 : index
    %403 = vector.load %arg4[%c0_175, %c0_176] : memref<2x2xf32, #tpu.memory_space<vmem>>, vector<2x2xf32>
    tpu.vector_store %arg4[%c0_175, %c0_176], %402 {strides = array<i32>} : memref<2x2xf32, #tpu.memory_space<vmem>>, vector<2x2xf32>,
    return
  }
}

</mosaic_0001>

<llo_original>
// kernel: tpu_custom_call.1
$region0: #{tpu_custom_call.1}
  #allocation0 [shape = 'u32[]', space=smem, size = 0x4, offset = 0x4, fixed_abs, tag = 'smem constant byte address 0x4 - core index']
  #allocation1 [shape = 'u32[144,128]{1,0:T(1,128)}', space=vmem, size = 0x12000, scoped, tag = 'internal scratch']
  %s0 = inlined_call_operand.vmem [shape: s32[16,1], index: 0, kind: input, shape index: {}]
  %s1 = inlined_call_operand.vmem [shape: s32[2,1,8,1], index: 1, kind: input, shape index: {}]
  %s2 = inlined_call_operand.vmem [shape: f32[2,240,64], index: 2, kind: input, shape index: {}]
  %s3 = inlined_call_operand.vmem [shape: f32[280,32], index: 3, kind: input, shape index: {}]
  %s4 = inlined_call_operand.hbm [shape: f32[2,2], index: 4, kind: output, shape index: {}]
  %s5 = sld [smem:[#allocation0]]
  $region26: #{tpu_custom_call.1} parent=0
    _
  %s7 = ssub.s32 1, %s5
  %s8 = scalar_select 0, %s7, %s5
  $region1: #{tpu_custom_call.1} parent=0
    #allocation2 [shape = 'u8[1024]{0}', space=vmem, size = 0x400, scoped, tag = 'output window, operand 0, single buffered']
    #allocation3 [shape = 's32[1]{0}', space=sflag, size = 0x4, scoped, tag = 'scoped memory for tpu_custom_call.1']
    %9 = vsyncpa [#allocation3], 0
    // Predicated region
    $region2: #{tpu_custom_call.1} parent=1 // pred_check
      _
    $region3: #{tpu_custom_call.1} parent=1 // pred_check_branch
      %11 = sbr.rel (0) target = $region5
    $region4: #{tpu_custom_call.1} parent=1 // pred_region
      _
    $region5: #{tpu_custom_call.1} parent=1 // pred_fallthru
      _
    // Predicated region
    $region6: #{tpu_custom_call.1} parent=1 // pred_check
      _
    $region7: #{tpu_custom_call.1} parent=1 // pred_check_branch
      %13 = sbr.rel (0) target = $region9
    $region8: #{tpu_custom_call.1} parent=1 // pred_region
      _
    $region9: #{tpu_custom_call.1} parent=1 // pred_fallthru
      _
    // Predicated region
    $region10: #{tpu_custom_call.1} parent=1 // pred_check
      _
    $region11: #{tpu_custom_call.1} parent=1 // pred_check_branch
      %15 = sbr.rel (0) target = $region13
    $region12: #{tpu_custom_call.1} parent=1 // pred_region
      _
    $region13: #{tpu_custom_call.1} parent=1 // pred_fallthru
      _
    // Predicated region
    $region14: #{tpu_custom_call.1} parent=1 // pred_check
      _
    $region15: #{tpu_custom_call.1} parent=1 // pred_check_branch
      %17 = sbr.rel (0) target = $region17
    $region16: #{tpu_custom_call.1} parent=1 // pred_region
      _
    $region17: #{tpu_custom_call.1} parent=1 // pred_fallthru
      _
    %v18 = vld [vmem:[%s0] sm:$0xff]
    %v19 = vld [vmem:[%s0 + $0x8] sm:$0xff]
    %v20 = vlaneseq
    %v21 = vand.u32 %v20, 127
    %22 = vset.pattern.permute.xlu0 0
    %23 = vperm.xlu0 %22, %v18
    %v24 = vpop.permute.xlu0 %23
    %25 = vset.pattern.permute.xlu0 0
    %26 = vperm.xlu0 %25, %v19
    %v27 = vpop.permute.xlu0 %26
    %vm28 = vcmp.eq.s32.totalorder %v24, %v21
    %vm29 = vcmp.eq.s32.totalorder %v27, %v21
    %v30 = vsel %vm28, 1, 0
    %v31 = vsel %vm29, 1, 0
    %v32 = vcvt.s32.f32 %v30
    %v33 = vcvt.s32.f32 %v31
    %v34 = vld [vmem:[%s3] sm:$0xff]
    %v35 = vld [vmem:[%s3 + $0x8] sm:$0xff]
    %v36 = vld [vmem:[%s3 + $0x10] sm:$0xff]
    %v37 = vld [vmem:[%s3 + $0x18] sm:$0xff]
    %v38 = vld [vmem:[%s3 + $0x20] sm:$0xff]
    %v39 = vld [vmem:[%s3 + $0x28] sm:$0xff]
    %v40 = vld [vmem:[%s3 + $0x30] sm:$0xff]
    %v41 = vld [vmem:[%s3 + $0x38] sm:$0xff]
    %v42 = vld [vmem:[%s3 + $0x40] sm:$0xff]
    %v43 = vld [vmem:[%s3 + $0x48] sm:$0xff]
    %v44 = vld [vmem:[%s3 + $0x50] sm:$0xff]
    %v45 = vld [vmem:[%s3 + $0x58] sm:$0xff]
    %v46 = vld [vmem:[%s3 + $0x60] sm:$0xff]
    %vm47 = vcmask 850944
    %v49 = vsel %vm47, %v32, 0
    %v52 = vsel %vm47, %v33, 0
    %54 = vmatprep.subr.mxu0 0.0
    %55 = vmatpush1.msra.mxu0 0.0
    %56 = vmatprep.subr.mxu0 0.0
    %57 = vmatpush1.msra.mxu0 0.0
    %58 = vmatprep.subr.mxu0 0.0
    %59 = vmatpush1.msra.mxu0 0.0
    %60 = vmatprep.subr.mxu0 0.0
    %61 = vmatpush1.msra.mxu0 %v46
    %62 = vmatprep.subr.mxu0 0.0
    %63 = vmatpush1.msra.mxu0 %v45
    %64 = vmatprep.subr.mxu0 0.0
    %65 = vmatpush1.msra.mxu0 %v44
    %66 = vmatprep.subr.mxu0 0.0
    %67 = vmatpush1.msra.mxu0 %v43
    %68 = vmatprep.subr.mxu0 0.0
    %69 = vmatpush1.msra.mxu0 %v42
    %70 = vmatprep.subr.mxu0 0.0
    %71 = vmatpush1.msra.mxu0 %v41
    %72 = vmatprep.subr.mxu0 0.0
    %73 = vmatpush1.msra.mxu0 %v40
    %74 = vmatprep.subr.mxu0 0.0
    %75 = vmatpush1.msra.mxu0 %v39
    %76 = vmatprep.subr.mxu0 0.0
    %77 = vmatpush1.msra.mxu0 %v38
    %78 = vmatprep.subr.mxu0 0.0
    %79 = vmatpush1.msra.mxu0 %v37
    %80 = vmatprep.subr.mxu0 0.0
    %81 = vmatpush1.msra.mxu0 %v36
    %82 = vmatprep.subr.mxu0 0.0
    %83 = vmatpush1.msra.mxu0 %v35
    %84 = vmatprep.subr.mxu0 0.0
    %85 = vmatpush1.msra.mxu0 %v34
    %86 = vmatprep.subr.mxu0 0.0
    %87 = vmatpush2.msra.mxu0 0.0
    %88 = vmatprep.subr.mxu0 0.0
    %89 = vmatpush2.msra.mxu0 0.0
    %90 = vmatprep.subr.mxu0 0.0
    %91 = vmatpush2.msra.mxu0 0.0
    %92 = vmatprep.subr.mxu0 0.0
    %93 = vmatpush2.msra.mxu0 0.0
    %94 = vmatprep.subr.mxu0 0.0
    %95 = vmatpush2.msra.mxu0 0.0
    %96 = vmatprep.subr.mxu0 0.0
    %97 = vmatpush2.msra.mxu0 0.0
    %98 = vmatprep.subr.mxu0 0.0
    %99 = vmatpush2.msra.mxu0 0.0
    %100 = vmatprep.subr.mxu0 0.0
    %101 = vmatpush2.msra.mxu0 0.0
    %102 = vmatprep.subr.mxu0 0.0
    %103 = vmatpush2.msra.mxu0 0.0
    %104 = vmatprep.subr.mxu0 0.0
    %105 = vmatpush2.msra.mxu0 0.0
    %106 = vmatprep.subr.mxu0 0.0
    %107 = vmatpush2.msra.mxu0 0.0
    %108 = vmatprep.subr.mxu0 0.0
    %109 = vmatpush2.msra.mxu0 0.0
    %110 = vmatprep.subr.mxu0 0.0
    %111 = vmatpush2.msra.mxu0 0.0
    %112 = vmatprep.subr.mxu0 0.0
    %113 = vmatpush2.msra.mxu0 0.0
    %114 = vmatprep.subr.mxu0 0.0
    %115 = vmatpush2.msra.mxu0 0.0
    %116 = vmatprep.subr.mxu0 0.0
    %117 = vmatpush2.msra.mxu0 0.0
    %118 = vmatprep.mubr.f32.mxu0 0.0
    %119 = vmatmul.mubr.f32.gmra.mxu0 %v49
    %v120 = vpop.f32.mrf.mxu0
    %v121 = vadd.f32 0.0, %v120
    %v122 = vpop.f32.mrf.mxu0
    %123 = vmatprep.mubr.f32.mxu0 0.0
    %124 = vmatmul.mubr.f32.gmra.mxu0 %v52
    %v125 = vpop.f32.mrf.mxu0
    %v126 = vadd.f32 0.0, %v125
    %v127 = vpop.f32.mrf.mxu0
    %128 = vdwg.mxu0
    %v129 = vld [vmem:[%s3 + $0x68] sm:$0xff]
    %v130 = vadd.f32 %v121, %v129
    %v131 = vadd.f32 %v126, %v129
    %v132 = vld [vmem:[%s3 + $0x70] sm:$0x1]
    %v133 = vld [vmem:[%s3 + $0x71] sm:$0x1]
    %vm134 = vcmask 261120
    %v135 = vsel %vm134, %v130, 0.0
    %136 = vadd.xlane.f32.xlu0 %v135
    %v137 = vpop.xlane.xlu0 %136
    %v138 = vsel %vm134, %v131, 0.0
    %139 = vadd.xlane.f32.xlu0 %v138
    %v140 = vpop.xlane.xlu0 %139
    %v141 = vrcp.pop 32.0
    %v142 = vmul.f32 %v137, %v141
    %v143 = vmul.f32 %v140, %v141
    %v144 = vsub.f32 %v130, %v142
    %v145 = vsub.f32 %v131, %v143
    %v146 = vmul.f32 %v144, %v144
    %v147 = vmul.f32 %v145, %v145
    %v148 = vsel %vm134, %v146, 0.0
    %149 = vadd.xlane.f32.xlu0 %v148
    %v150 = vpop.xlane.xlu0 %149
    %v151 = vsel %vm134, %v147, 0.0
    %152 = vadd.xlane.f32.xlu0 %v151
    %v153 = vpop.xlane.xlu0 %152
    %v154 = vmul.f32 %v150, %v141
    %v155 = vmul.f32 %v153, %v141
    %v156 = vadd.f32 %v154, 1e-12
    %v157 = vadd.f32 %v155, 1e-12
    %v158 = vrsqrt.pop %v156
    %v159 = vrsqrt.pop %v157
    %v160 = vmul.f32 %v144, %v158
    %v161 = vmul.f32 %v145, %v159
    %v162 = vlaneseq
    %v163 = vshrl.u32 %v162, 7
    %v164 = vsub.s32 0, %v163
    %v165 = vrot.slane %v132, %v164
    %v166 = vmul.f32 %v160, %v165
    %v167 = vmul.f32 %v161, %v165
    %v168 = vlaneseq
    %v169 = vshrl.u32 %v168, 7
    %v170 = vsub.s32 0, %v169
    %v171 = vrot.slane %v133, %v170
    %v172 = vadd.f32 %v166, %v171
    %v173 = vadd.f32 %v167, %v171
    %v174 = vld [vmem:[%s1] sm:$0xff]
    %v175 = vld [vmem:[%s1 + $0x8] sm:$0xff]
    %v176 = vcvt.s32.f32 %v174
    %v177 = vcvt.s32.f32 %v175
    %v178 = vsub.f32 1.0, %v176
    %v179 = vsub.f32 1.0, %v177
    %v180 = vmul.f32 %v178, -1e+09
    %v181 = vmul.f32 %v179, -1e+09
    %v182 = vlaneseq
    %v183 = vshrl.u32 %v182, 7
    %v184 = vadd.s32 %v183, 8
    %v185 = vadd.s32 %v183, 16
    %v186 = vadd.s32 %v183, 24
    %v187 = vmul.u32 %v21, 8
    %vm188 = vcmp.ge.s32.totalorder %v183, %v187
    %vm189 = vcmp.ge.s32.totalorder %v184, %v187
    %vm190 = vcmp.ge.s32.totalorder %v185, %v187
    %vm191 = vcmp.ge.s32.totalorder %v186, %v187
    %v192 = vadd.s32 %v21, 1
    %v193 = vmul.u32 %v192, 8
    %vm194 = vcmp.lt.s32.totalorder %v183, %v193
    %vm195 = vcmp.lt.s32.totalorder %v184, %v193
    %vm196 = vcmp.lt.s32.totalorder %v185, %v193
    %vm197 = vcmp.lt.s32.totalorder %v186, %v193
    %vm198 = vmand %vm188, %vm194
    %vm199 = vmand %vm189, %vm195
    %vm200 = vmand %vm190, %vm196
    %vm201 = vmand %vm191, %vm197
    %v202 = vsel %vm198, 1, 0
    %v203 = vsel %vm199, 1, 0
    %v204 = vsel %vm200, 1, 0
    %v205 = vsel %vm201, 1, 0
    %v206 = vcvt.s32.f32 %v202
    %v207 = vcvt.s32.f32 %v203
    %v208 = vcvt.s32.f32 %v204
    %v209 = vcvt.s32.f32 %v205
    %v210 = vmul.u32 %v183, 8
    %vm211 = vcmp.ge.s32.totalorder %v21, %v210
    %v212 = vadd.s32 %v183, 1
    %v213 = vmul.u32 %v212, 8
    %vm214 = vcmp.lt.s32.totalorder %v21, %v213
    %vm215 = vmand %vm211, %vm214
    %v216 = vsel %vm215, 1, 0
    %v217 = vcvt.s32.f32 %v216
    %v218 = vld [vmem:[%s2] sm:$0xff]
    %v219 = vld [vmem:[%s2 + $0x8] sm:$0xff]
    %v220 = vld [vmem:[%s2 + $0x10] sm:$0xff]
    %v221 = vld [vmem:[%s2 + $0x18] sm:$0xff]
    %v222 = vld [vmem:[%s2 + $0x20] sm:$0xff]
    %v223 = vld [vmem:[%s2 + $0x28] sm:$0xff]
    %v224 = vld [vmem:[%s2 + $0x30] sm:$0xff]
    %v225 = vld [vmem:[%s2 + $0x38] sm:$0xff]
    %v226 = vld [vmem:[%s2 + $0x40] sm:$0xff]
    %v227 = vld [vmem:[%s2 + $0x48] sm:$0xff]
    %v228 = vld [vmem:[%s2 + $0x50] sm:$0xff]
    %v229 = vld [vmem:[%s2 + $0x58] sm:$0xff]
    %v230 = vld [vmem:[%s2 + $0x60] sm:$0xff]
    %v231 = vld [vmem:[%s2 + $0x68] sm:$0xff]
    %v232 = vld [vmem:[%s2 + $0x70] sm:$0xff]
    %v233 = vld [vmem:[%s2 + $0x78] sm:$0xff]
    %v234 = vld [vmem:[%s2 + $0x80] sm:$0xff]
    %v235 = vld [vmem:[%s2 + $0x88] sm:$0xff]
    %v236 = vld [vmem:[%s2 + $0x90] sm:$0xff]
    %v237 = vld [vmem:[%s2 + $0x98] sm:$0xff]
    %v238 = vld [vmem:[%s2 + $0xa0] sm:$0xff]
    %v239 = vld [vmem:[%s2 + $0xa8] sm:$0xff]
    %v240 = vld [vmem:[%s2 + $0xb0] sm:$0xff]
    %v241 = vld [vmem:[%s2 + $0xb8] sm:$0xff]
    %v242 = vld [vmem:[%s2 + $0xc0] sm:$0xff]
    %v243 = vld [vmem:[%s2 + $0xc8] sm:$0xff]
    %v244 = vld [vmem:[%s2 + $0xd0] sm:$0xff]
    %v245 = vld [vmem:[%s2 + $0xd8] sm:$0xff]
    %v246 = vld [vmem:[%s2 + $0xe0] sm:$0x1]
    %v247 = vld [vmem:[%s2 + $0xe1] sm:$0x1]
    %v248 = vld [vmem:[%s2 + $0xe2] sm:$0x1]
    %v249 = vld [vmem:[%s2 + $0xe3] sm:$0x1]
    %v250 = vld [vmem:[%s2 + $0xe4] sm:$0x1]
    %v251 = vld [vmem:[%s2 + $0xe5] sm:$0x1]
    %v252 = vld [vmem:[%s2 + $0xe6] sm:$0x1]
    %v253 = vld [vmem:[%s2 + $0xe7] sm:$0x1]
    %v254 = vld [vmem:[%s2 + $0xe8] sm:$0x1]
    %v255 = vld [vmem:[%s2 + $0xe9] sm:$0x1]
    %v256 = vlaneseq
    %v257 = vshrl.u32 %v256, 7
    %v258 = vsub.s32 0, %v257
    %v259 = vrot.slane %v246, %v258
    %v261 = vsel %vm134, %v172, 0
    %v264 = vsel %vm134, %v173, 0
    %266 = vmatprep.subr.mxu0 0.0
    %267 = vmatpush1.msra.mxu0 0.0
    %268 = vmatprep.subr.mxu0 0.0
    %269 = vmatpush1.msra.mxu0 0.0
    %270 = vmatprep.subr.mxu0 0.0
    %271 = vmatpush1.msra.mxu0 0.0
    %272 = vmatprep.subr.mxu0 0.0
    %273 = vmatpush1.msra.mxu0 0.0
    %274 = vmatprep.subr.mxu0 0.0
    %275 = vmatpush1.msra.mxu0 0.0
    %276 = vmatprep.subr.mxu0 0.0
    %277 = vmatpush1.msra.mxu0 0.0
    %278 = vmatprep.subr.mxu0 0.0
    %279 = vmatpush1.msra.mxu0 0.0
    %280 = vmatprep.subr.mxu0 0.0
    %281 = vmatpush1.msra.mxu0 0.0
    %282 = vmatprep.subr.mxu0 0.0
    %283 = vmatpush1.msra.mxu0 0.0
    %284 = vmatprep.subr.mxu0 0.0
    %285 = vmatpush1.msra.mxu0 0.0
    %286 = vmatprep.subr.mxu0 0.0
    %287 = vmatpush1.msra.mxu0 0.0
    %288 = vmatprep.subr.mxu0 0.0
    %289 = vmatpush1.msra.mxu0 0.0
    %290 = vmatprep.subr.mxu0 0.0
    %291 = vmatpush1.msra.mxu0 %v221
    %292 = vmatprep.subr.mxu0 0.0
    %293 = vmatpush1.msra.mxu0 %v220
    %294 = vmatprep.subr.mxu0 0.0
    %295 = vmatpush1.msra.mxu0 %v219
    %296 = vmatprep.subr.mxu0 0.0
    %297 = vmatpush1.msra.mxu0 %v218
    %298 = vmatprep.subr.mxu0 0.0
    %299 = vmatpush2.msra.mxu0 0.0
    %300 = vmatprep.subr.mxu0 0.0
    %301 = vmatpush2.msra.mxu0 0.0
    %302 = vmatprep.subr.mxu0 0.0
    %303 = vmatpush2.msra.mxu0 0.0
    %304 = vmatprep.subr.mxu0 0.0
    %305 = vmatpush2.msra.mxu0 0.0
    %306 = vmatprep.subr.mxu0 0.0
    %307 = vmatpush2.msra.mxu0 0.0
    %308 = vmatprep.subr.mxu0 0.0
    %309 = vmatpush2.msra.mxu0 0.0
    %310 = vmatprep.subr.mxu0 0.0
    %311 = vmatpush2.msra.mxu0 0.0
    %312 = vmatprep.subr.mxu0 0.0
    %313 = vmatpush2.msra.mxu0 0.0
    %314 = vmatprep.subr.mxu0 0.0
    %315 = vmatpush2.msra.mxu0 0.0
    %316 = vmatprep.subr.mxu0 0.0
    %317 = vmatpush2.msra.mxu0 0.0
    %318 = vmatprep.subr.mxu0 0.0
    %319 = vmatpush2.msra.mxu0 0.0
    %320 = vmatprep.subr.mxu0 0.0
    %321 = vmatpush2.msra.mxu0 0.0
    %322 = vmatprep.subr.mxu0 0.0
    %323 = vmatpush2.msra.mxu0 0.0
    %324 = vmatprep.subr.mxu0 0.0
    %325 = vmatpush2.msra.mxu0 0.0
    %326 = vmatprep.subr.mxu0 0.0
    %327 = vmatpush2.msra.mxu0 0.0
    %328 = vmatprep.subr.mxu0 0.0
    %329 = vmatpush2.msra.mxu0 0.0
    %330 = vmatprep.mubr.f32.mxu0 0.0
    %331 = vmatmul.mubr.f32.gmra.mxu0 %v261
    %v332 = vpop.f32.mrf.mxu0
    %v333 = vadd.f32 %v259, %v332
    %v334 = vpop.f32.mrf.mxu0
    %335 = vmatprep.mubr.f32.mxu0 0.0
    %336 = vmatmul.mubr.f32.gmra.mxu0 %v264
    %v337 = vpop.f32.mrf.mxu0
    %v338 = vadd.f32 %v259, %v337
    %v339 = vpop.f32.mrf.mxu0
    %340 = vdwg.mxu0
    %v341 = vlaneseq
    %v342 = vshrl.u32 %v341, 7
    %v343 = vsub.s32 0, %v342
    %v344 = vrot.slane %v247, %v343
    %345 = vmatprep.subr.mxu0 0.0
    %346 = vmatpush1.msra.mxu0 0.0
    %347 = vmatprep.subr.mxu0 0.0
    %348 = vmatpush1.msra.mxu0 0.0
    %349 = vmatprep.subr.mxu0 0.0
    %350 = vmatpush1.msra.mxu0 0.0
    %351 = vmatprep.subr.mxu0 0.0
    %352 = vmatpush1.msra.mxu0 0.0
    %353 = vmatprep.subr.mxu0 0.0
    %354 = vmatpush1.msra.mxu0 0.0
    %355 = vmatprep.subr.mxu0 0.0
    %356 = vmatpush1.msra.mxu0 0.0
    %357 = vmatprep.subr.mxu0 0.0
    %358 = vmatpush1.msra.mxu0 0.0
    %359 = vmatprep.subr.mxu0 0.0
    %360 = vmatpush1.msra.mxu0 0.0
    %361 = vmatprep.subr.mxu0 0.0
    %362 = vmatpush1.msra.mxu0 0.0
    %363 = vmatprep.subr.mxu0 0.0
    %364 = vmatpush1.msra.mxu0 0.0
    %365 = vmatprep.subr.mxu0 0.0
    %366 = vmatpush1.msra.mxu0 0.0
    %367 = vmatprep.subr.mxu0 0.0
    %368 = vmatpush1.msra.mxu0 0.0
    %369 = vmatprep.subr.mxu0 0.0
    %370 = vmatpush1.msra.mxu0 %v225
    %371 = vmatprep.subr.mxu0 0.0
    %372 = vmatpush1.msra.mxu0 %v224
    %373 = vmatprep.subr.mxu0 0.0
    %374 = vmatpush1.msra.mxu0 %v223
    %375 = vmatprep.subr.mxu0 0.0
    %376 = vmatpush1.msra.mxu0 %v222
    %377 = vmatprep.subr.mxu0 0.0
    %378 = vmatpush2.msra.mxu0 0.0
    %379 = vmatprep.subr.mxu0 0.0
    %380 = vmatpush2.msra.mxu0 0.0
    %381 = vmatprep.subr.mxu0 0.0
    %382 = vmatpush2.msra.mxu0 0.0
    %383 = vmatprep.subr.mxu0 0.0
    %384 = vmatpush2.msra.mxu0 0.0
    %385 = vmatprep.subr.mxu0 0.0
    %386 = vmatpush2.msra.mxu0 0.0
    %387 = vmatprep.subr.mxu0 0.0
    %388 = vmatpush2.msra.mxu0 0.0
    %389 = vmatprep.subr.mxu0 0.0
    %390 = vmatpush2.msra.mxu0 0.0
    %391 = vmatprep.subr.mxu0 0.0
    %392 = vmatpush2.msra.mxu0 0.0
    %393 = vmatprep.subr.mxu0 0.0
    %394 = vmatpush2.msra.mxu0 0.0
    %395 = vmatprep.subr.mxu0 0.0
    %396 = vmatpush2.msra.mxu0 0.0
    %397 = vmatprep.subr.mxu0 0.0
    %398 = vmatpush2.msra.mxu0 0.0
    %399 = vmatprep.subr.mxu0 0.0
    %400 = vmatpush2.msra.mxu0 0.0
    %401 = vmatprep.subr.mxu0 0.0
    %402 = vmatpush2.msra.mxu0 0.0
    %403 = vmatprep.subr.mxu0 0.0
    %404 = vmatpush2.msra.mxu0 0.0
    %405 = vmatprep.subr.mxu0 0.0
    %406 = vmatpush2.msra.mxu0 0.0
    %407 = vmatprep.subr.mxu0 0.0
    %408 = vmatpush2.msra.mxu0 0.0
    %409 = vmatprep.mubr.f32.mxu0 0.0
    %410 = vmatmul.mubr.f32.gmra.mxu0 %v261
    %v411 = vpop.f32.mrf.mxu0
    %v412 = vadd.f32 %v344, %v411
    %v413 = vpop.f32.mrf.mxu0
    %414 = vmatprep.mubr.f32.mxu0 0.0
    %415 = vmatmul.mubr.f32.gmra.mxu0 %v264
    %v416 = vpop.f32.mrf.mxu0
    %v417 = vadd.f32 %v344, %v416
    %v418 = vpop.f32.mrf.mxu0
    %419 = vdwg.mxu0
    %v420 = vlaneseq
    %v421 = vshrl.u32 %v420, 7
    %v422 = vsub.s32 0, %v421
    %v423 = vrot.slane %v248, %v422
    %424 = vmatprep.subr.mxu0 0.0
    %425 = vmatpush1.msra.mxu0 0.0
    %426 = vmatprep.subr.mxu0 0.0
    %427 = vmatpush1.msra.mxu0 0.0
    %428 = vmatprep.subr.mxu0 0.0
    %429 = vmatpush1.msra.mxu0 0.0
    %430 = vmatprep.subr.mxu0 0.0
    %431 = vmatpush1.msra.mxu0 0.0
    %432 = vmatprep.subr.mxu0 0.0
    %433 = vmatpush1.msra.mxu0 0.0
    %434 = vmatprep.subr.mxu0 0.0
    %435 = vmatpush1.msra.mxu0 0.0
    %436 = vmatprep.subr.mxu0 0.0
    %437 = vmatpush1.msra.mxu0 0.0
    %438 = vmatprep.subr.mxu0 0.0
    %439 = vmatpush1.msra.mxu0 0.0
    %440 = vmatprep.subr.mxu0 0.0
    %441 = vmatpush1.msra.mxu0 0.0
    %442 = vmatprep.subr.mxu0 0.0
    %443 = vmatpush1.msra.mxu0 0.0
    %444 = vmatprep.subr.mxu0 0.0
    %445 = vmatpush1.msra.mxu0 0.0
    %446 = vmatprep.subr.mxu0 0.0
    %447 = vmatpush1.msra.mxu0 0.0
    %448 = vmatprep.subr.mxu0 0.0
    %449 = vmatpush1.msra.mxu0 %v229
    %450 = vmatprep.subr.mxu0 0.0
    %451 = vmatpush1.msra.mxu0 %v228
    %452 = vmatprep.subr.mxu0 0.0
    %453 = vmatpush1.msra.mxu0 %v227
    %454 = vmatprep.subr.mxu0 0.0
    %455 = vmatpush1.msra.mxu0 %v226
    %456 = vmatprep.subr.mxu0 0.0
    %457 = vmatpush2.msra.mxu0 0.0
    %458 = vmatprep.subr.mxu0 0.0
    %459 = vmatpush2.msra.mxu0 0.0
    %460 = vmatprep.subr.mxu0 0.0
    %461 = vmatpush2.msra.mxu0 0.0
    %462 = vmatprep.subr.mxu0 0.0
    %463 = vmatpush2.msra.mxu0 0.0
    %464 = vmatprep.subr.mxu0 0.0
    %465 = vmatpush2.msra.mxu0 0.0
    %466 = vmatprep.subr.mxu0 0.0
    %467 = vmatpush2.msra.mxu0 0.0
    %468 = vmatprep.subr.mxu0 0.0
    %469 = vmatpush2.msra.mxu0 0.0
    %470 = vmatprep.subr.mxu0 0.0
    %471 = vmatpush2.msra.mxu0 0.0
    %472 = vmatprep.subr.mxu0 0.0
    %473 = vmatpush2.msra.mxu0 0.0
    %474 = vmatprep.subr.mxu0 0.0
    %475 = vmatpush2.msra.mxu0 0.0
    %476 = vmatprep.subr.mxu0 0.0
    %477 = vmatpush2.msra.mxu0 0.0
    %478 = vmatprep.subr.mxu0 0.0
    %479 = vmatpush2.msra.mxu0 0.0
    %480 = vmatprep.subr.mxu0 0.0
    %481 = vmatpush2.msra.mxu0 0.0
    %482 = vmatprep.subr.mxu0 0.0
    %483 = vmatpush2.msra.mxu0 0.0
    %484 = vmatprep.subr.mxu0 0.0
    %485 = vmatpush2.msra.mxu0 0.0
    %486 = vmatprep.subr.mxu0 0.0
    %487 = vmatpush2.msra.mxu0 0.0
    %488 = vmatprep.mubr.f32.mxu0 0.0
    %489 = vmatmul.mubr.f32.gmra.mxu0 %v261
    %v490 = vpop.f32.mrf.mxu0
    %v491 = vadd.f32 %v423, %v490
    %v492 = vpop.f32.mrf.mxu0
    %493 = vmatprep.mubr.f32.mxu0 0.0
    %494 = vmatmul.mubr.f32.gmra.mxu0 %v264
    %v495 = vpop.f32.mrf.mxu0
    %v496 = vadd.f32 %v423, %v495
    %v497 = vpop.f32.mrf.mxu0
    %498 = vdwg.mxu0
    %v501 = vcombine.high %v333, %v333
    %v503 = vunpack.c.l.s4 1966171168
    %v504 = vunpack.c.0.s8 %v503
    %v505 = vlaneseq
    %v506 = vshrl.u32 %v505, 7
    %v507 = vsub.s32 %v504, %v506
    %v508 = vrot.slane %v333, %v507
    %v510 = vunpack.c.l.s4 1966171168
    %v511 = vunpack.c.0.s8 %v510
    %v512 = vlaneseq
    %v513 = vshrl.u32 %v512, 7
    %v514 = vsub.s32 %v511, %v513
    %v515 = vrot.slane %v501, %v514
    %v516 = vcombine.high %v508, %v508
    %v517 = vcombine.high %v515, %v515
    %v519 = vunpack.c.l.s4 1966171168
    %v520 = vunpack.c.0.s8 %v519
    %v521 = vlaneseq
    %v522 = vshrl.u32 %v521, 7
    %v523 = vsub.s32 %v520, %v522
    %v524 = vrot.slane %v508, %v523
    %v526 = vunpack.c.l.s4 1966171168
    %v527 = vunpack.c.0.s8 %v526
    %v528 = vlaneseq
    %v529 = vshrl.u32 %v528, 7
    %v530 = vsub.s32 %v527, %v529
    %v531 = vrot.slane %v515, %v530
    %v533 = vunpack.c.l.s4 1966171168
    %v534 = vunpack.c.0.s8 %v533
    %v535 = vlaneseq
    %v536 = vshrl.u32 %v535, 7
    %v537 = vsub.s32 %v534, %v536
    %v538 = vrot.slane %v516, %v537
    %v540 = vunpack.c.l.s4 1966171168
    %v541 = vunpack.c.0.s8 %v540
    %v542 = vlaneseq
    %v543 = vshrl.u32 %v542, 7
    %v544 = vsub.s32 %v541, %v543
    %v545 = vrot.slane %v517, %v544
    %v546 = vcombine.high %v524, %v524
    %v547 = vcombine.high %v531, %v531
    %v548 = vcombine.high %v538, %v538
    %v549 = vcombine.high %v545, %v545
    %v550 = vcombine.high %v338, %v338
    %v552 = vunpack.c.l.s4 1966171168
    %v553 = vunpack.c.0.s8 %v552
    %v554 = vlaneseq
    %v555 = vshrl.u32 %v554, 7
    %v556 = vsub.s32 %v553, %v555
    %v557 = vrot.slane %v338, %v556
    %v559 = vunpack.c.l.s4 1966171168
    %v560 = vunpack.c.0.s8 %v559
    %v561 = vlaneseq
    %v562 = vshrl.u32 %v561, 7
    %v563 = vsub.s32 %v560, %v562
    %v564 = vrot.slane %v550, %v563
    %v565 = vcombine.high %v557, %v557
    %v566 = vcombine.high %v564, %v564
    %v568 = vunpack.c.l.s4 1966171168
    %v569 = vunpack.c.0.s8 %v568
    %v570 = vlaneseq
    %v571 = vshrl.u32 %v570, 7
    %v572 = vsub.s32 %v569, %v571
    %v573 = vrot.slane %v557, %v572
    %v575 = vunpack.c.l.s4 1966171168
    %v576 = vunpack.c.0.s8 %v575
    %v577 = vlaneseq
    %v578 = vshrl.u32 %v577, 7
    %v579 = vsub.s32 %v576, %v578
    %v580 = vrot.slane %v564, %v579
    %v582 = vunpack.c.l.s4 1966171168
    %v583 = vunpack.c.0.s8 %v582
    %v584 = vlaneseq
    %v585 = vshrl.u32 %v584, 7
    %v586 = vsub.s32 %v583, %v585
    %v587 = vrot.slane %v565, %v586
    %v589 = vunpack.c.l.s4 1966171168
    %v590 = vunpack.c.0.s8 %v589
    %v591 = vlaneseq
    %v592 = vshrl.u32 %v591, 7
    %v593 = vsub.s32 %v590, %v592
    %v594 = vrot.slane %v566, %v593
    %v595 = vcombine.high %v573, %v573
    %v596 = vcombine.high %v580, %v580
    %v597 = vcombine.high %v587, %v587
    %v598 = vcombine.high %v594, %v594
    %v599 = vlaneseq
    %v600 = vshrl.u32 %v599, 7
    %v601 = vsub.s32 0, %v600
    %v602 = vrot.slane %v524, %v601
    %v603 = vlaneseq
    %v604 = vshrl.u32 %v603, 7
    %v605 = vsub.s32 0, %v604
    %v606 = vrot.slane %v538, %v605
    %v607 = vlaneseq
    %v608 = vshrl.u32 %v607, 7
    %v609 = vsub.s32 0, %v608
    %v610 = vrot.slane %v546, %v609
    %v611 = vlaneseq
    %v612 = vshrl.u32 %v611, 7
    %v613 = vsub.s32 0, %v612
    %v614 = vrot.slane %v548, %v613
    %v615 = vlaneseq
    %v616 = vshrl.u32 %v615, 7
    %v617 = vsub.s32 0, %v616
    %v618 = vrot.slane %v531, %v617
    %v619 = vlaneseq
    %v620 = vshrl.u32 %v619, 7
    %v621 = vsub.s32 0, %v620
    %v622 = vrot.slane %v545, %v621
    %v623 = vlaneseq
    %v624 = vshrl.u32 %v623, 7
    %v625 = vsub.s32 0, %v624
    %v626 = vrot.slane %v547, %v625
    %v627 = vlaneseq
    %v628 = vshrl.u32 %v627, 7
    %v629 = vsub.s32 0, %v628
    %v630 = vrot.slane %v549, %v629
    %v631 = vlaneseq
    %v632 = vshrl.u32 %v631, 7
    %v633 = vsub.s32 0, %v632
    %v634 = vrot.slane %v573, %v633
    %v635 = vlaneseq
    %v636 = vshrl.u32 %v635, 7
    %v637 = vsub.s32 0, %v636
    %v638 = vrot.slane %v587, %v637
    %v639 = vlaneseq
    %v640 = vshrl.u32 %v639, 7
    %v641 = vsub.s32 0, %v640
    %v642 = vrot.slane %v595, %v641
    %v643 = vlaneseq
    %v644 = vshrl.u32 %v643, 7
    %v645 = vsub.s32 0, %v644
    %v646 = vrot.slane %v597, %v645
    %v647 = vlaneseq
    %v648 = vshrl.u32 %v647, 7
    %v649 = vsub.s32 0, %v648
    %v650 = vrot.slane %v580, %v649
    %v651 = vlaneseq
    %v652 = vshrl.u32 %v651, 7
    %v653 = vsub.s32 0, %v652
    %v654 = vrot.slane %v594, %v653
    %v655 = vlaneseq
    %v656 = vshrl.u32 %v655, 7
    %v657 = vsub.s32 0, %v656
    %v658 = vrot.slane %v596, %v657
    %v659 = vlaneseq
    %v660 = vshrl.u32 %v659, 7
    %v661 = vsub.s32 0, %v660
    %v662 = vrot.slane %v598, %v661
    %v679 = vmul.f32 %v602, %v412
    %v680 = vmul.f32 %v606, %v412
    %v681 = vmul.f32 %v610, %v412
    %v682 = vmul.f32 %v614, %v412
    %v683 = vmul.f32 %v618, %v412
    %v684 = vmul.f32 %v622, %v412
    %v685 = vmul.f32 %v626, %v412
    %v686 = vmul.f32 %v630, %v412
    %v687 = vmul.f32 %v634, %v417
    %v688 = vmul.f32 %v638, %v417
    %v689 = vmul.f32 %v642, %v417
    %v690 = vmul.f32 %v646, %v417
    %v691 = vmul.f32 %v650, %v417
    %v692 = vmul.f32 %v654, %v417
    %v693 = vmul.f32 %v658, %v417
    %v694 = vmul.f32 %v662, %v417
    %v696 = vsel %vm134, %v679, 0
    %v699 = vsel %vm134, %v680, 0
    %v702 = vsel %vm134, %v681, 0
    %v705 = vsel %vm134, %v682, 0
    %v708 = vsel %vm134, %v683, 0
    %v711 = vsel %vm134, %v684, 0
    %v714 = vsel %vm134, %v685, 0
    %v717 = vsel %vm134, %v686, 0
    %v720 = vsel %vm134, %v687, 0
    %v723 = vsel %vm134, %v688, 0
    %v726 = vsel %vm134, %v689, 0
    %v729 = vsel %vm134, %v690, 0
    %v732 = vsel %vm134, %v691, 0
    %v735 = vsel %vm134, %v692, 0
    %v738 = vsel %vm134, %v693, 0
    %v741 = vsel %vm134, %v694, 0
    %743 = vmatprep.subr.mxu0 0.0
    %744 = vmatpush1.msra.mxu0 0.0
    %745 = vmatprep.subr.mxu0 0.0
    %746 = vmatpush1.msra.mxu0 0.0
    %747 = vmatprep.subr.mxu0 0.0
    %748 = vmatpush1.msra.mxu0 0.0
    %749 = vmatprep.subr.mxu0 0.0
    %750 = vmatpush1.msra.mxu0 0.0
    %751 = vmatprep.subr.mxu0 0.0
    %752 = vmatpush1.msra.mxu0 0.0
    %753 = vmatprep.subr.mxu0 0.0
    %754 = vmatpush1.msra.mxu0 0.0
    %755 = vmatprep.subr.mxu0 0.0
    %756 = vmatpush1.msra.mxu0 0.0
    %757 = vmatprep.subr.mxu0 0.0
    %758 = vmatpush1.msra.mxu0 0.0
    %759 = vmatprep.subr.mxu0 0.0
    %760 = vmatpush1.msra.mxu0 0.0
    %761 = vmatprep.subr.mxu0 0.0
    %762 = vmatpush1.msra.mxu0 0.0
    %763 = vmatprep.subr.mxu0 0.0
    %764 = vmatpush1.msra.mxu0 0.0
    %765 = vmatprep.subr.mxu0 0.0
    %766 = vmatpush1.msra.mxu0 0.0
    %767 = vmatprep.subr.mxu0 0.0
    %768 = vmatpush1.msra.mxu0 %v209
    %769 = vmatprep.subr.mxu0 0.0
    %770 = vmatpush1.msra.mxu0 %v208
    %771 = vmatprep.subr.mxu0 0.0
    %772 = vmatpush1.msra.mxu0 %v207
    %773 = vmatprep.subr.mxu0 0.0
    %774 = vmatpush1.msra.mxu0 %v206
    %775 = vmatprep.subr.mxu0 0.0
    %776 = vmatpush2.msra.mxu0 0.0
    %777 = vmatprep.subr.mxu0 0.0
    %778 = vmatpush2.msra.mxu0 0.0
    %779 = vmatprep.subr.mxu0 0.0
    %780 = vmatpush2.msra.mxu0 0.0
    %781 = vmatprep.subr.mxu0 0.0
    %782 = vmatpush2.msra.mxu0 0.0
    %783 = vmatprep.subr.mxu0 0.0
    %784 = vmatpush2.msra.mxu0 0.0
    %785 = vmatprep.subr.mxu0 0.0
    %786 = vmatpush2.msra.mxu0 0.0
    %787 = vmatprep.subr.mxu0 0.0
    %788 = vmatpush2.msra.mxu0 0.0
    %789 = vmatprep.subr.mxu0 0.0
    %790 = vmatpush2.msra.mxu0 0.0
    %791 = vmatprep.subr.mxu0 0.0
    %792 = vmatpush2.msra.mxu0 0.0
    %793 = vmatprep.subr.mxu0 0.0
    %794 = vmatpush2.msra.mxu0 0.0
    %795 = vmatprep.subr.mxu0 0.0
    %796 = vmatpush2.msra.mxu0 0.0
    %797 = vmatprep.subr.mxu0 0.0
    %798 = vmatpush2.msra.mxu0 0.0
    %799 = vmatprep.subr.mxu0 0.0
    %800 = vmatpush2.msra.mxu0 0.0
    %801 = vmatprep.subr.mxu0 0.0
    %802 = vmatpush2.msra.mxu0 0.0
    %803 = vmatprep.subr.mxu0 0.0
    %804 = vmatpush2.msra.mxu0 0.0
    %805 = vmatprep.subr.mxu0 0.0
    %806 = vmatpush2.msra.mxu0 0.0
    %807 = vmatprep.mubr.f32.mxu0 0.0
    %808 = vmatmul.mubr.f32.gmra.mxu0 %v696
    %v809 = vpop.f32.mrf.mxu0
    %v810 = vadd.f32 0.0, %v809
    %v811 = vpop.f32.mrf.mxu0
    %812 = vmatprep.mubr.f32.mxu0 0.0
    %813 = vmatmul.mubr.f32.gmra.mxu0 %v699
    %v814 = vpop.f32.mrf.mxu0
    %v815 = vadd.f32 0.0, %v814
    %v816 = vpop.f32.mrf.mxu0
    %817 = vmatprep.mubr.f32.mxu0 0.0
    %818 = vmatmul.mubr.f32.gmra.mxu0 %v702
    %v819 = vpop.f32.mrf.mxu0
    %v820 = vadd.f32 0.0, %v819
    %v821 = vpop.f32.mrf.mxu0
    %822 = vmatprep.mubr.f32.mxu0 0.0
    %823 = vmatmul.mubr.f32.gmra.mxu0 %v705
    %v824 = vpop.f32.mrf.mxu0
    %v825 = vadd.f32 0.0, %v824
    %v826 = vpop.f32.mrf.mxu0
    %827 = vmatprep.mubr.f32.mxu0 0.0
    %828 = vmatmul.mubr.f32.gmra.mxu0 %v708
    %v829 = vpop.f32.mrf.mxu0
    %v830 = vadd.f32 0.0, %v829
    %v831 = vpop.f32.mrf.mxu0
    %832 = vmatprep.mubr.f32.mxu0 0.0
    %833 = vmatmul.mubr.f32.gmra.mxu0 %v711
    %v834 = vpop.f32.mrf.mxu0
    %v835 = vadd.f32 0.0, %v834
    %v836 = vpop.f32.mrf.mxu0
    %837 = vmatprep.mubr.f32.mxu0 0.0
    %838 = vmatmul.mubr.f32.gmra.mxu0 %v714
    %v839 = vpop.f32.mrf.mxu0
    %v840 = vadd.f32 0.0, %v839
    %v841 = vpop.f32.mrf.mxu0
    %842 = vmatprep.mubr.f32.mxu0 0.0
    %843 = vmatmul.mubr.f32.gmra.mxu0 %v717
    %v844 = vpop.f32.mrf.mxu0
    %v845 = vadd.f32 0.0, %v844
    %v846 = vpop.f32.mrf.mxu0
    %847 = vmatprep.mubr.f32.mxu0 0.0
    %848 = vmatmul.mubr.f32.gmra.mxu0 %v720
    %v849 = vpop.f32.mrf.mxu0
    %v850 = vadd.f32 0.0, %v849
    %v851 = vpop.f32.mrf.mxu0
    %852 = vmatprep.mubr.f32.mxu0 0.0
    %853 = vmatmul.mubr.f32.gmra.mxu0 %v723
    %v854 = vpop.f32.mrf.mxu0
    %v855 = vadd.f32 0.0, %v854
    %v856 = vpop.f32.mrf.mxu0
    %857 = vmatprep.mubr.f32.mxu0 0.0
    %858 = vmatmul.mubr.f32.gmra.mxu0 %v726
    %v859 = vpop.f32.mrf.mxu0
    %v860 = vadd.f32 0.0, %v859
    %v861 = vpop.f32.mrf.mxu0
    %862 = vmatprep.mubr.f32.mxu0 0.0
    %863 = vmatmul.mubr.f32.gmra.mxu0 %v729
    %v864 = vpop.f32.mrf.mxu0
    %v865 = vadd.f32 0.0, %v864
    %v866 = vpop.f32.mrf.mxu0
    %867 = vmatprep.mubr.f32.mxu0 0.0
    %868 = vmatmul.mubr.f32.gmra.mxu0 %v732
    %v869 = vpop.f32.mrf.mxu0
    %v870 = vadd.f32 0.0, %v869
    %v871 = vpop.f32.mrf.mxu0
    %872 = vmatprep.mubr.f32.mxu0 0.0
    %873 = vmatmul.mubr.f32.gmra.mxu0 %v735
    %v874 = vpop.f32.mrf.mxu0
    %v875 = vadd.f32 0.0, %v874
    %v876 = vpop.f32.mrf.mxu0
    %877 = vmatprep.mubr.f32.mxu0 0.0
    %878 = vmatmul.mubr.f32.gmra.mxu0 %v738
    %v879 = vpop.f32.mrf.mxu0
    %v880 = vadd.f32 0.0, %v879
    %v881 = vpop.f32.mrf.mxu0
    %882 = vmatprep.mubr.f32.mxu0 0.0
    %883 = vmatmul.mubr.f32.gmra.mxu0 %v741
    %v884 = vpop.f32.mrf.mxu0
    %v885 = vadd.f32 0.0, %v884
    %v886 = vpop.f32.mrf.mxu0
    %887 = vdwg.mxu0
    %v888 = vmul.f32 %v810, 0.35355338
    %v889 = vmul.f32 %v815, 0.35355338
    %v890 = vmul.f32 %v820, 0.35355338
    %v891 = vmul.f32 %v825, 0.35355338
    %v892 = vmul.f32 %v830, 0.35355338
    %v893 = vmul.f32 %v835, 0.35355338
    %v894 = vmul.f32 %v840, 0.35355338
    %v895 = vmul.f32 %v845, 0.35355338
    %v896 = vmul.f32 %v850, 0.35355338
    %v897 = vmul.f32 %v855, 0.35355338
    %v898 = vmul.f32 %v860, 0.35355338
    %v899 = vmul.f32 %v865, 0.35355338
    %v900 = vmul.f32 %v870, 0.35355338
    %v901 = vmul.f32 %v875, 0.35355338
    %v902 = vmul.f32 %v880, 0.35355338
    %v903 = vmul.f32 %v885, 0.35355338
    %905 = vset.pattern.permute.xlu0 0
    %906 = vperm.xlu0 %905, %v180
    %v907 = vpop.permute.xlu0 %906
    %910 = vset.pattern.permute.xlu0 0
    %911 = vperm.xlu0 %910, %v181
    %v912 = vpop.permute.xlu0 %911
    %v914 = vadd.f32 %v888, %v907
    %v915 = vadd.f32 %v889, %v907
    %v916 = vadd.f32 %v890, %v907
    %v917 = vadd.f32 %v891, %v907
    %v918 = vadd.f32 %v892, %v907
    %v919 = vadd.f32 %v893, %v907
    %v920 = vadd.f32 %v894, %v907
    %v921 = vadd.f32 %v895, %v907
    %v922 = vadd.f32 %v896, %v912
    %v923 = vadd.f32 %v897, %v912
    %v924 = vadd.f32 %v898, %v912
    %v925 = vadd.f32 %v899, %v912
    %v926 = vadd.f32 %v900, %v912
    %v927 = vadd.f32 %v901, %v912
    %v928 = vadd.f32 %v902, %v912
    %v929 = vadd.f32 %v903, %v912
    %vm930 = vcmask 31744
    %v931 = vsel %vm930, %v914, -inf
    %v932 = vrot.slane %v931, 4
    %v933 = vmax.f32 %v931, %v932
    %v934 = vrot.slane %v933, 2
    %v935 = vmax.f32 %v933, %v934
    %v936 = vrot.slane %v935, 1
    %v937 = vmax.f32 %v935, %v936
    %v938 = vsel %vm930, %v915, -inf
    %v939 = vrot.slane %v938, 4
    %v940 = vmax.f32 %v938, %v939
    %v941 = vrot.slane %v940, 2
    %v942 = vmax.f32 %v940, %v941
    %v943 = vrot.slane %v942, 1
    %v944 = vmax.f32 %v942, %v943
    %v945 = vsel %vm930, %v916, -inf
    %v946 = vrot.slane %v945, 4
    %v947 = vmax.f32 %v945, %v946
    %v948 = vrot.slane %v947, 2
    %v949 = vmax.f32 %v947, %v948
    %v950 = vrot.slane %v949, 1
    %v951 = vmax.f32 %v949, %v950
    %v952 = vsel %vm930, %v917, -inf
    %v953 = vrot.slane %v952, 4
    %v954 = vmax.f32 %v952, %v953
    %v955 = vrot.slane %v954, 2
    %v956 = vmax.f32 %v954, %v955
    %v957 = vrot.slane %v956, 1
    %v958 = vmax.f32 %v956, %v957
    %v959 = vsel %vm930, %v918, -inf
    %v960 = vrot.slane %v959, 4
    %v961 = vmax.f32 %v959, %v960
    %v962 = vrot.slane %v961, 2
    %v963 = vmax.f32 %v961, %v962
    %v964 = vrot.slane %v963, 1
    %v965 = vmax.f32 %v963, %v964
    %v966 = vsel %vm930, %v919, -inf
    %v967 = vrot.slane %v966, 4
    %v968 = vmax.f32 %v966, %v967
    %v969 = vrot.slane %v968, 2
    %v970 = vmax.f32 %v968, %v969
    %v971 = vrot.slane %v970, 1
    %v972 = vmax.f32 %v970, %v971
    %v973 = vsel %vm930, %v920, -inf
    %v974 = vrot.slane %v973, 4
    %v975 = vmax.f32 %v973, %v974
    %v976 = vrot.slane %v975, 2
    %v977 = vmax.f32 %v975, %v976
    %v978 = vrot.slane %v977, 1
    %v979 = vmax.f32 %v977, %v978
    %v980 = vsel %vm930, %v921, -inf
    %v981 = vrot.slane %v980, 4
    %v982 = vmax.f32 %v980, %v981
    %v983 = vrot.slane %v982, 2
    %v984 = vmax.f32 %v982, %v983
    %v985 = vrot.slane %v984, 1
    %v986 = vmax.f32 %v984, %v985
    %v987 = vsel %vm930, %v922, -inf
    %v988 = vrot.slane %v987, 4
    %v989 = vmax.f32 %v987, %v988
    %v990 = vrot.slane %v989, 2
    %v991 = vmax.f32 %v989, %v990
    %v992 = vrot.slane %v991, 1
    %v993 = vmax.f32 %v991, %v992
    %v994 = vsel %vm930, %v923, -inf
    %v995 = vrot.slane %v994, 4
    %v996 = vmax.f32 %v994, %v995
    %v997 = vrot.slane %v996, 2
    %v998 = vmax.f32 %v996, %v997
    %v999 = vrot.slane %v998, 1
    %v1000 = vmax.f32 %v998, %v999
    %v1001 = vsel %vm930, %v924, -inf
    %v1002 = vrot.slane %v1001, 4
    %v1003 = vmax.f32 %v1001, %v1002
    %v1004 = vrot.slane %v1003, 2
    %v1005 = vmax.f32 %v1003, %v1004
    %v1006 = vrot.slane %v1005, 1
    %v1007 = vmax.f32 %v1005, %v1006
    %v1008 = vsel %vm930, %v925, -inf
    %v1009 = vrot.slane %v1008, 4
    %v1010 = vmax.f32 %v1008, %v1009
    %v1011 = vrot.slane %v1010, 2
    %v1012 = vmax.f32 %v1010, %v1011
    %v1013 = vrot.slane %v1012, 1
    %v1014 = vmax.f32 %v1012, %v1013
    %v1015 = vsel %vm930, %v926, -inf
    %v1016 = vrot.slane %v1015, 4
    %v1017 = vmax.f32 %v1015, %v1016
    %v1018 = vrot.slane %v1017, 2
    %v1019 = vmax.f32 %v1017, %v1018
    %v1020 = vrot.slane %v1019, 1
    %v1021 = vmax.f32 %v1019, %v1020
    %v1022 = vsel %vm930, %v927, -inf
    %v1023 = vrot.slane %v1022, 4
    %v1024 = vmax.f32 %v1022, %v1023
    %v1025 = vrot.slane %v1024, 2
    %v1026 = vmax.f32 %v1024, %v1025
    %v1027 = vrot.slane %v1026, 1
    %v1028 = vmax.f32 %v1026, %v1027
    %v1029 = vsel %vm930, %v928, -inf
    %v1030 = vrot.slane %v1029, 4
    %v1031 = vmax.f32 %v1029, %v1030
    %v1032 = vrot.slane %v1031, 2
    %v1033 = vmax.f32 %v1031, %v1032
    %v1034 = vrot.slane %v1033, 1
    %v1035 = vmax.f32 %v1033, %v1034
    %v1036 = vsel %vm930, %v929, -inf
    %v1037 = vrot.slane %v1036, 4
    %v1038 = vmax.f32 %v1036, %v1037
    %v1039 = vrot.slane %v1038, 2
    %v1040 = vmax.f32 %v1038, %v1039
    %v1041 = vrot.slane %v1040, 1
    %v1042 = vmax.f32 %v1040, %v1041
    %v1043 = vsub.f32 %v914, %v937
    %v1044 = vsub.f32 %v915, %v944
    %v1045 = vsub.f32 %v916, %v951
    %v1046 = vsub.f32 %v917, %v958
    %v1047 = vsub.f32 %v918, %v965
    %v1048 = vsub.f32 %v919, %v972
    %v1049 = vsub.f32 %v920, %v979
    %v1050 = vsub.f32 %v921, %v986
    %v1051 = vsub.f32 %v922, %v993
    %v1052 = vsub.f32 %v923, %v1000
    %v1053 = vsub.f32 %v924, %v1007
    %v1054 = vsub.f32 %v925, %v1014
    %v1055 = vsub.f32 %v926, %v1021
    %v1056 = vsub.f32 %v927, %v1028
    %v1057 = vsub.f32 %v928, %v1035
    %v1058 = vsub.f32 %v929, %v1042
    %v1059 = vmul.f32 %v1043, 1.442695
    %v1060 = vpow.pop %v1059
    %v1061 = vmul.f32 %v1044, 1.442695
    %v1062 = vpow.pop %v1061
    %v1063 = vmul.f32 %v1045, 1.442695
    %v1064 = vpow.pop %v1063
    %v1065 = vmul.f32 %v1046, 1.442695
    %v1066 = vpow.pop %v1065
    %v1067 = vmul.f32 %v1047, 1.442695
    %v1068 = vpow.pop %v1067
    %v1069 = vmul.f32 %v1048, 1.442695
    %v1070 = vpow.pop %v1069
    %v1071 = vmul.f32 %v1049, 1.442695
    %v1072 = vpow.pop %v1071
    %v1073 = vmul.f32 %v1050, 1.442695
    %v1074 = vpow.pop %v1073
    %v1075 = vmul.f32 %v1051, 1.442695
    %v1076 = vpow.pop %v1075
    %v1077 = vmul.f32 %v1052, 1.442695
    %v1078 = vpow.pop %v1077
    %v1079 = vmul.f32 %v1053, 1.442695
    %v1080 = vpow.pop %v1079
    %v1081 = vmul.f32 %v1054, 1.442695
    %v1082 = vpow.pop %v1081
    %v1083 = vmul.f32 %v1055, 1.442695
    %v1084 = vpow.pop %v1083
    %v1085 = vmul.f32 %v1056, 1.442695
    %v1086 = vpow.pop %v1085
    %v1087 = vmul.f32 %v1057, 1.442695
    %v1088 = vpow.pop %v1087
    %v1089 = vmul.f32 %v1058, 1.442695
    %v1090 = vpow.pop %v1089
    %v1091 = vsel %vm930, %v1060, 0.0
    %v1092 = vrot.slane %v1091, 4
    %v1093 = vadd.f32 %v1091, %v1092
    %v1094 = vrot.slane %v1093, 2
    %v1095 = vadd.f32 %v1093, %v1094
    %v1096 = vrot.slane %v1095, 1
    %v1097 = vadd.f32 %v1095, %v1096
    %v1098 = vsel %vm930, %v1062, 0.0
    %v1099 = vrot.slane %v1098, 4
    %v1100 = vadd.f32 %v1098, %v1099
    %v1101 = vrot.slane %v1100, 2
    %v1102 = vadd.f32 %v1100, %v1101
    %v1103 = vrot.slane %v1102, 1
    %v1104 = vadd.f32 %v1102, %v1103
    %v1105 = vsel %vm930, %v1064, 0.0
    %v1106 = vrot.slane %v1105, 4
    %v1107 = vadd.f32 %v1105, %v1106
    %v1108 = vrot.slane %v1107, 2
    %v1109 = vadd.f32 %v1107, %v1108
    %v1110 = vrot.slane %v1109, 1
    %v1111 = vadd.f32 %v1109, %v1110
    %v1112 = vsel %vm930, %v1066, 0.0
    %v1113 = vrot.slane %v1112, 4
    %v1114 = vadd.f32 %v1112, %v1113
    %v1115 = vrot.slane %v1114, 2
    %v1116 = vadd.f32 %v1114, %v1115
    %v1117 = vrot.slane %v1116, 1
    %v1118 = vadd.f32 %v1116, %v1117
    %v1119 = vsel %vm930, %v1068, 0.0
    %v1120 = vrot.slane %v1119, 4
    %v1121 = vadd.f32 %v1119, %v1120
    %v1122 = vrot.slane %v1121, 2
    %v1123 = vadd.f32 %v1121, %v1122
    %v1124 = vrot.slane %v1123, 1
    %v1125 = vadd.f32 %v1123, %v1124
    %v1126 = vsel %vm930, %v1070, 0.0
    %v1127 = vrot.slane %v1126, 4
    %v1128 = vadd.f32 %v1126, %v1127
    %v1129 = vrot.slane %v1128, 2
    %v1130 = vadd.f32 %v1128, %v1129
    %v1131 = vrot.slane %v1130, 1
    %v1132 = vadd.f32 %v1130, %v1131
    %v1133 = vsel %vm930, %v1072, 0.0
    %v1134 = vrot.slane %v1133, 4
    %v1135 = vadd.f32 %v1133, %v1134
    %v1136 = vrot.slane %v1135, 2
    %v1137 = vadd.f32 %v1135, %v1136
    %v1138 = vrot.slane %v1137, 1
    %v1139 = vadd.f32 %v1137, %v1138
    %v1140 = vsel %vm930, %v1074, 0.0
    %v1141 = vrot.slane %v1140, 4
    %v1142 = vadd.f32 %v1140, %v1141
    %v1143 = vrot.slane %v1142, 2
    %v1144 = vadd.f32 %v1142, %v1143
    %v1145 = vrot.slane %v1144, 1
    %v1146 = vadd.f32 %v1144, %v1145
    %v1147 = vsel %vm930, %v1076, 0.0
    %v1148 = vrot.slane %v1147, 4
    %v1149 = vadd.f32 %v1147, %v1148
    %v1150 = vrot.slane %v1149, 2
    %v1151 = vadd.f32 %v1149, %v1150
    %v1152 = vrot.slane %v1151, 1
    %v1153 = vadd.f32 %v1151, %v1152
    %v1154 = vsel %vm930, %v1078, 0.0
    %v1155 = vrot.slane %v1154, 4
    %v1156 = vadd.f32 %v1154, %v1155
    %v1157 = vrot.slane %v1156, 2
    %v1158 = vadd.f32 %v1156, %v1157
    %v1159 = vrot.slane %v1158, 1
    %v1160 = vadd.f32 %v1158, %v1159
    %v1161 = vsel %vm930, %v1080, 0.0
    %v1162 = vrot.slane %v1161, 4
    %v1163 = vadd.f32 %v1161, %v1162
    %v1164 = vrot.slane %v1163, 2
    %v1165 = vadd.f32 %v1163, %v1164
    %v1166 = vrot.slane %v1165, 1
    %v1167 = vadd.f32 %v1165, %v1166
    %v1168 = vsel %vm930, %v1082, 0.0
    %v1169 = vrot.slane %v1168, 4
    %v1170 = vadd.f32 %v1168, %v1169
    %v1171 = vrot.slane %v1170, 2
    %v1172 = vadd.f32 %v1170, %v1171
    %v1173 = vrot.slane %v1172, 1
    %v1174 = vadd.f32 %v1172, %v1173
    %v1175 = vsel %vm930, %v1084, 0.0
    %v1176 = vrot.slane %v1175, 4
    %v1177 = vadd.f32 %v1175, %v1176
    %v1178 = vrot.slane %v1177, 2
    %v1179 = vadd.f32 %v1177, %v1178
    %v1180 = vrot.slane %v1179, 1
    %v1181 = vadd.f32 %v1179, %v1180
    %v1182 = vsel %vm930, %v1086, 0.0
    %v1183 = vrot.slane %v1182, 4
    %v1184 = vadd.f32 %v1182, %v1183
    %v1185 = vrot.slane %v1184, 2
    %v1186 = vadd.f32 %v1184, %v1185
    %v1187 = vrot.slane %v1186, 1
    %v1188 = vadd.f32 %v1186, %v1187
    %v1189 = vsel %vm930, %v1088, 0.0
    %v1190 = vrot.slane %v1189, 4
    %v1191 = vadd.f32 %v1189, %v1190
    %v1192 = vrot.slane %v1191, 2
    %v1193 = vadd.f32 %v1191, %v1192
    %v1194 = vrot.slane %v1193, 1
    %v1195 = vadd.f32 %v1193, %v1194
    %v1196 = vsel %vm930, %v1090, 0.0
    %v1197 = vrot.slane %v1196, 4
    %v1198 = vadd.f32 %v1196, %v1197
    %v1199 = vrot.slane %v1198, 2
    %v1200 = vadd.f32 %v1198, %v1199
    %v1201 = vrot.slane %v1200, 1
    %v1202 = vadd.f32 %v1200, %v1201
    %v1203 = vrcp.pop %v1097
    %v1204 = vmul.f32 %v1060, %v1203
    %v1205 = vrcp.pop %v1104
    %v1206 = vmul.f32 %v1062, %v1205
    %v1207 = vrcp.pop %v1111
    %v1208 = vmul.f32 %v1064, %v1207
    %v1209 = vrcp.pop %v1118
    %v1210 = vmul.f32 %v1066, %v1209
    %v1211 = vrcp.pop %v1125
    %v1212 = vmul.f32 %v1068, %v1211
    %v1213 = vrcp.pop %v1132
    %v1214 = vmul.f32 %v1070, %v1213
    %v1215 = vrcp.pop %v1139
    %v1216 = vmul.f32 %v1072, %v1215
    %v1217 = vrcp.pop %v1146
    %v1218 = vmul.f32 %v1074, %v1217
    %v1219 = vrcp.pop %v1153
    %v1220 = vmul.f32 %v1076, %v1219
    %v1221 = vrcp.pop %v1160
    %v1222 = vmul.f32 %v1078, %v1221
    %v1223 = vrcp.pop %v1167
    %v1224 = vmul.f32 %v1080, %v1223
    %v1225 = vrcp.pop %v1174
    %v1226 = vmul.f32 %v1082, %v1225
    %v1227 = vrcp.pop %v1181
    %v1228 = vmul.f32 %v1084, %v1227
    %v1229 = vrcp.pop %v1188
    %v1230 = vmul.f32 %v1086, %v1229
    %v1231 = vrcp.pop %v1195
    %v1232 = vmul.f32 %v1088, %v1231
    %v1233 = vrcp.pop %v1202
    %v1234 = vmul.f32 %v1090, %v1233
    %v1236 = vsel %vm930, %v1204, 0
    %v1239 = vsel %vm930, %v1206, 0
    %v1242 = vsel %vm930, %v1208, 0
    %v1245 = vsel %vm930, %v1210, 0
    %v1248 = vsel %vm930, %v1212, 0
    %v1251 = vsel %vm930, %v1214, 0
    %v1254 = vsel %vm930, %v1216, 0
    %v1257 = vsel %vm930, %v1218, 0
    %v1260 = vsel %vm930, %v1220, 0
    %v1263 = vsel %vm930, %v1222, 0
    %v1266 = vsel %vm930, %v1224, 0
    %v1269 = vsel %vm930, %v1226, 0
    %v1272 = vsel %vm930, %v1228, 0
    %v1275 = vsel %vm930, %v1230, 0
    %v1278 = vsel %vm930, %v1232, 0
    %v1281 = vsel %vm930, %v1234, 0
    %vm1283 = vcmask 1043456
    %v1285 = vsel %vm1283, %v217, 0
    %1287 = vmatprep.subr.mxu0 0.0
    %1288 = vmatpush1.msra.mxu0 0.0
    %1289 = vmatprep.subr.mxu0 0.0
    %1290 = vmatpush1.msra.mxu0 0.0
    %1291 = vmatprep.subr.mxu0 0.0
    %1292 = vmatpush1.msra.mxu0 0.0
    %1293 = vmatprep.subr.mxu0 0.0
    %1294 = vmatpush1.msra.mxu0 0.0
    %1295 = vmatprep.subr.mxu0 0.0
    %1296 = vmatpush1.msra.mxu0 0.0
    %1297 = vmatprep.subr.mxu0 0.0
    %1298 = vmatpush1.msra.mxu0 0.0
    %1299 = vmatprep.subr.mxu0 0.0
    %1300 = vmatpush1.msra.mxu0 0.0
    %1301 = vmatprep.subr.mxu0 0.0
    %1302 = vmatpush1.msra.mxu0 0.0
    %1303 = vmatprep.subr.mxu0 0.0
    %1304 = vmatpush1.msra.mxu0 0.0
    %1305 = vmatprep.subr.mxu0 0.0
    %1306 = vmatpush1.msra.mxu0 0.0
    %1307 = vmatprep.subr.mxu0 0.0
    %1308 = vmatpush1.msra.mxu0 0.0
    %1309 = vmatprep.subr.mxu0 0.0
    %1310 = vmatpush1.msra.mxu0 0.0
    %1311 = vmatprep.subr.mxu0 0.0
    %1312 = vmatpush1.msra.mxu0 0.0
    %1313 = vmatprep.subr.mxu0 0.0
    %1314 = vmatpush1.msra.mxu0 0.0
    %1315 = vmatprep.subr.mxu0 0.0
    %1316 = vmatpush1.msra.mxu0 0.0
    %1317 = vmatprep.subr.mxu0 0.0
    %1318 = vmatpush1.msra.mxu0 %v1285
    %1319 = vmatprep.subr.mxu0 0.0
    %1320 = vmatpush2.msra.mxu0 0.0
    %1321 = vmatprep.subr.mxu0 0.0
    %1322 = vmatpush2.msra.mxu0 0.0
    %1323 = vmatprep.subr.mxu0 0.0
    %1324 = vmatpush2.msra.mxu0 0.0
    %1325 = vmatprep.subr.mxu0 0.0
    %1326 = vmatpush2.msra.mxu0 0.0
    %1327 = vmatprep.subr.mxu0 0.0
    %1328 = vmatpush2.msra.mxu0 0.0
    %1329 = vmatprep.subr.mxu0 0.0
    %1330 = vmatpush2.msra.mxu0 0.0
    %1331 = vmatprep.subr.mxu0 0.0
    %1332 = vmatpush2.msra.mxu0 0.0
    %1333 = vmatprep.subr.mxu0 0.0
    %1334 = vmatpush2.msra.mxu0 0.0
    %1335 = vmatprep.subr.mxu0 0.0
    %1336 = vmatpush2.msra.mxu0 0.0
    %1337 = vmatprep.subr.mxu0 0.0
    %1338 = vmatpush2.msra.mxu0 0.0
    %1339 = vmatprep.subr.mxu0 0.0
    %1340 = vmatpush2.msra.mxu0 0.0
    %1341 = vmatprep.subr.mxu0 0.0
    %1342 = vmatpush2.msra.mxu0 0.0
    %1343 = vmatprep.subr.mxu0 0.0
    %1344 = vmatpush2.msra.mxu0 0.0
    %1345 = vmatprep.subr.mxu0 0.0
    %1346 = vmatpush2.msra.mxu0 0.0
    %1347 = vmatprep.subr.mxu0 0.0
    %1348 = vmatpush2.msra.mxu0 0.0
    %1349 = vmatprep.subr.mxu0 0.0
    %1350 = vmatpush2.msra.mxu0 0.0
    %1351 = vmatprep.mubr.f32.mxu0 0.0
    %1352 = vmatmul.mubr.f32.gmra.mxu0 %v1236
    %v1353 = vpop.f32.mrf.mxu0
    %v1354 = vadd.f32 0.0, %v1353
    %v1355 = vpop.f32.mrf.mxu0
    %1356 = vmatprep.mubr.f32.mxu0 0.0
    %1357 = vmatmul.mubr.f32.gmra.mxu0 %v1239
    %v1358 = vpop.f32.mrf.mxu0
    %v1359 = vadd.f32 0.0, %v1358
    %v1360 = vpop.f32.mrf.mxu0
    %1361 = vmatprep.mubr.f32.mxu0 0.0
    %1362 = vmatmul.mubr.f32.gmra.mxu0 %v1242
    %v1363 = vpop.f32.mrf.mxu0
    %v1364 = vadd.f32 0.0, %v1363
    %v1365 = vpop.f32.mrf.mxu0
    %1366 = vmatprep.mubr.f32.mxu0 0.0
    %1367 = vmatmul.mubr.f32.gmra.mxu0 %v1245
    %v1368 = vpop.f32.mrf.mxu0
    %v1369 = vadd.f32 0.0, %v1368
    %v1370 = vpop.f32.mrf.mxu0
    %1371 = vmatprep.mubr.f32.mxu0 0.0
    %1372 = vmatmul.mubr.f32.gmra.mxu0 %v1248
    %v1373 = vpop.f32.mrf.mxu0
    %v1374 = vadd.f32 0.0, %v1373
    %v1375 = vpop.f32.mrf.mxu0
    %1376 = vmatprep.mubr.f32.mxu0 0.0
    %1377 = vmatmul.mubr.f32.gmra.mxu0 %v1251
    %v1378 = vpop.f32.mrf.mxu0
    %v1379 = vadd.f32 0.0, %v1378
    %v1380 = vpop.f32.mrf.mxu0
    %1381 = vmatprep.mubr.f32.mxu0 0.0
    %1382 = vmatmul.mubr.f32.gmra.mxu0 %v1254
    %v1383 = vpop.f32.mrf.mxu0
    %v1384 = vadd.f32 0.0, %v1383
    %v1385 = vpop.f32.mrf.mxu0
    %1386 = vmatprep.mubr.f32.mxu0 0.0
    %1387 = vmatmul.mubr.f32.gmra.mxu0 %v1257
    %v1388 = vpop.f32.mrf.mxu0
    %v1389 = vadd.f32 0.0, %v1388
    %v1390 = vpop.f32.mrf.mxu0
    %1391 = vmatprep.mubr.f32.mxu0 0.0
    %1392 = vmatmul.mubr.f32.gmra.mxu0 %v1260
    %v1393 = vpop.f32.mrf.mxu0
    %v1394 = vadd.f32 0.0, %v1393
    %v1395 = vpop.f32.mrf.mxu0
    %1396 = vmatprep.mubr.f32.mxu0 0.0
    %1397 = vmatmul.mubr.f32.gmra.mxu0 %v1263
    %v1398 = vpop.f32.mrf.mxu0
    %v1399 = vadd.f32 0.0, %v1398
    %v1400 = vpop.f32.mrf.mxu0
    %1401 = vmatprep.mubr.f32.mxu0 0.0
    %1402 = vmatmul.mubr.f32.gmra.mxu0 %v1266
    %v1403 = vpop.f32.mrf.mxu0
    %v1404 = vadd.f32 0.0, %v1403
    %v1405 = vpop.f32.mrf.mxu0
    %1406 = vmatprep.mubr.f32.mxu0 0.0
    %1407 = vmatmul.mubr.f32.gmra.mxu0 %v1269
    %v1408 = vpop.f32.mrf.mxu0
    %v1409 = vadd.f32 0.0, %v1408
    %v1410 = vpop.f32.mrf.mxu0
    %1411 = vmatprep.mubr.f32.mxu0 0.0
    %1412 = vmatmul.mubr.f32.gmra.mxu0 %v1272
    %v1413 = vpop.f32.mrf.mxu0
    %v1414 = vadd.f32 0.0, %v1413
    %v1415 = vpop.f32.mrf.mxu0
    %1416 = vmatprep.mubr.f32.mxu0 0.0
    %1417 = vmatmul.mubr.f32.gmra.mxu0 %v1275
    %v1418 = vpop.f32.mrf.mxu0
    %v1419 = vadd.f32 0.0, %v1418
    %v1420 = vpop.f32.mrf.mxu0
    %1421 = vmatprep.mubr.f32.mxu0 0.0
    %1422 = vmatmul.mubr.f32.gmra.mxu0 %v1278
    %v1423 = vpop.f32.mrf.mxu0
    %v1424 = vadd.f32 0.0, %v1423
    %v1425 = vpop.f32.mrf.mxu0
    %1426 = vmatprep.mubr.f32.mxu0 0.0
    %1427 = vmatmul.mubr.f32.gmra.mxu0 %v1281
    %v1428 = vpop.f32.mrf.mxu0
    %v1429 = vadd.f32 0.0, %v1428
    %v1430 = vpop.f32.mrf.mxu0
    %1431 = vdwg.mxu0
    %v1432 = vmul.f32 %v1354, %v491
    %v1433 = vmul.f32 %v1359, %v491
    %v1434 = vmul.f32 %v1364, %v491
    %v1435 = vmul.f32 %v1369, %v491
    %v1436 = vmul.f32 %v1374, %v491
    %v1437 = vmul.f32 %v1379, %v491
    %v1438 = vmul.f32 %v1384, %v491
    %v1439 = vmul.f32 %v1389, %v491
    %v1440 = vmul.f32 %v1394, %v496
    %v1441 = vmul.f32 %v1399, %v496
    %v1442 = vmul.f32 %v1404, %v496
    %v1443 = vmul.f32 %v1409, %v496
    %v1444 = vmul.f32 %v1414, %v496
    %v1445 = vmul.f32 %v1419, %v496
    %v1446 = vmul.f32 %v1424, %v496
    %v1447 = vmul.f32 %v1429, %v496
    %v1448 = vsel %vm134, %v1432, 0.0
    %v1449 = vrot.slane %v1448, 4
    %v1450 = vadd.f32 %v1448, %v1449
    %v1451 = vrot.slane %v1450, 2
    %v1452 = vadd.f32 %v1450, %v1451
    %v1453 = vrot.slane %v1452, 1
    %v1454 = vadd.f32 %v1452, %v1453
    %v1455 = vsel %vm134, %v1433, 0.0
    %v1456 = vrot.slane %v1455, 4
    %v1457 = vadd.f32 %v1455, %v1456
    %v1458 = vrot.slane %v1457, 2
    %v1459 = vadd.f32 %v1457, %v1458
    %v1460 = vrot.slane %v1459, 1
    %v1461 = vadd.f32 %v1459, %v1460
    %v1462 = vsel %vm134, %v1434, 0.0
    %v1463 = vrot.slane %v1462, 4
    %v1464 = vadd.f32 %v1462, %v1463
    %v1465 = vrot.slane %v1464, 2
    %v1466 = vadd.f32 %v1464, %v1465
    %v1467 = vrot.slane %v1466, 1
    %v1468 = vadd.f32 %v1466, %v1467
    %v1469 = vsel %vm134, %v1435, 0.0
    %v1470 = vrot.slane %v1469, 4
    %v1471 = vadd.f32 %v1469, %v1470
    %v1472 = vrot.slane %v1471, 2
    %v1473 = vadd.f32 %v1471, %v1472
    %v1474 = vrot.slane %v1473, 1
    %v1475 = vadd.f32 %v1473, %v1474
    %v1476 = vsel %vm134, %v1436, 0.0
    %v1477 = vrot.slane %v1476, 4
    %v1478 = vadd.f32 %v1476, %v1477
    %v1479 = vrot.slane %v1478, 2
    %v1480 = vadd.f32 %v1478, %v1479
    %v1481 = vrot.slane %v1480, 1
    %v1482 = vadd.f32 %v1480, %v1481
    %v1483 = vsel %vm134, %v1437, 0.0
    %v1484 = vrot.slane %v1483, 4
    %v1485 = vadd.f32 %v1483, %v1484
    %v1486 = vrot.slane %v1485, 2
    %v1487 = vadd.f32 %v1485, %v1486
    %v1488 = vrot.slane %v1487, 1
    %v1489 = vadd.f32 %v1487, %v1488
    %v1490 = vsel %vm134, %v1438, 0.0
    %v1491 = vrot.slane %v1490, 4
    %v1492 = vadd.f32 %v1490, %v1491
    %v1493 = vrot.slane %v1492, 2
    %v1494 = vadd.f32 %v1492, %v1493
    %v1495 = vrot.slane %v1494, 1
    %v1496 = vadd.f32 %v1494, %v1495
    %v1497 = vsel %vm134, %v1439, 0.0
    %v1498 = vrot.slane %v1497, 4
    %v1499 = vadd.f32 %v1497, %v1498
    %v1500 = vrot.slane %v1499, 2
    %v1501 = vadd.f32 %v1499, %v1500
    %v1502 = vrot.slane %v1501, 1
    %v1503 = vadd.f32 %v1501, %v1502
    %v1504 = vsel %vm134, %v1440, 0.0
    %v1505 = vrot.slane %v1504, 4
    %v1506 = vadd.f32 %v1504, %v1505
    %v1507 = vrot.slane %v1506, 2
    %v1508 = vadd.f32 %v1506, %v1507
    %v1509 = vrot.slane %v1508, 1
    %v1510 = vadd.f32 %v1508, %v1509
    %v1511 = vsel %vm134, %v1441, 0.0
    %v1512 = vrot.slane %v1511, 4
    %v1513 = vadd.f32 %v1511, %v1512
    %v1514 = vrot.slane %v1513, 2
    %v1515 = vadd.f32 %v1513, %v1514
    %v1516 = vrot.slane %v1515, 1
    %v1517 = vadd.f32 %v1515, %v1516
    %v1518 = vsel %vm134, %v1442, 0.0
    %v1519 = vrot.slane %v1518, 4
    %v1520 = vadd.f32 %v1518, %v1519
    %v1521 = vrot.slane %v1520, 2
    %v1522 = vadd.f32 %v1520, %v1521
    %v1523 = vrot.slane %v1522, 1
    %v1524 = vadd.f32 %v1522, %v1523
    %v1525 = vsel %vm134, %v1443, 0.0
    %v1526 = vrot.slane %v1525, 4
    %v1527 = vadd.f32 %v1525, %v1526
    %v1528 = vrot.slane %v1527, 2
    %v1529 = vadd.f32 %v1527, %v1528
    %v1530 = vrot.slane %v1529, 1
    %v1531 = vadd.f32 %v1529, %v1530
    %v1532 = vsel %vm134, %v1444, 0.0
    %v1533 = vrot.slane %v1532, 4
    %v1534 = vadd.f32 %v1532, %v1533
    %v1535 = vrot.slane %v1534, 2
    %v1536 = vadd.f32 %v1534, %v1535
    %v1537 = vrot.slane %v1536, 1
    %v1538 = vadd.f32 %v1536, %v1537
    %v1539 = vsel %vm134, %v1445, 0.0
    %v1540 = vrot.slane %v1539, 4
    %v1541 = vadd.f32 %v1539, %v1540
    %v1542 = vrot.slane %v1541, 2
    %v1543 = vadd.f32 %v1541, %v1542
    %v1544 = vrot.slane %v1543, 1
    %v1545 = vadd.f32 %v1543, %v1544
    %v1546 = vsel %vm134, %v1446, 0.0
    %v1547 = vrot.slane %v1546, 4
    %v1548 = vadd.f32 %v1546, %v1547
    %v1549 = vrot.slane %v1548, 2
    %v1550 = vadd.f32 %v1548, %v1549
    %v1551 = vrot.slane %v1550, 1
    %v1552 = vadd.f32 %v1550, %v1551
    %v1553 = vsel %vm134, %v1447, 0.0
    %v1554 = vrot.slane %v1553, 4
    %v1555 = vadd.f32 %v1553, %v1554
    %v1556 = vrot.slane %v1555, 2
    %v1557 = vadd.f32 %v1555, %v1556
    %v1558 = vrot.slane %v1557, 1
    %v1559 = vadd.f32 %v1557, %v1558
    %v1560 = vlaneseq
    %v1561 = vshrl.u32 %v1560, 7
    %v1562 = vsub.s32 0, %v1561
    %v1563 = vrot.slane %v249, %v1562
    %vm1580 = vcmask 1041409
    %v1581 = vsel %vm1580, %v1461, %v1454
    %vm1582 = vcmask 1042434
    %v1583 = vsel %vm1582, %v1468, %v1581
    %vm1584 = vcmask 1043459
    %v1585 = vsel %vm1584, %v1475, %v1583
    %vm1586 = vcmask 1044484
    %v1587 = vsel %vm1586, %v1482, %v1585
    %vm1588 = vcmask 1045509
    %v1589 = vsel %vm1588, %v1489, %v1587
    %vm1590 = vcmask 1046534
    %v1591 = vsel %vm1590, %v1496, %v1589
    %vm1592 = vcmask 1047559
    %v1593 = vsel %vm1592, %v1503, %v1591
    %v1594 = vsel %vm1580, %v1517, %v1510
    %v1595 = vsel %vm1582, %v1524, %v1594
    %v1596 = vsel %vm1584, %v1531, %v1595
    %v1597 = vsel %vm1586, %v1538, %v1596
    %v1598 = vsel %vm1588, %v1545, %v1597
    %v1599 = vsel %vm1590, %v1552, %v1598
    %v1600 = vsel %vm1592, %v1559, %v1599
    %v1601 = vsel %vm134, %v1593, 0
    %v1603 = vsel %vm134, %v1600, 0
    %1605 = vmatprep.subr.mxu0 0.0
    %1606 = vmatpush1.msra.mxu0 0.0
    %1607 = vmatprep.subr.mxu0 0.0
    %1608 = vmatpush1.msra.mxu0 0.0
    %1609 = vmatprep.subr.mxu0 0.0
    %1610 = vmatpush1.msra.mxu0 0.0
    %1611 = vmatprep.subr.mxu0 0.0
    %1612 = vmatpush1.msra.mxu0 0.0
    %1613 = vmatprep.subr.mxu0 0.0
    %1614 = vmatpush1.msra.mxu0 0.0
    %1615 = vmatprep.subr.mxu0 0.0
    %1616 = vmatpush1.msra.mxu0 0.0
    %1617 = vmatprep.subr.mxu0 0.0
    %1618 = vmatpush1.msra.mxu0 0.0
    %1619 = vmatprep.subr.mxu0 0.0
    %1620 = vmatpush1.msra.mxu0 0.0
    %1621 = vmatprep.subr.mxu0 0.0
    %1622 = vmatpush1.msra.mxu0 0.0
    %1623 = vmatprep.subr.mxu0 0.0
    %1624 = vmatpush1.msra.mxu0 0.0
    %1625 = vmatprep.subr.mxu0 0.0
    %1626 = vmatpush1.msra.mxu0 0.0
    %1627 = vmatprep.subr.mxu0 0.0
    %1628 = vmatpush1.msra.mxu0 0.0
    %1629 = vmatprep.subr.mxu0 0.0
    %1630 = vmatpush1.msra.mxu0 %v233
    %1631 = vmatprep.subr.mxu0 0.0
    %1632 = vmatpush1.msra.mxu0 %v232
    %1633 = vmatprep.subr.mxu0 0.0
    %1634 = vmatpush1.msra.mxu0 %v231
    %1635 = vmatprep.subr.mxu0 0.0
    %1636 = vmatpush1.msra.mxu0 %v230
    %1637 = vmatprep.subr.mxu0 0.0
    %1638 = vmatpush2.msra.mxu0 0.0
    %1639 = vmatprep.subr.mxu0 0.0
    %1640 = vmatpush2.msra.mxu0 0.0
    %1641 = vmatprep.subr.mxu0 0.0
    %1642 = vmatpush2.msra.mxu0 0.0
    %1643 = vmatprep.subr.mxu0 0.0
    %1644 = vmatpush2.msra.mxu0 0.0
    %1645 = vmatprep.subr.mxu0 0.0
    %1646 = vmatpush2.msra.mxu0 0.0
    %1647 = vmatprep.subr.mxu0 0.0
    %1648 = vmatpush2.msra.mxu0 0.0
    %1649 = vmatprep.subr.mxu0 0.0
    %1650 = vmatpush2.msra.mxu0 0.0
    %1651 = vmatprep.subr.mxu0 0.0
    %1652 = vmatpush2.msra.mxu0 0.0
    %1653 = vmatprep.subr.mxu0 0.0
    %1654 = vmatpush2.msra.mxu0 0.0
    %1655 = vmatprep.subr.mxu0 0.0
    %1656 = vmatpush2.msra.mxu0 0.0
    %1657 = vmatprep.subr.mxu0 0.0
    %1658 = vmatpush2.msra.mxu0 0.0
    %1659 = vmatprep.subr.mxu0 0.0
    %1660 = vmatpush2.msra.mxu0 0.0
    %1661 = vmatprep.subr.mxu0 0.0
    %1662 = vmatpush2.msra.mxu0 0.0
    %1663 = vmatprep.subr.mxu0 0.0
    %1664 = vmatpush2.msra.mxu0 0.0
    %1665 = vmatprep.subr.mxu0 0.0
    %1666 = vmatpush2.msra.mxu0 0.0
    %1667 = vmatprep.subr.mxu0 0.0
    %1668 = vmatpush2.msra.mxu0 0.0
    %1669 = vmatprep.mubr.f32.mxu0 0.0
    %1670 = vmatmul.mubr.f32.gmra.mxu0 %v1601
    %v1671 = vpop.f32.mrf.mxu0
    %v1672 = vadd.f32 %v1563, %v1671
    %v1673 = vpop.f32.mrf.mxu0
    %1674 = vmatprep.mubr.f32.mxu0 0.0
    %1675 = vmatmul.mubr.f32.gmra.mxu0 %v1603
    %v1676 = vpop.f32.mrf.mxu0
    %v1677 = vadd.f32 %v1563, %v1676
    %v1678 = vpop.f32.mrf.mxu0
    %1679 = vdwg.mxu0
    %v1680 = vadd.f32 %v172, %v1672
    %v1681 = vadd.f32 %v173, %v1677
    %v1682 = vsel %vm134, %v1680, 0.0
    %1683 = vadd.xlane.f32.xlu0 %v1682
    %v1684 = vpop.xlane.xlu0 %1683
    %v1685 = vsel %vm134, %v1681, 0.0
    %1686 = vadd.xlane.f32.xlu0 %v1685
    %v1687 = vpop.xlane.xlu0 %1686
    %v1688 = vmul.f32 %v1684, %v141
    %v1689 = vmul.f32 %v1687, %v141
    %v1690 = vsub.f32 %v1680, %v1688
    %v1691 = vsub.f32 %v1681, %v1689
    %v1692 = vmul.f32 %v1690, %v1690
    %v1693 = vmul.f32 %v1691, %v1691
    %v1694 = vsel %vm134, %v1692, 0.0
    %1695 = vadd.xlane.f32.xlu0 %v1694
    %v1696 = vpop.xlane.xlu0 %1695
    %v1697 = vsel %vm134, %v1693, 0.0
    %1698 = vadd.xlane.f32.xlu0 %v1697
    %v1699 = vpop.xlane.xlu0 %1698
    %v1700 = vmul.f32 %v1696, %v141
    %v1701 = vmul.f32 %v1699, %v141
    %v1702 = vadd.f32 %v1700, 1e-12
    %v1703 = vadd.f32 %v1701, 1e-12
    %v1704 = vrsqrt.pop %v1702
    %v1705 = vrsqrt.pop %v1703
    %v1706 = vmul.f32 %v1690, %v1704
    %v1707 = vmul.f32 %v1691, %v1705
    %v1708 = vlaneseq
    %v1709 = vshrl.u32 %v1708, 7
    %v1710 = vsub.s32 0, %v1709
    %v1711 = vrot.slane %v250, %v1710
    %v1712 = vmul.f32 %v1706, %v1711
    %v1713 = vmul.f32 %v1707, %v1711
    %v1714 = vlaneseq
    %v1715 = vshrl.u32 %v1714, 7
    %v1716 = vsub.s32 0, %v1715
    %v1717 = vrot.slane %v251, %v1716
    %v1718 = vadd.f32 %v1712, %v1717
    %v1719 = vadd.f32 %v1713, %v1717
    %v1720 = vlaneseq
    %v1721 = vshrl.u32 %v1720, 7
    %v1722 = vsub.s32 0, %v1721
    %v1723 = vrot.slane %v252, %v1722
    %v1725 = vsel %vm134, %v1718, 0
    %v1728 = vsel %vm134, %v1719, 0
    %1730 = vmatprep.subr.mxu0 0.0
    %1731 = vmatpush1.msra.mxu0 0.0
    %1732 = vmatprep.subr.mxu0 0.0
    %1733 = vmatpush1.msra.mxu0 0.0
    %1734 = vmatprep.subr.mxu0 0.0
    %1735 = vmatpush1.msra.mxu0 0.0
    %1736 = vmatprep.subr.mxu0 0.0
    %1737 = vmatpush1.msra.mxu0 0.0
    %1738 = vmatprep.subr.mxu0 0.0
    %1739 = vmatpush1.msra.mxu0 0.0
    %1740 = vmatprep.subr.mxu0 0.0
    %1741 = vmatpush1.msra.mxu0 0.0
    %1742 = vmatprep.subr.mxu0 0.0
    %1743 = vmatpush1.msra.mxu0 0.0
    %1744 = vmatprep.subr.mxu0 0.0
    %1745 = vmatpush1.msra.mxu0 0.0
    %1746 = vmatprep.subr.mxu0 0.0
    %1747 = vmatpush1.msra.mxu0 0.0
    %1748 = vmatprep.subr.mxu0 0.0
    %1749 = vmatpush1.msra.mxu0 0.0
    %1750 = vmatprep.subr.mxu0 0.0
    %1751 = vmatpush1.msra.mxu0 0.0
    %1752 = vmatprep.subr.mxu0 0.0
    %1753 = vmatpush1.msra.mxu0 0.0
    %1754 = vmatprep.subr.mxu0 0.0
    %1755 = vmatpush1.msra.mxu0 %v237
    %1756 = vmatprep.subr.mxu0 0.0
    %1757 = vmatpush1.msra.mxu0 %v236
    %1758 = vmatprep.subr.mxu0 0.0
    %1759 = vmatpush1.msra.mxu0 %v235
    %1760 = vmatprep.subr.mxu0 0.0
    %1761 = vmatpush1.msra.mxu0 %v234
    %1762 = vmatprep.subr.mxu0 0.0
    %1763 = vmatpush2.msra.mxu0 0.0
    %1764 = vmatprep.subr.mxu0 0.0
    %1765 = vmatpush2.msra.mxu0 0.0
    %1766 = vmatprep.subr.mxu0 0.0
    %1767 = vmatpush2.msra.mxu0 0.0
    %1768 = vmatprep.subr.mxu0 0.0
    %1769 = vmatpush2.msra.mxu0 0.0
    %1770 = vmatprep.subr.mxu0 0.0
    %1771 = vmatpush2.msra.mxu0 0.0
    %1772 = vmatprep.subr.mxu0 0.0
    %1773 = vmatpush2.msra.mxu0 0.0
    %1774 = vmatprep.subr.mxu0 0.0
    %1775 = vmatpush2.msra.mxu0 0.0
    %1776 = vmatprep.subr.mxu0 0.0
    %1777 = vmatpush2.msra.mxu0 0.0
    %1778 = vmatprep.subr.mxu0 0.0
    %1779 = vmatpush2.msra.mxu0 0.0
    %1780 = vmatprep.subr.mxu0 0.0
    %1781 = vmatpush2.msra.mxu0 0.0
    %1782 = vmatprep.subr.mxu0 0.0
    %1783 = vmatpush2.msra.mxu0 0.0
    %1784 = vmatprep.subr.mxu0 0.0
    %1785 = vmatpush2.msra.mxu0 0.0
    %1786 = vmatprep.subr.mxu0 0.0
    %1787 = vmatpush2.msra.mxu0 0.0
    %1788 = vmatprep.subr.mxu0 0.0
    %1789 = vmatpush2.msra.mxu0 0.0
    %1790 = vmatprep.subr.mxu0 0.0
    %1791 = vmatpush2.msra.mxu0 0.0
    %1792 = vmatprep.subr.mxu0 0.0
    %1793 = vmatpush2.msra.mxu0 0.0
    %1794 = vmatprep.mubr.f32.mxu0 0.0
    %1795 = vmatmul.mubr.f32.gmra.mxu0 %v1725
    %v1796 = vpop.f32.mrf.mxu0
    %v1797 = vadd.f32 %v1723, %v1796
    %v1798 = vpop.f32.mrf.mxu0
    %1799 = vmatprep.mubr.f32.mxu0 0.0
    %1800 = vmatmul.mubr.f32.gmra.mxu0 %v1728
    %v1801 = vpop.f32.mrf.mxu0
    %v1802 = vadd.f32 %v1723, %v1801
    %v1803 = vpop.f32.mrf.mxu0
    %1804 = vdwg.mxu0
    %v1805 = vmul.f32 %v1797, %v1797
    %v1806 = vmul.f32 %v1802, %v1802
    %v1807 = vmul.f32 %v1797, %v1805
    %v1808 = vmul.f32 %v1802, %v1806
    %v1809 = vmul.f32 %v1807, 0.044715
    %v1810 = vmul.f32 %v1808, 0.044715
    %v1811 = vadd.f32 %v1797, %v1809
    %v1812 = vadd.f32 %v1802, %v1810
    %v1813 = vmul.f32 %v1811, 0.7978846
    %v1814 = vmul.f32 %v1812, 0.7978846
    %v1815 = vtanh.pop %v1813
    %v1816 = vtanh.pop %v1814
    %v1817 = vadd.f32 %v1815, 1.0
    %v1818 = vadd.f32 %v1816, 1.0
    %v1819 = vmul.f32 %v1817, 0.5
    %v1820 = vmul.f32 %v1818, 0.5
    %v1821 = vmul.f32 %v1797, %v1819
    %v1822 = vmul.f32 %v1802, %v1820
    %v1823 = vlaneseq
    %v1824 = vshrl.u32 %v1823, 7
    %v1825 = vsub.s32 0, %v1824
    %v1826 = vrot.slane %v253, %v1825
    %vm1827 = vcmask 523264
    %v1829 = vsel %vm1827, %v1821, 0
    %v1832 = vsel %vm1827, %v1822, 0
    %1834 = vmatprep.subr.mxu0 0.0
    %1835 = vmatpush1.msra.mxu0 0.0
    %1836 = vmatprep.subr.mxu0 0.0
    %1837 = vmatpush1.msra.mxu0 0.0
    %1838 = vmatprep.subr.mxu0 0.0
    %1839 = vmatpush1.msra.mxu0 0.0
    %1840 = vmatprep.subr.mxu0 0.0
    %1841 = vmatpush1.msra.mxu0 0.0
    %1842 = vmatprep.subr.mxu0 0.0
    %1843 = vmatpush1.msra.mxu0 0.0
    %1844 = vmatprep.subr.mxu0 0.0
    %1845 = vmatpush1.msra.mxu0 0.0
    %1846 = vmatprep.subr.mxu0 0.0
    %1847 = vmatpush1.msra.mxu0 0.0
    %1848 = vmatprep.subr.mxu0 0.0
    %1849 = vmatpush1.msra.mxu0 0.0
    %1850 = vmatprep.subr.mxu0 0.0
    %1851 = vmatpush1.msra.mxu0 %v245
    %1852 = vmatprep.subr.mxu0 0.0
    %1853 = vmatpush1.msra.mxu0 %v244
    %1854 = vmatprep.subr.mxu0 0.0
    %1855 = vmatpush1.msra.mxu0 %v243
    %1856 = vmatprep.subr.mxu0 0.0
    %1857 = vmatpush1.msra.mxu0 %v242
    %1858 = vmatprep.subr.mxu0 0.0
    %1859 = vmatpush1.msra.mxu0 %v241
    %1860 = vmatprep.subr.mxu0 0.0
    %1861 = vmatpush1.msra.mxu0 %v240
    %1862 = vmatprep.subr.mxu0 0.0
    %1863 = vmatpush1.msra.mxu0 %v239
    %1864 = vmatprep.subr.mxu0 0.0
    %1865 = vmatpush1.msra.mxu0 %v238
    %1866 = vmatprep.subr.mxu0 0.0
    %1867 = vmatpush2.msra.mxu0 0.0
    %1868 = vmatprep.subr.mxu0 0.0
    %1869 = vmatpush2.msra.mxu0 0.0
    %1870 = vmatprep.subr.mxu0 0.0
    %1871 = vmatpush2.msra.mxu0 0.0
    %1872 = vmatprep.subr.mxu0 0.0
    %1873 = vmatpush2.msra.mxu0 0.0
    %1874 = vmatprep.subr.mxu0 0.0
    %1875 = vmatpush2.msra.mxu0 0.0
    %1876 = vmatprep.subr.mxu0 0.0
    %1877 = vmatpush2.msra.mxu0 0.0
    %1878 = vmatprep.subr.mxu0 0.0
    %1879 = vmatpush2.msra.mxu0 0.0
    %1880 = vmatprep.subr.mxu0 0.0
    %1881 = vmatpush2.msra.mxu0 0.0
    %1882 = vmatprep.subr.mxu0 0.0
    %1883 = vmatpush2.msra.mxu0 0.0
    %1884 = vmatprep.subr.mxu0 0.0
    %1885 = vmatpush2.msra.mxu0 0.0
    %1886 = vmatprep.subr.mxu0 0.0
    %1887 = vmatpush2.msra.mxu0 0.0
    %1888 = vmatprep.subr.mxu0 0.0
    %1889 = vmatpush2.msra.mxu0 0.0
    %1890 = vmatprep.subr.mxu0 0.0
    %1891 = vmatpush2.msra.mxu0 0.0
    %1892 = vmatprep.subr.mxu0 0.0
    %1893 = vmatpush2.msra.mxu0 0.0
    %1894 = vmatprep.subr.mxu0 0.0
    %1895 = vmatpush2.msra.mxu0 0.0
    %1896 = vmatprep.subr.mxu0 0.0
    %1897 = vmatpush2.msra.mxu0 0.0
    %1898 = vmatprep.mubr.f32.mxu0 0.0
    %1899 = vmatmul.mubr.f32.gmra.mxu0 %v1829
    %v1900 = vpop.f32.mrf.mxu0
    %v1901 = vadd.f32 %v1826, %v1900
    %v1902 = vpop.f32.mrf.mxu0
    %1903 = vmatprep.mubr.f32.mxu0 0.0
    %1904 = vmatmul.mubr.f32.gmra.mxu0 %v1832
    %v1905 = vpop.f32.mrf.mxu0
    %v1906 = vadd.f32 %v1826, %v1905
    %v1907 = vpop.f32.mrf.mxu0
    %1908 = vdwg.mxu0
    %v1909 = vadd.f32 %v1718, %v1901
    %v1910 = vadd.f32 %v1719, %v1906
    %v1911 = vsel %vm134, %v1909, 0.0
    %1912 = vadd.xlane.f32.xlu0 %v1911
    %v1913 = vpop.xlane.xlu0 %1912
    %v1914 = vsel %vm134, %v1910, 0.0
    %1915 = vadd.xlane.f32.xlu0 %v1914
    %v1916 = vpop.xlane.xlu0 %1915
    %v1917 = vmul.f32 %v1913, %v141
    %v1918 = vmul.f32 %v1916, %v141
    %v1919 = vsub.f32 %v1909, %v1917
    %v1920 = vsub.f32 %v1910, %v1918
    %v1921 = vmul.f32 %v1919, %v1919
    %v1922 = vmul.f32 %v1920, %v1920
    %v1923 = vsel %vm134, %v1921, 0.0
    %1924 = vadd.xlane.f32.xlu0 %v1923
    %v1925 = vpop.xlane.xlu0 %1924
    %v1926 = vsel %vm134, %v1922, 0.0
    %1927 = vadd.xlane.f32.xlu0 %v1926
    %v1928 = vpop.xlane.xlu0 %1927
    %v1929 = vmul.f32 %v1925, %v141
    %v1930 = vmul.f32 %v1928, %v141
    %v1931 = vadd.f32 %v1929, 1e-12
    %v1932 = vadd.f32 %v1930, 1e-12
    %v1933 = vrsqrt.pop %v1931
    %v1934 = vrsqrt.pop %v1932
    %v1935 = vmul.f32 %v1919, %v1933
    %v1936 = vmul.f32 %v1920, %v1934
    %v1937 = vlaneseq
    %v1938 = vshrl.u32 %v1937, 7
    %v1939 = vsub.s32 0, %v1938
    %v1940 = vrot.slane %v254, %v1939
    %v1941 = vmul.f32 %v1935, %v1940
    %v1942 = vmul.f32 %v1936, %v1940
    %v1943 = vlaneseq
    %v1944 = vshrl.u32 %v1943, 7
    %v1945 = vsub.s32 0, %v1944
    %v1946 = vrot.slane %v255, %v1945
    %v1947 = vadd.f32 %v1941, %v1946
    %v1948 = vadd.f32 %v1942, %v1946
    %s1949 = scalar_lea.vmem %s2, 240
    %v1950 = vld [vmem:[%s1949] sm:$0xff]
    %v1951 = vld [vmem:[%s1949 + $0x8] sm:$0xff]
    %v1952 = vld [vmem:[%s1949 + $0x10] sm:$0xff]
    %v1953 = vld [vmem:[%s1949 + $0x18] sm:$0xff]
    %v1954 = vld [vmem:[%s1949 + $0x20] sm:$0xff]
    %v1955 = vld [vmem:[%s1949 + $0x28] sm:$0xff]
    %v1956 = vld [vmem:[%s1949 + $0x30] sm:$0xff]
    %v1957 = vld [vmem:[%s1949 + $0x38] sm:$0xff]
    %v1958 = vld [vmem:[%s1949 + $0x40] sm:$0xff]
    %v1959 = vld [vmem:[%s1949 + $0x48] sm:$0xff]
    %v1960 = vld [vmem:[%s1949 + $0x50] sm:$0xff]
    %v1961 = vld [vmem:[%s1949 + $0x58] sm:$0xff]
    %v1962 = vld [vmem:[%s1949 + $0x60] sm:$0xff]
    %v1963 = vld [vmem:[%s1949 + $0x68] sm:$0xff]
    %v1964 = vld [vmem:[%s1949 + $0x70] sm:$0xff]
    %v1965 = vld [vmem:[%s1949 + $0x78] sm:$0xff]
    %v1966 = vld [vmem:[%s1949 + $0x80] sm:$0xff]
    %v1967 = vld [vmem:[%s1949 + $0x88] sm:$0xff]
    %v1968 = vld [vmem:[%s1949 + $0x90] sm:$0xff]
    %v1969 = vld [vmem:[%s1949 + $0x98] sm:$0xff]
    %v1970 = vld [vmem:[%s1949 + $0xa0] sm:$0xff]
    %v1971 = vld [vmem:[%s1949 + $0xa8] sm:$0xff]
    %v1972 = vld [vmem:[%s1949 + $0xb0] sm:$0xff]
    %v1973 = vld [vmem:[%s1949 + $0xb8] sm:$0xff]
    %v1974 = vld [vmem:[%s1949 + $0xc0] sm:$0xff]
    %v1975 = vld [vmem:[%s1949 + $0xc8] sm:$0xff]
    %v1976 = vld [vmem:[%s1949 + $0xd0] sm:$0xff]
    %v1977 = vld [vmem:[%s1949 + $0xd8] sm:$0xff]
    %v1978 = vld [vmem:[%s1949 + $0xe0] sm:$0x1]
    %v1979 = vld [vmem:[%s1949 + $0xe1] sm:$0x1]
    %v1980 = vld [vmem:[%s1949 + $0xe2] sm:$0x1]
    %v1981 = vld [vmem:[%s1949 + $0xe3] sm:$0x1]
    %v1982 = vld [vmem:[%s1949 + $0xe4] sm:$0x1]
    %v1983 = vld [vmem:[%s1949 + $0xe5] sm:$0x1]
    %v1984 = vld [vmem:[%s1949 + $0xe6] sm:$0x1]
    %v1985 = vld [vmem:[%s1949 + $0xe7] sm:$0x1]
    %v1986 = vld [vmem:[%s1949 + $0xe8] sm:$0x1]
    %v1987 = vld [vmem:[%s1949 + $0xe9] sm:$0x1]
    %v1988 = vlaneseq
    %v1989 = vshrl.u32 %v1988, 7
    %v1990 = vsub.s32 0, %v1989
    %v1991 = vrot.slane %v1978, %v1990
    %v1993 = vsel %vm134, %v1947, 0
    %v1996 = vsel %vm134, %v1948, 0
    %1998 = vmatprep.subr.mxu0 0.0
    %1999 = vmatpush1.msra.mxu0 0.0
    %2000 = vmatprep.subr.mxu0 0.0
    %2001 = vmatpush1.msra.mxu0 0.0
    %2002 = vmatprep.subr.mxu0 0.0
    %2003 = vmatpush1.msra.mxu0 0.0
    %2004 = vmatprep.subr.mxu0 0.0
    %2005 = vmatpush1.msra.mxu0 0.0
    %2006 = vmatprep.subr.mxu0 0.0
    %2007 = vmatpush1.msra.mxu0 0.0
    %2008 = vmatprep.subr.mxu0 0.0
    %2009 = vmatpush1.msra.mxu0 0.0
    %2010 = vmatprep.subr.mxu0 0.0
    %2011 = vmatpush1.msra.mxu0 0.0
    %2012 = vmatprep.subr.mxu0 0.0
    %2013 = vmatpush1.msra.mxu0 0.0
    %2014 = vmatprep.subr.mxu0 0.0
    %2015 = vmatpush1.msra.mxu0 0.0
    %2016 = vmatprep.subr.mxu0 0.0
    %2017 = vmatpush1.msra.mxu0 0.0
    %2018 = vmatprep.subr.mxu0 0.0
    %2019 = vmatpush1.msra.mxu0 0.0
    %2020 = vmatprep.subr.mxu0 0.0
    %2021 = vmatpush1.msra.mxu0 0.0
    %2022 = vmatprep.subr.mxu0 0.0
    %2023 = vmatpush1.msra.mxu0 %v1953
    %2024 = vmatprep.subr.mxu0 0.0
    %2025 = vmatpush1.msra.mxu0 %v1952
    %2026 = vmatprep.subr.mxu0 0.0
    %2027 = vmatpush1.msra.mxu0 %v1951
    %2028 = vmatprep.subr.mxu0 0.0
    %2029 = vmatpush1.msra.mxu0 %v1950
    %2030 = vmatprep.subr.mxu0 0.0
    %2031 = vmatpush2.msra.mxu0 0.0
    %2032 = vmatprep.subr.mxu0 0.0
    %2033 = vmatpush2.msra.mxu0 0.0
    %2034 = vmatprep.subr.mxu0 0.0
    %2035 = vmatpush2.msra.mxu0 0.0
    %2036 = vmatprep.subr.mxu0 0.0
    %2037 = vmatpush2.msra.mxu0 0.0
    %2038 = vmatprep.subr.mxu0 0.0
    %2039 = vmatpush2.msra.mxu0 0.0
    %2040 = vmatprep.subr.mxu0 0.0
    %2041 = vmatpush2.msra.mxu0 0.0
    %2042 = vmatprep.subr.mxu0 0.0
    %2043 = vmatpush2.msra.mxu0 0.0
    %2044 = vmatprep.subr.mxu0 0.0
    %2045 = vmatpush2.msra.mxu0 0.0
    %2046 = vmatprep.subr.mxu0 0.0
    %2047 = vmatpush2.msra.mxu0 0.0
    %2048 = vmatprep.subr.mxu0 0.0
    %2049 = vmatpush2.msra.mxu0 0.0
    %2050 = vmatprep.subr.mxu0 0.0
    %2051 = vmatpush2.msra.mxu0 0.0
    %2052 = vmatprep.subr.mxu0 0.0
    %2053 = vmatpush2.msra.mxu0 0.0
    %2054 = vmatprep.subr.mxu0 0.0
    %2055 = vmatpush2.msra.mxu0 0.0
    %2056 = vmatprep.subr.mxu0 0.0
    %2057 = vmatpush2.msra.mxu0 0.0
    %2058 = vmatprep.subr.mxu0 0.0
    %2059 = vmatpush2.msra.mxu0 0.0
    %2060 = vmatprep.subr.mxu0 0.0
    %2061 = vmatpush2.msra.mxu0 0.0
    %2062 = vmatprep.mubr.f32.mxu0 0.0
    %2063 = vmatmul.mubr.f32.gmra.mxu0 %v1993
    %v2064 = vpop.f32.mrf.mxu0
    %v2065 = vadd.f32 %v1991, %v2064
    %v2066 = vpop.f32.mrf.mxu0
    %2067 = vmatprep.mubr.f32.mxu0 0.0
    %2068 = vmatmul.mubr.f32.gmra.mxu0 %v1996
    %v2069 = vpop.f32.mrf.mxu0
    %v2070 = vadd.f32 %v1991, %v2069
    %v2071 = vpop.f32.mrf.mxu0
    %2072 = vdwg.mxu0
    %v2073 = vlaneseq
    %v2074 = vshrl.u32 %v2073, 7
    %v2075 = vsub.s32 0, %v2074
    %v2076 = vrot.slane %v1979, %v2075
    %2077 = vmatprep.subr.mxu0 0.0
    %2078 = vmatpush1.msra.mxu0 0.0
    %2079 = vmatprep.subr.mxu0 0.0
    %2080 = vmatpush1.msra.mxu0 0.0
    %2081 = vmatprep.subr.mxu0 0.0
    %2082 = vmatpush1.msra.mxu0 0.0
    %2083 = vmatprep.subr.mxu0 0.0
    %2084 = vmatpush1.msra.mxu0 0.0
    %2085 = vmatprep.subr.mxu0 0.0
    %2086 = vmatpush1.msra.mxu0 0.0
    %2087 = vmatprep.subr.mxu0 0.0
    %2088 = vmatpush1.msra.mxu0 0.0
    %2089 = vmatprep.subr.mxu0 0.0
    %2090 = vmatpush1.msra.mxu0 0.0
    %2091 = vmatprep.subr.mxu0 0.0
    %2092 = vmatpush1.msra.mxu0 0.0
    %2093 = vmatprep.subr.mxu0 0.0
    %2094 = vmatpush1.msra.mxu0 0.0
    %2095 = vmatprep.subr.mxu0 0.0
    %2096 = vmatpush1.msra.mxu0 0.0
    %2097 = vmatprep.subr.mxu0 0.0
    %2098 = vmatpush1.msra.mxu0 0.0
    %2099 = vmatprep.subr.mxu0 0.0
    %2100 = vmatpush1.msra.mxu0 0.0
    %2101 = vmatprep.subr.mxu0 0.0
    %2102 = vmatpush1.msra.mxu0 %v1957
    %2103 = vmatprep.subr.mxu0 0.0
    %2104 = vmatpush1.msra.mxu0 %v1956
    %2105 = vmatprep.subr.mxu0 0.0
    %2106 = vmatpush1.msra.mxu0 %v1955
    %2107 = vmatprep.subr.mxu0 0.0
    %2108 = vmatpush1.msra.mxu0 %v1954
    %2109 = vmatprep.subr.mxu0 0.0
    %2110 = vmatpush2.msra.mxu0 0.0
    %2111 = vmatprep.subr.mxu0 0.0
    %2112 = vmatpush2.msra.mxu0 0.0
    %2113 = vmatprep.subr.mxu0 0.0
    %2114 = vmatpush2.msra.mxu0 0.0
    %2115 = vmatprep.subr.mxu0 0.0
    %2116 = vmatpush2.msra.mxu0 0.0
    %2117 = vmatprep.subr.mxu0 0.0
    %2118 = vmatpush2.msra.mxu0 0.0
    %2119 = vmatprep.subr.mxu0 0.0
    %2120 = vmatpush2.msra.mxu0 0.0
    %2121 = vmatprep.subr.mxu0 0.0
    %2122 = vmatpush2.msra.mxu0 0.0
    %2123 = vmatprep.subr.mxu0 0.0
    %2124 = vmatpush2.msra.mxu0 0.0
    %2125 = vmatprep.subr.mxu0 0.0
    %2126 = vmatpush2.msra.mxu0 0.0
    %2127 = vmatprep.subr.mxu0 0.0
    %2128 = vmatpush2.msra.mxu0 0.0
    %2129 = vmatprep.subr.mxu0 0.0
    %2130 = vmatpush2.msra.mxu0 0.0
    %2131 = vmatprep.subr.mxu0 0.0
    %2132 = vmatpush2.msra.mxu0 0.0
    %2133 = vmatprep.subr.mxu0 0.0
    %2134 = vmatpush2.msra.mxu0 0.0
    %2135 = vmatprep.subr.mxu0 0.0
    %2136 = vmatpush2.msra.mxu0 0.0
    %2137 = vmatprep.subr.mxu0 0.0
    %2138 = vmatpush2.msra.mxu0 0.0
    %2139 = vmatprep.subr.mxu0 0.0
    %2140 = vmatpush2.msra.mxu0 0.0
    %2141 = vmatprep.mubr.f32.mxu0 0.0
    %2142 = vmatmul.mubr.f32.gmra.mxu0 %v1993
    %v2143 = vpop.f32.mrf.mxu0
    %v2144 = vadd.f32 %v2076, %v2143
    %v2145 = vpop.f32.mrf.mxu0
    %2146 = vmatprep.mubr.f32.mxu0 0.0
    %2147 = vmatmul.mubr.f32.gmra.mxu0 %v1996
    %v2148 = vpop.f32.mrf.mxu0
    %v2149 = vadd.f32 %v2076, %v2148
    %v2150 = vpop.f32.mrf.mxu0
    %2151 = vdwg.mxu0
    %v2152 = vlaneseq
    %v2153 = vshrl.u32 %v2152, 7
    %v2154 = vsub.s32 0, %v2153
    %v2155 = vrot.slane %v1980, %v2154
    %2156 = vmatprep.subr.mxu0 0.0
    %2157 = vmatpush1.msra.mxu0 0.0
    %2158 = vmatprep.subr.mxu0 0.0
    %2159 = vmatpush1.msra.mxu0 0.0
    %2160 = vmatprep.subr.mxu0 0.0
    %2161 = vmatpush1.msra.mxu0 0.0
    %2162 = vmatprep.subr.mxu0 0.0
    %2163 = vmatpush1.msra.mxu0 0.0
    %2164 = vmatprep.subr.mxu0 0.0
    %2165 = vmatpush1.msra.mxu0 0.0
    %2166 = vmatprep.subr.mxu0 0.0
    %2167 = vmatpush1.msra.mxu0 0.0
    %2168 = vmatprep.subr.mxu0 0.0
    %2169 = vmatpush1.msra.mxu0 0.0
    %2170 = vmatprep.subr.mxu0 0.0
    %2171 = vmatpush1.msra.mxu0 0.0
    %2172 = vmatprep.subr.mxu0 0.0
    %2173 = vmatpush1.msra.mxu0 0.0
    %2174 = vmatprep.subr.mxu0 0.0
    %2175 = vmatpush1.msra.mxu0 0.0
    %2176 = vmatprep.subr.mxu0 0.0
    %2177 = vmatpush1.msra.mxu0 0.0
    %2178 = vmatprep.subr.mxu0 0.0
    %2179 = vmatpush1.msra.mxu0 0.0
    %2180 = vmatprep.subr.mxu0 0.0
    %2181 = vmatpush1.msra.mxu0 %v1961
    %2182 = vmatprep.subr.mxu0 0.0
    %2183 = vmatpush1.msra.mxu0 %v1960
    %2184 = vmatprep.subr.mxu0 0.0
    %2185 = vmatpush1.msra.mxu0 %v1959
    %2186 = vmatprep.subr.mxu0 0.0
    %2187 = vmatpush1.msra.mxu0 %v1958
    %2188 = vmatprep.subr.mxu0 0.0
    %2189 = vmatpush2.msra.mxu0 0.0
    %2190 = vmatprep.subr.mxu0 0.0
    %2191 = vmatpush2.msra.mxu0 0.0
    %2192 = vmatprep.subr.mxu0 0.0
    %2193 = vmatpush2.msra.mxu0 0.0
    %2194 = vmatprep.subr.mxu0 0.0
    %2195 = vmatpush2.msra.mxu0 0.0
    %2196 = vmatprep.subr.mxu0 0.0
    %2197 = vmatpush2.msra.mxu0 0.0
    %2198 = vmatprep.subr.mxu0 0.0
    %2199 = vmatpush2.msra.mxu0 0.0
    %2200 = vmatprep.subr.mxu0 0.0
    %2201 = vmatpush2.msra.mxu0 0.0
    %2202 = vmatprep.subr.mxu0 0.0
    %2203 = vmatpush2.msra.mxu0 0.0
    %2204 = vmatprep.subr.mxu0 0.0
    %2205 = vmatpush2.msra.mxu0 0.0
    %2206 = vmatprep.subr.mxu0 0.0
    %2207 = vmatpush2.msra.mxu0 0.0
    %2208 = vmatprep.subr.mxu0 0.0
    %2209 = vmatpush2.msra.mxu0 0.0
    %2210 = vmatprep.subr.mxu0 0.0
    %2211 = vmatpush2.msra.mxu0 0.0
    %2212 = vmatprep.subr.mxu0 0.0
    %2213 = vmatpush2.msra.mxu0 0.0
    %2214 = vmatprep.subr.mxu0 0.0
    %2215 = vmatpush2.msra.mxu0 0.0
    %2216 = vmatprep.subr.mxu0 0.0
    %2217 = vmatpush2.msra.mxu0 0.0
    %2218 = vmatprep.subr.mxu0 0.0
    %2219 = vmatpush2.msra.mxu0 0.0
    %2220 = vmatprep.mubr.f32.mxu0 0.0
    %2221 = vmatmul.mubr.f32.gmra.mxu0 %v1993
    %v2222 = vpop.f32.mrf.mxu0
    %v2223 = vadd.f32 %v2155, %v2222
    %v2224 = vpop.f32.mrf.mxu0
    %2225 = vmatprep.mubr.f32.mxu0 0.0
    %2226 = vmatmul.mubr.f32.gmra.mxu0 %v1996
    %v2227 = vpop.f32.mrf.mxu0
    %v2228 = vadd.f32 %v2155, %v2227
    %v2229 = vpop.f32.mrf.mxu0
    %2230 = vdwg.mxu0
    %v2233 = vcombine.high %v2065, %v2065
    %v2235 = vunpack.c.l.s4 1966171168
    %v2236 = vunpack.c.0.s8 %v2235
    %v2237 = vlaneseq
    %v2238 = vshrl.u32 %v2237, 7
    %v2239 = vsub.s32 %v2236, %v2238
    %v2240 = vrot.slane %v2065, %v2239
    %v2242 = vunpack.c.l.s4 1966171168
    %v2243 = vunpack.c.0.s8 %v2242
    %v2244 = vlaneseq
    %v2245 = vshrl.u32 %v2244, 7
    %v2246 = vsub.s32 %v2243, %v2245
    %v2247 = vrot.slane %v2233, %v2246
    %v2248 = vcombine.high %v2240, %v2240
    %v2249 = vcombine.high %v2247, %v2247
    %v2251 = vunpack.c.l.s4 1966171168
    %v2252 = vunpack.c.0.s8 %v2251
    %v2253 = vlaneseq
    %v2254 = vshrl.u32 %v2253, 7
    %v2255 = vsub.s32 %v2252, %v2254
    %v2256 = vrot.slane %v2240, %v2255
    %v2258 = vunpack.c.l.s4 1966171168
    %v2259 = vunpack.c.0.s8 %v2258
    %v2260 = vlaneseq
    %v2261 = vshrl.u32 %v2260, 7
    %v2262 = vsub.s32 %v2259, %v2261
    %v2263 = vrot.slane %v2247, %v2262
    %v2265 = vunpack.c.l.s4 1966171168
    %v2266 = vunpack.c.0.s8 %v2265
    %v2267 = vlaneseq
    %v2268 = vshrl.u32 %v2267, 7
    %v2269 = vsub.s32 %v2266, %v2268
    %v2270 = vrot.slane %v2248, %v2269
    %v2272 = vunpack.c.l.s4 1966171168
    %v2273 = vunpack.c.0.s8 %v2272
    %v2274 = vlaneseq
    %v2275 = vshrl.u32 %v2274, 7
    %v2276 = vsub.s32 %v2273, %v2275
    %v2277 = vrot.slane %v2249, %v2276
    %v2278 = vcombine.high %v2256, %v2256
    %v2279 = vcombine.high %v2263, %v2263
    %v2280 = vcombine.high %v2270, %v2270
    %v2281 = vcombine.high %v2277, %v2277
    %v2282 = vcombine.high %v2070, %v2070
    %v2284 = vunpack.c.l.s4 1966171168
    %v2285 = vunpack.c.0.s8 %v2284
    %v2286 = vlaneseq
    %v2287 = vshrl.u32 %v2286, 7
    %v2288 = vsub.s32 %v2285, %v2287
    %v2289 = vrot.slane %v2070, %v2288
    %v2291 = vunpack.c.l.s4 1966171168
    %v2292 = vunpack.c.0.s8 %v2291
    %v2293 = vlaneseq
    %v2294 = vshrl.u32 %v2293, 7
    %v2295 = vsub.s32 %v2292, %v2294
    %v2296 = vrot.slane %v2282, %v2295
    %v2297 = vcombine.high %v2289, %v2289
    %v2298 = vcombine.high %v2296, %v2296
    %v2300 = vunpack.c.l.s4 1966171168
    %v2301 = vunpack.c.0.s8 %v2300
    %v2302 = vlaneseq
    %v2303 = vshrl.u32 %v2302, 7
    %v2304 = vsub.s32 %v2301, %v2303
    %v2305 = vrot.slane %v2289, %v2304
    %v2307 = vunpack.c.l.s4 1966171168
    %v2308 = vunpack.c.0.s8 %v2307
    %v2309 = vlaneseq
    %v2310 = vshrl.u32 %v2309, 7
    %v2311 = vsub.s32 %v2308, %v2310
    %v2312 = vrot.slane %v2296, %v2311
    %v2314 = vunpack.c.l.s4 1966171168
    %v2315 = vunpack.c.0.s8 %v2314
    %v2316 = vlaneseq
    %v2317 = vshrl.u32 %v2316, 7
    %v2318 = vsub.s32 %v2315, %v2317
    %v2319 = vrot.slane %v2297, %v2318
    %v2321 = vunpack.c.l.s4 1966171168
    %v2322 = vunpack.c.0.s8 %v2321
    %v2323 = vlaneseq
    %v2324 = vshrl.u32 %v2323, 7
    %v2325 = vsub.s32 %v2322, %v2324
    %v2326 = vrot.slane %v2298, %v2325
    %v2327 = vcombine.high %v2305, %v2305
    %v2328 = vcombine.high %v2312, %v2312
    %v2329 = vcombine.high %v2319, %v2319
    %v2330 = vcombine.high %v2326, %v2326
    %v2331 = vlaneseq
    %v2332 = vshrl.u32 %v2331, 7
    %v2333 = vsub.s32 0, %v2332
    %v2334 = vrot.slane %v2256, %v2333
    %v2335 = vlaneseq
    %v2336 = vshrl.u32 %v2335, 7
    %v2337 = vsub.s32 0, %v2336
    %v2338 = vrot.slane %v2270, %v2337
    %v2339 = vlaneseq
    %v2340 = vshrl.u32 %v2339, 7
    %v2341 = vsub.s32 0, %v2340
    %v2342 = vrot.slane %v2278, %v2341
    %v2343 = vlaneseq
    %v2344 = vshrl.u32 %v2343, 7
    %v2345 = vsub.s32 0, %v2344
    %v2346 = vrot.slane %v2280, %v2345
    %v2347 = vlaneseq
    %v2348 = vshrl.u32 %v2347, 7
    %v2349 = vsub.s32 0, %v2348
    %v2350 = vrot.slane %v2263, %v2349
    %v2351 = vlaneseq
    %v2352 = vshrl.u32 %v2351, 7
    %v2353 = vsub.s32 0, %v2352
    %v2354 = vrot.slane %v2277, %v2353
    %v2355 = vlaneseq
    %v2356 = vshrl.u32 %v2355, 7
    %v2357 = vsub.s32 0, %v2356
    %v2358 = vrot.slane %v2279, %v2357
    %v2359 = vlaneseq
    %v2360 = vshrl.u32 %v2359, 7
    %v2361 = vsub.s32 0, %v2360
    %v2362 = vrot.slane %v2281, %v2361
    %v2363 = vlaneseq
    %v2364 = vshrl.u32 %v2363, 7
    %v2365 = vsub.s32 0, %v2364
    %v2366 = vrot.slane %v2305, %v2365
    %v2367 = vlaneseq
    %v2368 = vshrl.u32 %v2367, 7
    %v2369 = vsub.s32 0, %v2368
    %v2370 = vrot.slane %v2319, %v2369
    %v2371 = vlaneseq
    %v2372 = vshrl.u32 %v2371, 7
    %v2373 = vsub.s32 0, %v2372
    %v2374 = vrot.slane %v2327, %v2373
    %v2375 = vlaneseq
    %v2376 = vshrl.u32 %v2375, 7
    %v2377 = vsub.s32 0, %v2376
    %v2378 = vrot.slane %v2329, %v2377
    %v2379 = vlaneseq
    %v2380 = vshrl.u32 %v2379, 7
    %v2381 = vsub.s32 0, %v2380
    %v2382 = vrot.slane %v2312, %v2381
    %v2383 = vlaneseq
    %v2384 = vshrl.u32 %v2383, 7
    %v2385 = vsub.s32 0, %v2384
    %v2386 = vrot.slane %v2326, %v2385
    %v2387 = vlaneseq
    %v2388 = vshrl.u32 %v2387, 7
    %v2389 = vsub.s32 0, %v2388
    %v2390 = vrot.slane %v2328, %v2389
    %v2391 = vlaneseq
    %v2392 = vshrl.u32 %v2391, 7
    %v2393 = vsub.s32 0, %v2392
    %v2394 = vrot.slane %v2330, %v2393
    %v2411 = vmul.f32 %v2334, %v2144
    %v2412 = vmul.f32 %v2338, %v2144
    %v2413 = vmul.f32 %v2342, %v2144
    %v2414 = vmul.f32 %v2346, %v2144
    %v2415 = vmul.f32 %v2350, %v2144
    %v2416 = vmul.f32 %v2354, %v2144
    %v2417 = vmul.f32 %v2358, %v2144
    %v2418 = vmul.f32 %v2362, %v2144
    %v2419 = vmul.f32 %v2366, %v2149
    %v2420 = vmul.f32 %v2370, %v2149
    %v2421 = vmul.f32 %v2374, %v2149
    %v2422 = vmul.f32 %v2378, %v2149
    %v2423 = vmul.f32 %v2382, %v2149
    %v2424 = vmul.f32 %v2386, %v2149
    %v2425 = vmul.f32 %v2390, %v2149
    %v2426 = vmul.f32 %v2394, %v2149
    %v2428 = vsel %vm134, %v2411, 0
    %v2431 = vsel %vm134, %v2412, 0
    %v2434 = vsel %vm134, %v2413, 0
    %v2437 = vsel %vm134, %v2414, 0
    %v2440 = vsel %vm134, %v2415, 0
    %v2443 = vsel %vm134, %v2416, 0
    %v2446 = vsel %vm134, %v2417, 0
    %v2449 = vsel %vm134, %v2418, 0
    %v2452 = vsel %vm134, %v2419, 0
    %v2455 = vsel %vm134, %v2420, 0
    %v2458 = vsel %vm134, %v2421, 0
    %v2461 = vsel %vm134, %v2422, 0
    %v2464 = vsel %vm134, %v2423, 0
    %v2467 = vsel %vm134, %v2424, 0
    %v2470 = vsel %vm134, %v2425, 0
    %v2473 = vsel %vm134, %v2426, 0
    %2475 = vmatprep.subr.mxu0 0.0
    %2476 = vmatpush1.msra.mxu0 0.0
    %2477 = vmatprep.subr.mxu0 0.0
    %2478 = vmatpush1.msra.mxu0 0.0
    %2479 = vmatprep.subr.mxu0 0.0
    %2480 = vmatpush1.msra.mxu0 0.0
    %2481 = vmatprep.subr.mxu0 0.0
    %2482 = vmatpush1.msra.mxu0 0.0
    %2483 = vmatprep.subr.mxu0 0.0
    %2484 = vmatpush1.msra.mxu0 0.0
    %2485 = vmatprep.subr.mxu0 0.0
    %2486 = vmatpush1.msra.mxu0 0.0
    %2487 = vmatprep.subr.mxu0 0.0
    %2488 = vmatpush1.msra.mxu0 0.0
    %2489 = vmatprep.subr.mxu0 0.0
    %2490 = vmatpush1.msra.mxu0 0.0
    %2491 = vmatprep.subr.mxu0 0.0
    %2492 = vmatpush1.msra.mxu0 0.0
    %2493 = vmatprep.subr.mxu0 0.0
    %2494 = vmatpush1.msra.mxu0 0.0
    %2495 = vmatprep.subr.mxu0 0.0
    %2496 = vmatpush1.msra.mxu0 0.0
    %2497 = vmatprep.subr.mxu0 0.0
    %2498 = vmatpush1.msra.mxu0 0.0
    %2499 = vmatprep.subr.mxu0 0.0
    %2500 = vmatpush1.msra.mxu0 %v209
    %2501 = vmatprep.subr.mxu0 0.0
    %2502 = vmatpush1.msra.mxu0 %v208
    %2503 = vmatprep.subr.mxu0 0.0
    %2504 = vmatpush1.msra.mxu0 %v207
    %2505 = vmatprep.subr.mxu0 0.0
    %2506 = vmatpush1.msra.mxu0 %v206
    %2507 = vmatprep.subr.mxu0 0.0
    %2508 = vmatpush2.msra.mxu0 0.0
    %2509 = vmatprep.subr.mxu0 0.0
    %2510 = vmatpush2.msra.mxu0 0.0
    %2511 = vmatprep.subr.mxu0 0.0
    %2512 = vmatpush2.msra.mxu0 0.0
    %2513 = vmatprep.subr.mxu0 0.0
    %2514 = vmatpush2.msra.mxu0 0.0
    %2515 = vmatprep.subr.mxu0 0.0
    %2516 = vmatpush2.msra.mxu0 0.0
    %2517 = vmatprep.subr.mxu0 0.0
    %2518 = vmatpush2.msra.mxu0 0.0
    %2519 = vmatprep.subr.mxu0 0.0
    %2520 = vmatpush2.msra.mxu0 0.0
    %2521 = vmatprep.subr.mxu0 0.0
    %2522 = vmatpush2.msra.mxu0 0.0
    %2523 = vmatprep.subr.mxu0 0.0
    %2524 = vmatpush2.msra.mxu0 0.0
    %2525 = vmatprep.subr.mxu0 0.0
    %2526 = vmatpush2.msra.mxu0 0.0
    %2527 = vmatprep.subr.mxu0 0.0
    %2528 = vmatpush2.msra.mxu0 0.0
    %2529 = vmatprep.subr.mxu0 0.0
    %2530 = vmatpush2.msra.mxu0 0.0
    %2531 = vmatprep.subr.mxu0 0.0
    %2532 = vmatpush2.msra.mxu0 0.0
    %2533 = vmatprep.subr.mxu0 0.0
    %2534 = vmatpush2.msra.mxu0 0.0
    %2535 = vmatprep.subr.mxu0 0.0
    %2536 = vmatpush2.msra.mxu0 0.0
    %2537 = vmatprep.subr.mxu0 0.0
    %2538 = vmatpush2.msra.mxu0 0.0
    %2539 = vmatprep.mubr.f32.mxu0 0.0
    %2540 = vmatmul.mubr.f32.gmra.mxu0 %v2428
    %v2541 = vpop.f32.mrf.mxu0
    %v2542 = vadd.f32 0.0, %v2541
    %v2543 = vpop.f32.mrf.mxu0
    %2544 = vmatprep.mubr.f32.mxu0 0.0
    %2545 = vmatmul.mubr.f32.gmra.mxu0 %v2431
    %v2546 = vpop.f32.mrf.mxu0
    %v2547 = vadd.f32 0.0, %v2546
    %v2548 = vpop.f32.mrf.mxu0
    %2549 = vmatprep.mubr.f32.mxu0 0.0
    %2550 = vmatmul.mubr.f32.gmra.mxu0 %v2434
    %v2551 = vpop.f32.mrf.mxu0
    %v2552 = vadd.f32 0.0, %v2551
    %v2553 = vpop.f32.mrf.mxu0
    %2554 = vmatprep.mubr.f32.mxu0 0.0
    %2555 = vmatmul.mubr.f32.gmra.mxu0 %v2437
    %v2556 = vpop.f32.mrf.mxu0
    %v2557 = vadd.f32 0.0, %v2556
    %v2558 = vpop.f32.mrf.mxu0
    %2559 = vmatprep.mubr.f32.mxu0 0.0
    %2560 = vmatmul.mubr.f32.gmra.mxu0 %v2440
    %v2561 = vpop.f32.mrf.mxu0
    %v2562 = vadd.f32 0.0, %v2561
    %v2563 = vpop.f32.mrf.mxu0
    %2564 = vmatprep.mubr.f32.mxu0 0.0
    %2565 = vmatmul.mubr.f32.gmra.mxu0 %v2443
    %v2566 = vpop.f32.mrf.mxu0
    %v2567 = vadd.f32 0.0, %v2566
    %v2568 = vpop.f32.mrf.mxu0
    %2569 = vmatprep.mubr.f32.mxu0 0.0
    %2570 = vmatmul.mubr.f32.gmra.mxu0 %v2446
    %v2571 = vpop.f32.mrf.mxu0
    %v2572 = vadd.f32 0.0, %v2571
    %v2573 = vpop.f32.mrf.mxu0
    %2574 = vmatprep.mubr.f32.mxu0 0.0
    %2575 = vmatmul.mubr.f32.gmra.mxu0 %v2449
    %v2576 = vpop.f32.mrf.mxu0
    %v2577 = vadd.f32 0.0, %v2576
    %v2578 = vpop.f32.mrf.mxu0
    %2579 = vmatprep.mubr.f32.mxu0 0.0
    %2580 = vmatmul.mubr.f32.gmra.mxu0 %v2452
    %v2581 = vpop.f32.mrf.mxu0
    %v2582 = vadd.f32 0.0, %v2581
    %v2583 = vpop.f32.mrf.mxu0
    %2584 = vmatprep.mubr.f32.mxu0 0.0
    %2585 = vmatmul.mubr.f32.gmra.mxu0 %v2455
    %v2586 = vpop.f32.mrf.mxu0
    %v2587 = vadd.f32 0.0, %v2586
    %v2588 = vpop.f32.mrf.mxu0
    %2589 = vmatprep.mubr.f32.mxu0 0.0
    %2590 = vmatmul.mubr.f32.gmra.mxu0 %v2458
    %v2591 = vpop.f32.mrf.mxu0
    %v2592 = vadd.f32 0.0, %v2591
    %v2593 = vpop.f32.mrf.mxu0
    %2594 = vmatprep.mubr.f32.mxu0 0.0
    %2595 = vmatmul.mubr.f32.gmra.mxu0 %v2461
    %v2596 = vpop.f32.mrf.mxu0
    %v2597 = vadd.f32 0.0, %v2596
    %v2598 = vpop.f32.mrf.mxu0
    %2599 = vmatprep.mubr.f32.mxu0 0.0
    %2600 = vmatmul.mubr.f32.gmra.mxu0 %v2464
    %v2601 = vpop.f32.mrf.mxu0
    %v2602 = vadd.f32 0.0, %v2601
    %v2603 = vpop.f32.mrf.mxu0
    %2604 = vmatprep.mubr.f32.mxu0 0.0
    %2605 = vmatmul.mubr.f32.gmra.mxu0 %v2467
    %v2606 = vpop.f32.mrf.mxu0
    %v2607 = vadd.f32 0.0, %v2606
    %v2608 = vpop.f32.mrf.mxu0
    %2609 = vmatprep.mubr.f32.mxu0 0.0
    %2610 = vmatmul.mubr.f32.gmra.mxu0 %v2470
    %v2611 = vpop.f32.mrf.mxu0
    %v2612 = vadd.f32 0.0, %v2611
    %v2613 = vpop.f32.mrf.mxu0
    %2614 = vmatprep.mubr.f32.mxu0 0.0
    %2615 = vmatmul.mubr.f32.gmra.mxu0 %v2473
    %v2616 = vpop.f32.mrf.mxu0
    %v2617 = vadd.f32 0.0, %v2616
    %v2618 = vpop.f32.mrf.mxu0
    %2619 = vdwg.mxu0
    %v2620 = vmul.f32 %v2542, 0.35355338
    %v2621 = vmul.f32 %v2547, 0.35355338
    %v2622 = vmul.f32 %v2552, 0.35355338
    %v2623 = vmul.f32 %v2557, 0.35355338
    %v2624 = vmul.f32 %v2562, 0.35355338
    %v2625 = vmul.f32 %v2567, 0.35355338
    %v2626 = vmul.f32 %v2572, 0.35355338
    %v2627 = vmul.f32 %v2577, 0.35355338
    %v2628 = vmul.f32 %v2582, 0.35355338
    %v2629 = vmul.f32 %v2587, 0.35355338
    %v2630 = vmul.f32 %v2592, 0.35355338
    %v2631 = vmul.f32 %v2597, 0.35355338
    %v2632 = vmul.f32 %v2602, 0.35355338
    %v2633 = vmul.f32 %v2607, 0.35355338
    %v2634 = vmul.f32 %v2612, 0.35355338
    %v2635 = vmul.f32 %v2617, 0.35355338
    %v2636 = vadd.f32 %v2620, %v907
    %v2637 = vadd.f32 %v2621, %v907
    %v2638 = vadd.f32 %v2622, %v907
    %v2639 = vadd.f32 %v2623, %v907
    %v2640 = vadd.f32 %v2624, %v907
    %v2641 = vadd.f32 %v2625, %v907
    %v2642 = vadd.f32 %v2626, %v907
    %v2643 = vadd.f32 %v2627, %v907
    %v2644 = vadd.f32 %v2628, %v912
    %v2645 = vadd.f32 %v2629, %v912
    %v2646 = vadd.f32 %v2630, %v912
    %v2647 = vadd.f32 %v2631, %v912
    %v2648 = vadd.f32 %v2632, %v912
    %v2649 = vadd.f32 %v2633, %v912
    %v2650 = vadd.f32 %v2634, %v912
    %v2651 = vadd.f32 %v2635, %v912
    %v2652 = vsel %vm930, %v2636, -inf
    %v2653 = vrot.slane %v2652, 4
    %v2654 = vmax.f32 %v2652, %v2653
    %v2655 = vrot.slane %v2654, 2
    %v2656 = vmax.f32 %v2654, %v2655
    %v2657 = vrot.slane %v2656, 1
    %v2658 = vmax.f32 %v2656, %v2657
    %v2659 = vsel %vm930, %v2637, -inf
    %v2660 = vrot.slane %v2659, 4
    %v2661 = vmax.f32 %v2659, %v2660
    %v2662 = vrot.slane %v2661, 2
    %v2663 = vmax.f32 %v2661, %v2662
    %v2664 = vrot.slane %v2663, 1
    %v2665 = vmax.f32 %v2663, %v2664
    %v2666 = vsel %vm930, %v2638, -inf
    %v2667 = vrot.slane %v2666, 4
    %v2668 = vmax.f32 %v2666, %v2667
    %v2669 = vrot.slane %v2668, 2
    %v2670 = vmax.f32 %v2668, %v2669
    %v2671 = vrot.slane %v2670, 1
    %v2672 = vmax.f32 %v2670, %v2671
    %v2673 = vsel %vm930, %v2639, -inf
    %v2674 = vrot.slane %v2673, 4
    %v2675 = vmax.f32 %v2673, %v2674
    %v2676 = vrot.slane %v2675, 2
    %v2677 = vmax.f32 %v2675, %v2676
    %v2678 = vrot.slane %v2677, 1
    %v2679 = vmax.f32 %v2677, %v2678
    %v2680 = vsel %vm930, %v2640, -inf
    %v2681 = vrot.slane %v2680, 4
    %v2682 = vmax.f32 %v2680, %v2681
    %v2683 = vrot.slane %v2682, 2
    %v2684 = vmax.f32 %v2682, %v2683
    %v2685 = vrot.slane %v2684, 1
    %v2686 = vmax.f32 %v2684, %v2685
    %v2687 = vsel %vm930, %v2641, -inf
    %v2688 = vrot.slane %v2687, 4
    %v2689 = vmax.f32 %v2687, %v2688
    %v2690 = vrot.slane %v2689, 2
    %v2691 = vmax.f32 %v2689, %v2690
    %v2692 = vrot.slane %v2691, 1
    %v2693 = vmax.f32 %v2691, %v2692
    %v2694 = vsel %vm930, %v2642, -inf
    %v2695 = vrot.slane %v2694, 4
    %v2696 = vmax.f32 %v2694, %v2695
    %v2697 = vrot.slane %v2696, 2
    %v2698 = vmax.f32 %v2696, %v2697
    %v2699 = vrot.slane %v2698, 1
    %v2700 = vmax.f32 %v2698, %v2699
    %v2701 = vsel %vm930, %v2643, -inf
    %v2702 = vrot.slane %v2701, 4
    %v2703 = vmax.f32 %v2701, %v2702
    %v2704 = vrot.slane %v2703, 2
    %v2705 = vmax.f32 %v2703, %v2704
    %v2706 = vrot.slane %v2705, 1
    %v2707 = vmax.f32 %v2705, %v2706
    %v2708 = vsel %vm930, %v2644, -inf
    %v2709 = vrot.slane %v2708, 4
    %v2710 = vmax.f32 %v2708, %v2709
    %v2711 = vrot.slane %v2710, 2
    %v2712 = vmax.f32 %v2710, %v2711
    %v2713 = vrot.slane %v2712, 1
    %v2714 = vmax.f32 %v2712, %v2713
    %v2715 = vsel %vm930, %v2645, -inf
    %v2716 = vrot.slane %v2715, 4
    %v2717 = vmax.f32 %v2715, %v2716
    %v2718 = vrot.slane %v2717, 2
    %v2719 = vmax.f32 %v2717, %v2718
    %v2720 = vrot.slane %v2719, 1
    %v2721 = vmax.f32 %v2719, %v2720
    %v2722 = vsel %vm930, %v2646, -inf
    %v2723 = vrot.slane %v2722, 4
    %v2724 = vmax.f32 %v2722, %v2723
    %v2725 = vrot.slane %v2724, 2
    %v2726 = vmax.f32 %v2724, %v2725
    %v2727 = vrot.slane %v2726, 1
    %v2728 = vmax.f32 %v2726, %v2727
    %v2729 = vsel %vm930, %v2647, -inf
    %v2730 = vrot.slane %v2729, 4
    %v2731 = vmax.f32 %v2729, %v2730
    %v2732 = vrot.slane %v2731, 2
    %v2733 = vmax.f32 %v2731, %v2732
    %v2734 = vrot.slane %v2733, 1
    %v2735 = vmax.f32 %v2733, %v2734
    %v2736 = vsel %vm930, %v2648, -inf
    %v2737 = vrot.slane %v2736, 4
    %v2738 = vmax.f32 %v2736, %v2737
    %v2739 = vrot.slane %v2738, 2
    %v2740 = vmax.f32 %v2738, %v2739
    %v2741 = vrot.slane %v2740, 1
    %v2742 = vmax.f32 %v2740, %v2741
    %v2743 = vsel %vm930, %v2649, -inf
    %v2744 = vrot.slane %v2743, 4
    %v2745 = vmax.f32 %v2743, %v2744
    %v2746 = vrot.slane %v2745, 2
    %v2747 = vmax.f32 %v2745, %v2746
    %v2748 = vrot.slane %v2747, 1
    %v2749 = vmax.f32 %v2747, %v2748
    %v2750 = vsel %vm930, %v2650, -inf
    %v2751 = vrot.slane %v2750, 4
    %v2752 = vmax.f32 %v2750, %v2751
    %v2753 = vrot.slane %v2752, 2
    %v2754 = vmax.f32 %v2752, %v2753
    %v2755 = vrot.slane %v2754, 1
    %v2756 = vmax.f32 %v2754, %v2755
    %v2757 = vsel %vm930, %v2651, -inf
    %v2758 = vrot.slane %v2757, 4
    %v2759 = vmax.f32 %v2757, %v2758
    %v2760 = vrot.slane %v2759, 2
    %v2761 = vmax.f32 %v2759, %v2760
    %v2762 = vrot.slane %v2761, 1
    %v2763 = vmax.f32 %v2761, %v2762
    %v2764 = vsub.f32 %v2636, %v2658
    %v2765 = vsub.f32 %v2637, %v2665
    %v2766 = vsub.f32 %v2638, %v2672
    %v2767 = vsub.f32 %v2639, %v2679
    %v2768 = vsub.f32 %v2640, %v2686
    %v2769 = vsub.f32 %v2641, %v2693
    %v2770 = vsub.f32 %v2642, %v2700
    %v2771 = vsub.f32 %v2643, %v2707
    %v2772 = vsub.f32 %v2644, %v2714
    %v2773 = vsub.f32 %v2645, %v2721
    %v2774 = vsub.f32 %v2646, %v2728
    %v2775 = vsub.f32 %v2647, %v2735
    %v2776 = vsub.f32 %v2648, %v2742
    %v2777 = vsub.f32 %v2649, %v2749
    %v2778 = vsub.f32 %v2650, %v2756
    %v2779 = vsub.f32 %v2651, %v2763
    %v2780 = vmul.f32 %v2764, 1.442695
    %v2781 = vpow.pop %v2780
    %v2782 = vmul.f32 %v2765, 1.442695
    %v2783 = vpow.pop %v2782
    %v2784 = vmul.f32 %v2766, 1.442695
    %v2785 = vpow.pop %v2784
    %v2786 = vmul.f32 %v2767, 1.442695
    %v2787 = vpow.pop %v2786
    %v2788 = vmul.f32 %v2768, 1.442695
    %v2789 = vpow.pop %v2788
    %v2790 = vmul.f32 %v2769, 1.442695
    %v2791 = vpow.pop %v2790
    %v2792 = vmul.f32 %v2770, 1.442695
    %v2793 = vpow.pop %v2792
    %v2794 = vmul.f32 %v2771, 1.442695
    %v2795 = vpow.pop %v2794
    %v2796 = vmul.f32 %v2772, 1.442695
    %v2797 = vpow.pop %v2796
    %v2798 = vmul.f32 %v2773, 1.442695
    %v2799 = vpow.pop %v2798
    %v2800 = vmul.f32 %v2774, 1.442695
    %v2801 = vpow.pop %v2800
    %v2802 = vmul.f32 %v2775, 1.442695
    %v2803 = vpow.pop %v2802
    %v2804 = vmul.f32 %v2776, 1.442695
    %v2805 = vpow.pop %v2804
    %v2806 = vmul.f32 %v2777, 1.442695
    %v2807 = vpow.pop %v2806
    %v2808 = vmul.f32 %v2778, 1.442695
    %v2809 = vpow.pop %v2808
    %v2810 = vmul.f32 %v2779, 1.442695
    %v2811 = vpow.pop %v2810
    %v2812 = vsel %vm930, %v2781, 0.0
    %v2813 = vrot.slane %v2812, 4
    %v2814 = vadd.f32 %v2812, %v2813
    %v2815 = vrot.slane %v2814, 2
    %v2816 = vadd.f32 %v2814, %v2815
    %v2817 = vrot.slane %v2816, 1
    %v2818 = vadd.f32 %v2816, %v2817
    %v2819 = vsel %vm930, %v2783, 0.0
    %v2820 = vrot.slane %v2819, 4
    %v2821 = vadd.f32 %v2819, %v2820
    %v2822 = vrot.slane %v2821, 2
    %v2823 = vadd.f32 %v2821, %v2822
    %v2824 = vrot.slane %v2823, 1
    %v2825 = vadd.f32 %v2823, %v2824
    %v2826 = vsel %vm930, %v2785, 0.0
    %v2827 = vrot.slane %v2826, 4
    %v2828 = vadd.f32 %v2826, %v2827
    %v2829 = vrot.slane %v2828, 2
    %v2830 = vadd.f32 %v2828, %v2829
    %v2831 = vrot.slane %v2830, 1
    %v2832 = vadd.f32 %v2830, %v2831
    %v2833 = vsel %vm930, %v2787, 0.0
    %v2834 = vrot.slane %v2833, 4
    %v2835 = vadd.f32 %v2833, %v2834
    %v2836 = vrot.slane %v2835, 2
    %v2837 = vadd.f32 %v2835, %v2836
    %v2838 = vrot.slane %v2837, 1
    %v2839 = vadd.f32 %v2837, %v2838
    %v2840 = vsel %vm930, %v2789, 0.0
    %v2841 = vrot.slane %v2840, 4
    %v2842 = vadd.f32 %v2840, %v2841
    %v2843 = vrot.slane %v2842, 2
    %v2844 = vadd.f32 %v2842, %v2843
    %v2845 = vrot.slane %v2844, 1
    %v2846 = vadd.f32 %v2844, %v2845
    %v2847 = vsel %vm930, %v2791, 0.0
    %v2848 = vrot.slane %v2847, 4
    %v2849 = vadd.f32 %v2847, %v2848
    %v2850 = vrot.slane %v2849, 2
    %v2851 = vadd.f32 %v2849, %v2850
    %v2852 = vrot.slane %v2851, 1
    %v2853 = vadd.f32 %v2851, %v2852
    %v2854 = vsel %vm930, %v2793, 0.0
    %v2855 = vrot.slane %v2854, 4
    %v2856 = vadd.f32 %v2854, %v2855
    %v2857 = vrot.slane %v2856, 2
    %v2858 = vadd.f32 %v2856, %v2857
    %v2859 = vrot.slane %v2858, 1
    %v2860 = vadd.f32 %v2858, %v2859
    %v2861 = vsel %vm930, %v2795, 0.0
    %v2862 = vrot.slane %v2861, 4
    %v2863 = vadd.f32 %v2861, %v2862
    %v2864 = vrot.slane %v2863, 2
    %v2865 = vadd.f32 %v2863, %v2864
    %v2866 = vrot.slane %v2865, 1
    %v2867 = vadd.f32 %v2865, %v2866
    %v2868 = vsel %vm930, %v2797, 0.0
    %v2869 = vrot.slane %v2868, 4
    %v2870 = vadd.f32 %v2868, %v2869
    %v2871 = vrot.slane %v2870, 2
    %v2872 = vadd.f32 %v2870, %v2871
    %v2873 = vrot.slane %v2872, 1
    %v2874 = vadd.f32 %v2872, %v2873
    %v2875 = vsel %vm930, %v2799, 0.0
    %v2876 = vrot.slane %v2875, 4
    %v2877 = vadd.f32 %v2875, %v2876
    %v2878 = vrot.slane %v2877, 2
    %v2879 = vadd.f32 %v2877, %v2878
    %v2880 = vrot.slane %v2879, 1
    %v2881 = vadd.f32 %v2879, %v2880
    %v2882 = vsel %vm930, %v2801, 0.0
    %v2883 = vrot.slane %v2882, 4
    %v2884 = vadd.f32 %v2882, %v2883
    %v2885 = vrot.slane %v2884, 2
    %v2886 = vadd.f32 %v2884, %v2885
    %v2887 = vrot.slane %v2886, 1
    %v2888 = vadd.f32 %v2886, %v2887
    %v2889 = vsel %vm930, %v2803, 0.0
    %v2890 = vrot.slane %v2889, 4
    %v2891 = vadd.f32 %v2889, %v2890
    %v2892 = vrot.slane %v2891, 2
    %v2893 = vadd.f32 %v2891, %v2892
    %v2894 = vrot.slane %v2893, 1
    %v2895 = vadd.f32 %v2893, %v2894
    %v2896 = vsel %vm930, %v2805, 0.0
    %v2897 = vrot.slane %v2896, 4
    %v2898 = vadd.f32 %v2896, %v2897
    %v2899 = vrot.slane %v2898, 2
    %v2900 = vadd.f32 %v2898, %v2899
    %v2901 = vrot.slane %v2900, 1
    %v2902 = vadd.f32 %v2900, %v2901
    %v2903 = vsel %vm930, %v2807, 0.0
    %v2904 = vrot.slane %v2903, 4
    %v2905 = vadd.f32 %v2903, %v2904
    %v2906 = vrot.slane %v2905, 2
    %v2907 = vadd.f32 %v2905, %v2906
    %v2908 = vrot.slane %v2907, 1
    %v2909 = vadd.f32 %v2907, %v2908
    %v2910 = vsel %vm930, %v2809, 0.0
    %v2911 = vrot.slane %v2910, 4
    %v2912 = vadd.f32 %v2910, %v2911
    %v2913 = vrot.slane %v2912, 2
    %v2914 = vadd.f32 %v2912, %v2913
    %v2915 = vrot.slane %v2914, 1
    %v2916 = vadd.f32 %v2914, %v2915
    %v2917 = vsel %vm930, %v2811, 0.0
    %v2918 = vrot.slane %v2917, 4
    %v2919 = vadd.f32 %v2917, %v2918
    %v2920 = vrot.slane %v2919, 2
    %v2921 = vadd.f32 %v2919, %v2920
    %v2922 = vrot.slane %v2921, 1
    %v2923 = vadd.f32 %v2921, %v2922
    %v2924 = vrcp.pop %v2818
    %v2925 = vmul.f32 %v2781, %v2924
    %v2926 = vrcp.pop %v2825
    %v2927 = vmul.f32 %v2783, %v2926
    %v2928 = vrcp.pop %v2832
    %v2929 = vmul.f32 %v2785, %v2928
    %v2930 = vrcp.pop %v2839
    %v2931 = vmul.f32 %v2787, %v2930
    %v2932 = vrcp.pop %v2846
    %v2933 = vmul.f32 %v2789, %v2932
    %v2934 = vrcp.pop %v2853
    %v2935 = vmul.f32 %v2791, %v2934
    %v2936 = vrcp.pop %v2860
    %v2937 = vmul.f32 %v2793, %v2936
    %v2938 = vrcp.pop %v2867
    %v2939 = vmul.f32 %v2795, %v2938
    %v2940 = vrcp.pop %v2874
    %v2941 = vmul.f32 %v2797, %v2940
    %v2942 = vrcp.pop %v2881
    %v2943 = vmul.f32 %v2799, %v2942
    %v2944 = vrcp.pop %v2888
    %v2945 = vmul.f32 %v2801, %v2944
    %v2946 = vrcp.pop %v2895
    %v2947 = vmul.f32 %v2803, %v2946
    %v2948 = vrcp.pop %v2902
    %v2949 = vmul.f32 %v2805, %v2948
    %v2950 = vrcp.pop %v2909
    %v2951 = vmul.f32 %v2807, %v2950
    %v2952 = vrcp.pop %v2916
    %v2953 = vmul.f32 %v2809, %v2952
    %v2954 = vrcp.pop %v2923
    %v2955 = vmul.f32 %v2811, %v2954
    %v2957 = vsel %vm930, %v2925, 0
    %v2960 = vsel %vm930, %v2927, 0
    %v2963 = vsel %vm930, %v2929, 0
    %v2966 = vsel %vm930, %v2931, 0
    %v2969 = vsel %vm930, %v2933, 0
    %v2972 = vsel %vm930, %v2935, 0
    %v2975 = vsel %vm930, %v2937, 0
    %v2978 = vsel %vm930, %v2939, 0
    %v2981 = vsel %vm930, %v2941, 0
    %v2984 = vsel %vm930, %v2943, 0
    %v2987 = vsel %vm930, %v2945, 0
    %v2990 = vsel %vm930, %v2947, 0
    %v2993 = vsel %vm930, %v2949, 0
    %v2996 = vsel %vm930, %v2951, 0
    %v2999 = vsel %vm930, %v2953, 0
    %v3002 = vsel %vm930, %v2955, 0
    %3004 = vmatprep.subr.mxu0 0.0
    %3005 = vmatpush1.msra.mxu0 0.0
    %3006 = vmatprep.subr.mxu0 0.0
    %3007 = vmatpush1.msra.mxu0 0.0
    %3008 = vmatprep.subr.mxu0 0.0
    %3009 = vmatpush1.msra.mxu0 0.0
    %3010 = vmatprep.subr.mxu0 0.0
    %3011 = vmatpush1.msra.mxu0 0.0
    %3012 = vmatprep.subr.mxu0 0.0
    %3013 = vmatpush1.msra.mxu0 0.0
    %3014 = vmatprep.subr.mxu0 0.0
    %3015 = vmatpush1.msra.mxu0 0.0
    %3016 = vmatprep.subr.mxu0 0.0
    %3017 = vmatpush1.msra.mxu0 0.0
    %3018 = vmatprep.subr.mxu0 0.0
    %3019 = vmatpush1.msra.mxu0 0.0
    %3020 = vmatprep.subr.mxu0 0.0
    %3021 = vmatpush1.msra.mxu0 0.0
    %3022 = vmatprep.subr.mxu0 0.0
    %3023 = vmatpush1.msra.mxu0 0.0
    %3024 = vmatprep.subr.mxu0 0.0
    %3025 = vmatpush1.msra.mxu0 0.0
    %3026 = vmatprep.subr.mxu0 0.0
    %3027 = vmatpush1.msra.mxu0 0.0
    %3028 = vmatprep.subr.mxu0 0.0
    %3029 = vmatpush1.msra.mxu0 0.0
    %3030 = vmatprep.subr.mxu0 0.0
    %3031 = vmatpush1.msra.mxu0 0.0
    %3032 = vmatprep.subr.mxu0 0.0
    %3033 = vmatpush1.msra.mxu0 0.0
    %3034 = vmatprep.subr.mxu0 0.0
    %3035 = vmatpush1.msra.mxu0 %v1285
    %3036 = vmatprep.subr.mxu0 0.0
    %3037 = vmatpush2.msra.mxu0 0.0
    %3038 = vmatprep.subr.mxu0 0.0
    %3039 = vmatpush2.msra.mxu0 0.0
    %3040 = vmatprep.subr.mxu0 0.0
    %3041 = vmatpush2.msra.mxu0 0.0
    %3042 = vmatprep.subr.mxu0 0.0
    %3043 = vmatpush2.msra.mxu0 0.0
    %3044 = vmatprep.subr.mxu0 0.0
    %3045 = vmatpush2.msra.mxu0 0.0
    %3046 = vmatprep.subr.mxu0 0.0
    %3047 = vmatpush2.msra.mxu0 0.0
    %3048 = vmatprep.subr.mxu0 0.0
    %3049 = vmatpush2.msra.mxu0 0.0
    %3050 = vmatprep.subr.mxu0 0.0
    %3051 = vmatpush2.msra.mxu0 0.0
    %3052 = vmatprep.subr.mxu0 0.0
    %3053 = vmatpush2.msra.mxu0 0.0
    %3054 = vmatprep.subr.mxu0 0.0
    %3055 = vmatpush2.msra.mxu0 0.0
    %3056 = vmatprep.subr.mxu0 0.0
    %3057 = vmatpush2.msra.mxu0 0.0
    %3058 = vmatprep.subr.mxu0 0.0
    %3059 = vmatpush2.msra.mxu0 0.0
    %3060 = vmatprep.subr.mxu0 0.0
    %3061 = vmatpush2.msra.mxu0 0.0
    %3062 = vmatprep.subr.mxu0 0.0
    %3063 = vmatpush2.msra.mxu0 0.0
    %3064 = vmatprep.subr.mxu0 0.0
    %3065 = vmatpush2.msra.mxu0 0.0
    %3066 = vmatprep.subr.mxu0 0.0
    %3067 = vmatpush2.msra.mxu0 0.0
    %3068 = vmatprep.mubr.f32.mxu0 0.0
    %3069 = vmatmul.mubr.f32.gmra.mxu0 %v2957
    %v3070 = vpop.f32.mrf.mxu0
    %v3071 = vadd.f32 0.0, %v3070
    %v3072 = vpop.f32.mrf.mxu0
    %3073 = vmatprep.mubr.f32.mxu0 0.0
    %3074 = vmatmul.mubr.f32.gmra.mxu0 %v2960
    %v3075 = vpop.f32.mrf.mxu0
    %v3076 = vadd.f32 0.0, %v3075
    %v3077 = vpop.f32.mrf.mxu0
    %3078 = vmatprep.mubr.f32.mxu0 0.0
    %3079 = vmatmul.mubr.f32.gmra.mxu0 %v2963
    %v3080 = vpop.f32.mrf.mxu0
    %v3081 = vadd.f32 0.0, %v3080
    %v3082 = vpop.f32.mrf.mxu0
    %3083 = vmatprep.mubr.f32.mxu0 0.0
    %3084 = vmatmul.mubr.f32.gmra.mxu0 %v2966
    %v3085 = vpop.f32.mrf.mxu0
    %v3086 = vadd.f32 0.0, %v3085
    %v3087 = vpop.f32.mrf.mxu0
    %3088 = vmatprep.mubr.f32.mxu0 0.0
    %3089 = vmatmul.mubr.f32.gmra.mxu0 %v2969
    %v3090 = vpop.f32.mrf.mxu0
    %v3091 = vadd.f32 0.0, %v3090
    %v3092 = vpop.f32.mrf.mxu0
    %3093 = vmatprep.mubr.f32.mxu0 0.0
    %3094 = vmatmul.mubr.f32.gmra.mxu0 %v2972
    %v3095 = vpop.f32.mrf.mxu0
    %v3096 = vadd.f32 0.0, %v3095
    %v3097 = vpop.f32.mrf.mxu0
    %3098 = vmatprep.mubr.f32.mxu0 0.0
    %3099 = vmatmul.mubr.f32.gmra.mxu0 %v2975
    %v3100 = vpop.f32.mrf.mxu0
    %v3101 = vadd.f32 0.0, %v3100
    %v3102 = vpop.f32.mrf.mxu0
    %3103 = vmatprep.mubr.f32.mxu0 0.0
    %3104 = vmatmul.mubr.f32.gmra.mxu0 %v2978
    %v3105 = vpop.f32.mrf.mxu0
    %v3106 = vadd.f32 0.0, %v3105
    %v3107 = vpop.f32.mrf.mxu0
    %3108 = vmatprep.mubr.f32.mxu0 0.0
    %3109 = vmatmul.mubr.f32.gmra.mxu0 %v2981
    %v3110 = vpop.f32.mrf.mxu0
    %v3111 = vadd.f32 0.0, %v3110
    %v3112 = vpop.f32.mrf.mxu0
    %3113 = vmatprep.mubr.f32.mxu0 0.0
    %3114 = vmatmul.mubr.f32.gmra.mxu0 %v2984
    %v3115 = vpop.f32.mrf.mxu0
    %v3116 = vadd.f32 0.0, %v3115
    %v3117 = vpop.f32.mrf.mxu0
    %3118 = vmatprep.mubr.f32.mxu0 0.0
    %3119 = vmatmul.mubr.f32.gmra.mxu0 %v2987
    %v3120 = vpop.f32.mrf.mxu0
    %v3121 = vadd.f32 0.0, %v3120
    %v3122 = vpop.f32.mrf.mxu0
    %3123 = vmatprep.mubr.f32.mxu0 0.0
    %3124 = vmatmul.mubr.f32.gmra.mxu0 %v2990
    %v3125 = vpop.f32.mrf.mxu0
    %v3126 = vadd.f32 0.0, %v3125
    %v3127 = vpop.f32.mrf.mxu0
    %3128 = vmatprep.mubr.f32.mxu0 0.0
    %3129 = vmatmul.mubr.f32.gmra.mxu0 %v2993
    %v3130 = vpop.f32.mrf.mxu0
    %v3131 = vadd.f32 0.0, %v3130
    %v3132 = vpop.f32.mrf.mxu0
    %3133 = vmatprep.mubr.f32.mxu0 0.0
    %3134 = vmatmul.mubr.f32.gmra.mxu0 %v2996
    %v3135 = vpop.f32.mrf.mxu0
    %v3136 = vadd.f32 0.0, %v3135
    %v3137 = vpop.f32.mrf.mxu0
    %3138 = vmatprep.mubr.f32.mxu0 0.0
    %3139 = vmatmul.mubr.f32.gmra.mxu0 %v2999
    %v3140 = vpop.f32.mrf.mxu0
    %v3141 = vadd.f32 0.0, %v3140
    %v3142 = vpop.f32.mrf.mxu0
    %3143 = vmatprep.mubr.f32.mxu0 0.0
    %3144 = vmatmul.mubr.f32.gmra.mxu0 %v3002
    %v3145 = vpop.f32.mrf.mxu0
    %v3146 = vadd.f32 0.0, %v3145
    %v3147 = vpop.f32.mrf.mxu0
    %3148 = vdwg.mxu0
    %v3149 = vmul.f32 %v3071, %v2223
    %v3150 = vmul.f32 %v3076, %v2223
    %v3151 = vmul.f32 %v3081, %v2223
    %v3152 = vmul.f32 %v3086, %v2223
    %v3153 = vmul.f32 %v3091, %v2223
    %v3154 = vmul.f32 %v3096, %v2223
    %v3155 = vmul.f32 %v3101, %v2223
    %v3156 = vmul.f32 %v3106, %v2223
    %v3157 = vmul.f32 %v3111, %v2228
    %v3158 = vmul.f32 %v3116, %v2228
    %v3159 = vmul.f32 %v3121, %v2228
    %v3160 = vmul.f32 %v3126, %v2228
    %v3161 = vmul.f32 %v3131, %v2228
    %v3162 = vmul.f32 %v3136, %v2228
    %v3163 = vmul.f32 %v3141, %v2228
    %v3164 = vmul.f32 %v3146, %v2228
    %v3165 = vsel %vm134, %v3149, 0.0
    %v3166 = vrot.slane %v3165, 4
    %v3167 = vadd.f32 %v3165, %v3166
    %v3168 = vrot.slane %v3167, 2
    %v3169 = vadd.f32 %v3167, %v3168
    %v3170 = vrot.slane %v3169, 1
    %v3171 = vadd.f32 %v3169, %v3170
    %v3172 = vsel %vm134, %v3150, 0.0
    %v3173 = vrot.slane %v3172, 4
    %v3174 = vadd.f32 %v3172, %v3173
    %v3175 = vrot.slane %v3174, 2
    %v3176 = vadd.f32 %v3174, %v3175
    %v3177 = vrot.slane %v3176, 1
    %v3178 = vadd.f32 %v3176, %v3177
    %v3179 = vsel %vm134, %v3151, 0.0
    %v3180 = vrot.slane %v3179, 4
    %v3181 = vadd.f32 %v3179, %v3180
    %v3182 = vrot.slane %v3181, 2
    %v3183 = vadd.f32 %v3181, %v3182
    %v3184 = vrot.slane %v3183, 1
    %v3185 = vadd.f32 %v3183, %v3184
    %v3186 = vsel %vm134, %v3152, 0.0
    %v3187 = vrot.slane %v3186, 4
    %v3188 = vadd.f32 %v3186, %v3187
    %v3189 = vrot.slane %v3188, 2
    %v3190 = vadd.f32 %v3188, %v3189
    %v3191 = vrot.slane %v3190, 1
    %v3192 = vadd.f32 %v3190, %v3191
    %v3193 = vsel %vm134, %v3153, 0.0
    %v3194 = vrot.slane %v3193, 4
    %v3195 = vadd.f32 %v3193, %v3194
    %v3196 = vrot.slane %v3195, 2
    %v3197 = vadd.f32 %v3195, %v3196
    %v3198 = vrot.slane %v3197, 1
    %v3199 = vadd.f32 %v3197, %v3198
    %v3200 = vsel %vm134, %v3154, 0.0
    %v3201 = vrot.slane %v3200, 4
    %v3202 = vadd.f32 %v3200, %v3201
    %v3203 = vrot.slane %v3202, 2
    %v3204 = vadd.f32 %v3202, %v3203
    %v3205 = vrot.slane %v3204, 1
    %v3206 = vadd.f32 %v3204, %v3205
    %v3207 = vsel %vm134, %v3155, 0.0
    %v3208 = vrot.slane %v3207, 4
    %v3209 = vadd.f32 %v3207, %v3208
    %v3210 = vrot.slane %v3209, 2
    %v3211 = vadd.f32 %v3209, %v3210
    %v3212 = vrot.slane %v3211, 1
    %v3213 = vadd.f32 %v3211, %v3212
    %v3214 = vsel %vm134, %v3156, 0.0
    %v3215 = vrot.slane %v3214, 4
    %v3216 = vadd.f32 %v3214, %v3215
    %v3217 = vrot.slane %v3216, 2
    %v3218 = vadd.f32 %v3216, %v3217
    %v3219 = vrot.slane %v3218, 1
    %v3220 = vadd.f32 %v3218, %v3219
    %v3221 = vsel %vm134, %v3157, 0.0
    %v3222 = vrot.slane %v3221, 4
    %v3223 = vadd.f32 %v3221, %v3222
    %v3224 = vrot.slane %v3223, 2
    %v3225 = vadd.f32 %v3223, %v3224
    %v3226 = vrot.slane %v3225, 1
    %v3227 = vadd.f32 %v3225, %v3226
    %v3228 = vsel %vm134, %v3158, 0.0
    %v3229 = vrot.slane %v3228, 4
    %v3230 = vadd.f32 %v3228, %v3229
    %v3231 = vrot.slane %v3230, 2
    %v3232 = vadd.f32 %v3230, %v3231
    %v3233 = vrot.slane %v3232, 1
    %v3234 = vadd.f32 %v3232, %v3233
    %v3235 = vsel %vm134, %v3159, 0.0
    %v3236 = vrot.slane %v3235, 4
    %v3237 = vadd.f32 %v3235, %v3236
    %v3238 = vrot.slane %v3237, 2
    %v3239 = vadd.f32 %v3237, %v3238
    %v3240 = vrot.slane %v3239, 1
    %v3241 = vadd.f32 %v3239, %v3240
    %v3242 = vsel %vm134, %v3160, 0.0
    %v3243 = vrot.slane %v3242, 4
    %v3244 = vadd.f32 %v3242, %v3243
    %v3245 = vrot.slane %v3244, 2
    %v3246 = vadd.f32 %v3244, %v3245
    %v3247 = vrot.slane %v3246, 1
    %v3248 = vadd.f32 %v3246, %v3247
    %v3249 = vsel %vm134, %v3161, 0.0
    %v3250 = vrot.slane %v3249, 4
    %v3251 = vadd.f32 %v3249, %v3250
    %v3252 = vrot.slane %v3251, 2
    %v3253 = vadd.f32 %v3251, %v3252
    %v3254 = vrot.slane %v3253, 1
    %v3255 = vadd.f32 %v3253, %v3254
    %v3256 = vsel %vm134, %v3162, 0.0
    %v3257 = vrot.slane %v3256, 4
    %v3258 = vadd.f32 %v3256, %v3257
    %v3259 = vrot.slane %v3258, 2
    %v3260 = vadd.f32 %v3258, %v3259
    %v3261 = vrot.slane %v3260, 1
    %v3262 = vadd.f32 %v3260, %v3261
    %v3263 = vsel %vm134, %v3163, 0.0
    %v3264 = vrot.slane %v3263, 4
    %v3265 = vadd.f32 %v3263, %v3264
    %v3266 = vrot.slane %v3265, 2
    %v3267 = vadd.f32 %v3265, %v3266
    %v3268 = vrot.slane %v3267, 1
    %v3269 = vadd.f32 %v3267, %v3268
    %v3270 = vsel %vm134, %v3164, 0.0
    %v3271 = vrot.slane %v3270, 4
    %v3272 = vadd.f32 %v3270, %v3271
    %v3273 = vrot.slane %v3272, 2
    %v3274 = vadd.f32 %v3272, %v3273
    %v3275 = vrot.slane %v3274, 1
    %v3276 = vadd.f32 %v3274, %v3275
    %v3277 = vlaneseq
    %v3278 = vshrl.u32 %v3277, 7
    %v3279 = vsub.s32 0, %v3278
    %v3280 = vrot.slane %v1981, %v3279
    %v3297 = vsel %vm1580, %v3178, %v3171
    %v3298 = vsel %vm1582, %v3185, %v3297
    %v3299 = vsel %vm1584, %v3192, %v3298
    %v3300 = vsel %vm1586, %v3199, %v3299
    %v3301 = vsel %vm1588, %v3206, %v3300
    %v3302 = vsel %vm1590, %v3213, %v3301
    %v3303 = vsel %vm1592, %v3220, %v3302
    %v3304 = vsel %vm1580, %v3234, %v3227
    %v3305 = vsel %vm1582, %v3241, %v3304
    %v3306 = vsel %vm1584, %v3248, %v3305
    %v3307 = vsel %vm1586, %v3255, %v3306
    %v3308 = vsel %vm1588, %v3262, %v3307
    %v3309 = vsel %vm1590, %v3269, %v3308
    %v3310 = vsel %vm1592, %v3276, %v3309
    %v3311 = vsel %vm134, %v3303, 0
    %v3313 = vsel %vm134, %v3310, 0
    %3315 = vmatprep.subr.mxu0 0.0
    %3316 = vmatpush1.msra.mxu0 0.0
    %3317 = vmatprep.subr.mxu0 0.0
    %3318 = vmatpush1.msra.mxu0 0.0
    %3319 = vmatprep.subr.mxu0 0.0
    %3320 = vmatpush1.msra.mxu0 0.0
    %3321 = vmatprep.subr.mxu0 0.0
    %3322 = vmatpush1.msra.mxu0 0.0
    %3323 = vmatprep.subr.mxu0 0.0
    %3324 = vmatpush1.msra.mxu0 0.0
    %3325 = vmatprep.subr.mxu0 0.0
    %3326 = vmatpush1.msra.mxu0 0.0
    %3327 = vmatprep.subr.mxu0 0.0
    %3328 = vmatpush1.msra.mxu0 0.0
    %3329 = vmatprep.subr.mxu0 0.0
    %3330 = vmatpush1.msra.mxu0 0.0
    %3331 = vmatprep.subr.mxu0 0.0
    %3332 = vmatpush1.msra.mxu0 0.0
    %3333 = vmatprep.subr.mxu0 0.0
    %3334 = vmatpush1.msra.mxu0 0.0
    %3335 = vmatprep.subr.mxu0 0.0
    %3336 = vmatpush1.msra.mxu0 0.0
    %3337 = vmatprep.subr.mxu0 0.0
    %3338 = vmatpush1.msra.mxu0 0.0
    %3339 = vmatprep.subr.mxu0 0.0
    %3340 = vmatpush1.msra.mxu0 %v1965
    %3341 = vmatprep.subr.mxu0 0.0
    %3342 = vmatpush1.msra.mxu0 %v1964
    %3343 = vmatprep.subr.mxu0 0.0
    %3344 = vmatpush1.msra.mxu0 %v1963
    %3345 = vmatprep.subr.mxu0 0.0
    %3346 = vmatpush1.msra.mxu0 %v1962
    %3347 = vmatprep.subr.mxu0 0.0
    %3348 = vmatpush2.msra.mxu0 0.0
    %3349 = vmatprep.subr.mxu0 0.0
    %3350 = vmatpush2.msra.mxu0 0.0
    %3351 = vmatprep.subr.mxu0 0.0
    %3352 = vmatpush2.msra.mxu0 0.0
    %3353 = vmatprep.subr.mxu0 0.0
    %3354 = vmatpush2.msra.mxu0 0.0
    %3355 = vmatprep.subr.mxu0 0.0
    %3356 = vmatpush2.msra.mxu0 0.0
    %3357 = vmatprep.subr.mxu0 0.0
    %3358 = vmatpush2.msra.mxu0 0.0
    %3359 = vmatprep.subr.mxu0 0.0
    %3360 = vmatpush2.msra.mxu0 0.0
    %3361 = vmatprep.subr.mxu0 0.0
    %3362 = vmatpush2.msra.mxu0 0.0
    %3363 = vmatprep.subr.mxu0 0.0
    %3364 = vmatpush2.msra.mxu0 0.0
    %3365 = vmatprep.subr.mxu0 0.0
    %3366 = vmatpush2.msra.mxu0 0.0
    %3367 = vmatprep.subr.mxu0 0.0
    %3368 = vmatpush2.msra.mxu0 0.0
    %3369 = vmatprep.subr.mxu0 0.0
    %3370 = vmatpush2.msra.mxu0 0.0
    %3371 = vmatprep.subr.mxu0 0.0
    %3372 = vmatpush2.msra.mxu0 0.0
    %3373 = vmatprep.subr.mxu0 0.0
    %3374 = vmatpush2.msra.mxu0 0.0
    %3375 = vmatprep.subr.mxu0 0.0
    %3376 = vmatpush2.msra.mxu0 0.0
    %3377 = vmatprep.subr.mxu0 0.0
    %3378 = vmatpush2.msra.mxu0 0.0
    %3379 = vmatprep.mubr.f32.mxu0 0.0
    %3380 = vmatmul.mubr.f32.gmra.mxu0 %v3311
    %v3381 = vpop.f32.mrf.mxu0
    %v3382 = vadd.f32 %v3280, %v3381
    %v3383 = vpop.f32.mrf.mxu0
    %3384 = vmatprep.mubr.f32.mxu0 0.0
    %3385 = vmatmul.mubr.f32.gmra.mxu0 %v3313
    %v3386 = vpop.f32.mrf.mxu0
    %v3387 = vadd.f32 %v3280, %v3386
    %v3388 = vpop.f32.mrf.mxu0
    %3389 = vdwg.mxu0
    %v3390 = vadd.f32 %v1947, %v3382
    %v3391 = vadd.f32 %v1948, %v3387
    %v3392 = vsel %vm134, %v3390, 0.0
    %3393 = vadd.xlane.f32.xlu0 %v3392
    %v3394 = vpop.xlane.xlu0 %3393
    %v3395 = vsel %vm134, %v3391, 0.0
    %3396 = vadd.xlane.f32.xlu0 %v3395
    %v3397 = vpop.xlane.xlu0 %3396
    %v3398 = vmul.f32 %v3394, %v141
    %v3399 = vmul.f32 %v3397, %v141
    %v3400 = vsub.f32 %v3390, %v3398
    %v3401 = vsub.f32 %v3391, %v3399
    %v3402 = vmul.f32 %v3400, %v3400
    %v3403 = vmul.f32 %v3401, %v3401
    %v3404 = vsel %vm134, %v3402, 0.0
    %3405 = vadd.xlane.f32.xlu0 %v3404
    %v3406 = vpop.xlane.xlu0 %3405
    %v3407 = vsel %vm134, %v3403, 0.0
    %3408 = vadd.xlane.f32.xlu0 %v3407
    %v3409 = vpop.xlane.xlu0 %3408
    %v3410 = vmul.f32 %v3406, %v141
    %v3411 = vmul.f32 %v3409, %v141
    %v3412 = vadd.f32 %v3410, 1e-12
    %v3413 = vadd.f32 %v3411, 1e-12
    %v3414 = vrsqrt.pop %v3412
    %v3415 = vrsqrt.pop %v3413
    %v3416 = vmul.f32 %v3400, %v3414
    %v3417 = vmul.f32 %v3401, %v3415
    %v3418 = vlaneseq
    %v3419 = vshrl.u32 %v3418, 7
    %v3420 = vsub.s32 0, %v3419
    %v3421 = vrot.slane %v1982, %v3420
    %v3422 = vmul.f32 %v3416, %v3421
    %v3423 = vmul.f32 %v3417, %v3421
    %v3424 = vlaneseq
    %v3425 = vshrl.u32 %v3424, 7
    %v3426 = vsub.s32 0, %v3425
    %v3427 = vrot.slane %v1983, %v3426
    %v3428 = vadd.f32 %v3422, %v3427
    %v3429 = vadd.f32 %v3423, %v3427
    %v3430 = vlaneseq
    %v3431 = vshrl.u32 %v3430, 7
    %v3432 = vsub.s32 0, %v3431
    %v3433 = vrot.slane %v1984, %v3432
    %v3435 = vsel %vm134, %v3428, 0
    %v3438 = vsel %vm134, %v3429, 0
    %3440 = vmatprep.subr.mxu0 0.0
    %3441 = vmatpush1.msra.mxu0 0.0
    %3442 = vmatprep.subr.mxu0 0.0
    %3443 = vmatpush1.msra.mxu0 0.0
    %3444 = vmatprep.subr.mxu0 0.0
    %3445 = vmatpush1.msra.mxu0 0.0
    %3446 = vmatprep.subr.mxu0 0.0
    %3447 = vmatpush1.msra.mxu0 0.0
    %3448 = vmatprep.subr.mxu0 0.0
    %3449 = vmatpush1.msra.mxu0 0.0
    %3450 = vmatprep.subr.mxu0 0.0
    %3451 = vmatpush1.msra.mxu0 0.0
    %3452 = vmatprep.subr.mxu0 0.0
    %3453 = vmatpush1.msra.mxu0 0.0
    %3454 = vmatprep.subr.mxu0 0.0
    %3455 = vmatpush1.msra.mxu0 0.0
    %3456 = vmatprep.subr.mxu0 0.0
    %3457 = vmatpush1.msra.mxu0 0.0
    %3458 = vmatprep.subr.mxu0 0.0
    %3459 = vmatpush1.msra.mxu0 0.0
    %3460 = vmatprep.subr.mxu0 0.0
    %3461 = vmatpush1.msra.mxu0 0.0
    %3462 = vmatprep.subr.mxu0 0.0
    %3463 = vmatpush1.msra.mxu0 0.0
    %3464 = vmatprep.subr.mxu0 0.0
    %3465 = vmatpush1.msra.mxu0 %v1969
    %3466 = vmatprep.subr.mxu0 0.0
    %3467 = vmatpush1.msra.mxu0 %v1968
    %3468 = vmatprep.subr.mxu0 0.0
    %3469 = vmatpush1.msra.mxu0 %v1967
    %3470 = vmatprep.subr.mxu0 0.0
    %3471 = vmatpush1.msra.mxu0 %v1966
    %3472 = vmatprep.subr.mxu0 0.0
    %3473 = vmatpush2.msra.mxu0 0.0
    %3474 = vmatprep.subr.mxu0 0.0
    %3475 = vmatpush2.msra.mxu0 0.0
    %3476 = vmatprep.subr.mxu0 0.0
    %3477 = vmatpush2.msra.mxu0 0.0
    %3478 = vmatprep.subr.mxu0 0.0
    %3479 = vmatpush2.msra.mxu0 0.0
    %3480 = vmatprep.subr.mxu0 0.0
    %3481 = vmatpush2.msra.mxu0 0.0
    %3482 = vmatprep.subr.mxu0 0.0
    %3483 = vmatpush2.msra.mxu0 0.0
    %3484 = vmatprep.subr.mxu0 0.0
    %3485 = vmatpush2.msra.mxu0 0.0
    %3486 = vmatprep.subr.mxu0 0.0
    %3487 = vmatpush2.msra.mxu0 0.0
    %3488 = vmatprep.subr.mxu0 0.0
    %3489 = vmatpush2.msra.mxu0 0.0
    %3490 = vmatprep.subr.mxu0 0.0
    %3491 = vmatpush2.msra.mxu0 0.0
    %3492 = vmatprep.subr.mxu0 0.0
    %3493 = vmatpush2.msra.mxu0 0.0
    %3494 = vmatprep.subr.mxu0 0.0
    %3495 = vmatpush2.msra.mxu0 0.0
    %3496 = vmatprep.subr.mxu0 0.0
    %3497 = vmatpush2.msra.mxu0 0.0
    %3498 = vmatprep.subr.mxu0 0.0
    %3499 = vmatpush2.msra.mxu0 0.0
    %3500 = vmatprep.subr.mxu0 0.0
    %3501 = vmatpush2.msra.mxu0 0.0
    %3502 = vmatprep.subr.mxu0 0.0
    %3503 = vmatpush2.msra.mxu0 0.0
    %3504 = vmatprep.mubr.f32.mxu0 0.0
    %3505 = vmatmul.mubr.f32.gmra.mxu0 %v3435
    %v3506 = vpop.f32.mrf.mxu0
    %v3507 = vadd.f32 %v3433, %v3506
    %v3508 = vpop.f32.mrf.mxu0
    %3509 = vmatprep.mubr.f32.mxu0 0.0
    %3510 = vmatmul.mubr.f32.gmra.mxu0 %v3438
    %v3511 = vpop.f32.mrf.mxu0
    %v3512 = vadd.f32 %v3433, %v3511
    %v3513 = vpop.f32.mrf.mxu0
    %3514 = vdwg.mxu0
    %v3515 = vmul.f32 %v3507, %v3507
    %v3516 = vmul.f32 %v3512, %v3512
    %v3517 = vmul.f32 %v3507, %v3515
    %v3518 = vmul.f32 %v3512, %v3516
    %v3519 = vmul.f32 %v3517, 0.044715
    %v3520 = vmul.f32 %v3518, 0.044715
    %v3521 = vadd.f32 %v3507, %v3519
    %v3522 = vadd.f32 %v3512, %v3520
    %v3523 = vmul.f32 %v3521, 0.7978846
    %v3524 = vmul.f32 %v3522, 0.7978846
    %v3525 = vtanh.pop %v3523
    %v3526 = vtanh.pop %v3524
    %v3527 = vadd.f32 %v3525, 1.0
    %v3528 = vadd.f32 %v3526, 1.0
    %v3529 = vmul.f32 %v3527, 0.5
    %v3530 = vmul.f32 %v3528, 0.5
    %v3531 = vmul.f32 %v3507, %v3529
    %v3532 = vmul.f32 %v3512, %v3530
    %v3533 = vlaneseq
    %v3534 = vshrl.u32 %v3533, 7
    %v3535 = vsub.s32 0, %v3534
    %v3536 = vrot.slane %v1985, %v3535
    %v3538 = vsel %vm1827, %v3531, 0
    %v3541 = vsel %vm1827, %v3532, 0
    %3543 = vmatprep.subr.mxu0 0.0
    %3544 = vmatpush1.msra.mxu0 0.0
    %3545 = vmatprep.subr.mxu0 0.0
    %3546 = vmatpush1.msra.mxu0 0.0
    %3547 = vmatprep.subr.mxu0 0.0
    %3548 = vmatpush1.msra.mxu0 0.0
    %3549 = vmatprep.subr.mxu0 0.0
    %3550 = vmatpush1.msra.mxu0 0.0
    %3551 = vmatprep.subr.mxu0 0.0
    %3552 = vmatpush1.msra.mxu0 0.0
    %3553 = vmatprep.subr.mxu0 0.0
    %3554 = vmatpush1.msra.mxu0 0.0
    %3555 = vmatprep.subr.mxu0 0.0
    %3556 = vmatpush1.msra.mxu0 0.0
    %3557 = vmatprep.subr.mxu0 0.0
    %3558 = vmatpush1.msra.mxu0 0.0
    %3559 = vmatprep.subr.mxu0 0.0
    %3560 = vmatpush1.msra.mxu0 %v1977
    %3561 = vmatprep.subr.mxu0 0.0
    %3562 = vmatpush1.msra.mxu0 %v1976
    %3563 = vmatprep.subr.mxu0 0.0
    %3564 = vmatpush1.msra.mxu0 %v1975
    %3565 = vmatprep.subr.mxu0 0.0
    %3566 = vmatpush1.msra.mxu0 %v1974
    %3567 = vmatprep.subr.mxu0 0.0
    %3568 = vmatpush1.msra.mxu0 %v1973
    %3569 = vmatprep.subr.mxu0 0.0
    %3570 = vmatpush1.msra.mxu0 %v1972
    %3571 = vmatprep.subr.mxu0 0.0
    %3572 = vmatpush1.msra.mxu0 %v1971
    %3573 = vmatprep.subr.mxu0 0.0
    %3574 = vmatpush1.msra.mxu0 %v1970
    %3575 = vmatprep.subr.mxu0 0.0
    %3576 = vmatpush2.msra.mxu0 0.0
    %3577 = vmatprep.subr.mxu0 0.0
    %3578 = vmatpush2.msra.mxu0 0.0
    %3579 = vmatprep.subr.mxu0 0.0
    %3580 = vmatpush2.msra.mxu0 0.0
    %3581 = vmatprep.subr.mxu0 0.0
    %3582 = vmatpush2.msra.mxu0 0.0
    %3583 = vmatprep.subr.mxu0 0.0
    %3584 = vmatpush2.msra.mxu0 0.0
    %3585 = vmatprep.subr.mxu0 0.0
    %3586 = vmatpush2.msra.mxu0 0.0
    %3587 = vmatprep.subr.mxu0 0.0
    %3588 = vmatpush2.msra.mxu0 0.0
    %3589 = vmatprep.subr.mxu0 0.0
    %3590 = vmatpush2.msra.mxu0 0.0
    %3591 = vmatprep.subr.mxu0 0.0
    %3592 = vmatpush2.msra.mxu0 0.0
    %3593 = vmatprep.subr.mxu0 0.0
    %3594 = vmatpush2.msra.mxu0 0.0
    %3595 = vmatprep.subr.mxu0 0.0
    %3596 = vmatpush2.msra.mxu0 0.0
    %3597 = vmatprep.subr.mxu0 0.0
    %3598 = vmatpush2.msra.mxu0 0.0
    %3599 = vmatprep.subr.mxu0 0.0
    %3600 = vmatpush2.msra.mxu0 0.0
    %3601 = vmatprep.subr.mxu0 0.0
    %3602 = vmatpush2.msra.mxu0 0.0
    %3603 = vmatprep.subr.mxu0 0.0
    %3604 = vmatpush2.msra.mxu0 0.0
    %3605 = vmatprep.subr.mxu0 0.0
    %3606 = vmatpush2.msra.mxu0 0.0
    %3607 = vmatprep.mubr.f32.mxu0 0.0
    %3608 = vmatmul.mubr.f32.gmra.mxu0 %v3538
    %v3609 = vpop.f32.mrf.mxu0
    %v3610 = vadd.f32 %v3536, %v3609
    %v3611 = vpop.f32.mrf.mxu0
    %3612 = vmatprep.mubr.f32.mxu0 0.0
    %3613 = vmatmul.mubr.f32.gmra.mxu0 %v3541
    %v3614 = vpop.f32.mrf.mxu0
    %v3615 = vadd.f32 %v3536, %v3614
    %v3616 = vpop.f32.mrf.mxu0
    %3617 = vdwg.mxu0
    %v3618 = vadd.f32 %v3428, %v3610
    %v3619 = vadd.f32 %v3429, %v3615
    %v3620 = vsel %vm134, %v3618, 0.0
    %3621 = vadd.xlane.f32.xlu0 %v3620
    %v3622 = vpop.xlane.xlu0 %3621
    %v3623 = vsel %vm134, %v3619, 0.0
    %3624 = vadd.xlane.f32.xlu0 %v3623
    %v3625 = vpop.xlane.xlu0 %3624
    %v3626 = vmul.f32 %v3622, %v141
    %v3627 = vmul.f32 %v3625, %v141
    %v3628 = vsub.f32 %v3618, %v3626
    %v3629 = vsub.f32 %v3619, %v3627
    %v3630 = vmul.f32 %v3628, %v3628
    %v3631 = vmul.f32 %v3629, %v3629
    %v3632 = vsel %vm134, %v3630, 0.0
    %3633 = vadd.xlane.f32.xlu0 %v3632
    %v3634 = vpop.xlane.xlu0 %3633
    %v3635 = vsel %vm134, %v3631, 0.0
    %3636 = vadd.xlane.f32.xlu0 %v3635
    %v3637 = vpop.xlane.xlu0 %3636
    %v3638 = vmul.f32 %v3634, %v141
    %v3639 = vmul.f32 %v3637, %v141
    %v3640 = vadd.f32 %v3638, 1e-12
    %v3641 = vadd.f32 %v3639, 1e-12
    %v3642 = vrsqrt.pop %v3640
    %v3643 = vrsqrt.pop %v3641
    %v3644 = vmul.f32 %v3628, %v3642
    %v3645 = vmul.f32 %v3629, %v3643
    %v3646 = vlaneseq
    %v3647 = vshrl.u32 %v3646, 7
    %v3648 = vsub.s32 0, %v3647
    %v3649 = vrot.slane %v1986, %v3648
    %v3650 = vmul.f32 %v3644, %v3649
    %v3651 = vmul.f32 %v3645, %v3649
    %v3652 = vlaneseq
    %v3653 = vshrl.u32 %v3652, 7
    %v3654 = vsub.s32 0, %v3653
    %v3655 = vrot.slane %v1987, %v3654
    %v3656 = vadd.f32 %v3650, %v3655
    %v3657 = vadd.f32 %v3651, %v3655
    %v3658 = vld [vmem:[%s3 + $0x78] sm:$0xff]
    %v3659 = vld [vmem:[%s3 + $0x80] sm:$0xff]
    %v3660 = vld [vmem:[%s3 + $0x88] sm:$0xff]
    %v3661 = vld [vmem:[%s3 + $0x90] sm:$0xff]
    %v3662 = vld [vmem:[%s3 + $0x98] sm:$0xff]
    %v3663 = vld [vmem:[%s3 + $0xa0] sm:$0xff]
    %v3664 = vld [vmem:[%s3 + $0xa8] sm:$0xff]
    %v3665 = vld [vmem:[%s3 + $0xb0] sm:$0xff]
    %v3666 = vld [vmem:[%s3 + $0xb8] sm:$0xff]
    %v3667 = vld [vmem:[%s3 + $0xc0] sm:$0xff]
    %v3668 = vld [vmem:[%s3 + $0xc8] sm:$0xff]
    %v3669 = vld [vmem:[%s3 + $0xd0] sm:$0xff]
    %v3670 = vld [vmem:[%s3 + $0xd8] sm:$0xff]
    %v3671 = vld [vmem:[%s3 + $0xe0] sm:$0xff]
    %v3672 = vld [vmem:[%s3 + $0xe8] sm:$0xff]
    %v3673 = vld [vmem:[%s3 + $0xf0] sm:$0xff]
    %v3674 = vld [vmem:[%s3 + $0x72] sm:$0x1]
    %v3675 = vld [vmem:[%s3 + $0x73] sm:$0x1]
    %v3677 = vsel %vm134, %v3674, 0
    %3679 = vmatprep.subr.mxu0 0.0
    %3680 = vmatpush1.msra.mxu0 0.0
    %3681 = vmatprep.subr.mxu0 0.0
    %3682 = vmatpush1.msra.mxu0 0.0
    %3683 = vmatprep.subr.mxu0 0.0
    %3684 = vmatpush1.msra.mxu0 0.0
    %3685 = vmatprep.subr.mxu0 0.0
    %3686 = vmatpush1.msra.mxu0 0.0
    %3687 = vmatprep.subr.mxu0 0.0
    %3688 = vmatpush1.msra.mxu0 0.0
    %3689 = vmatprep.subr.mxu0 0.0
    %3690 = vmatpush1.msra.mxu0 0.0
    %3691 = vmatprep.subr.mxu0 0.0
    %3692 = vmatpush1.msra.mxu0 0.0
    %3693 = vmatprep.subr.mxu0 0.0
    %3694 = vmatpush1.msra.mxu0 0.0
    %3695 = vmatprep.subr.mxu0 0.0
    %3696 = vmatpush1.msra.mxu0 0.0
    %3697 = vmatprep.subr.mxu0 0.0
    %3698 = vmatpush1.msra.mxu0 0.0
    %3699 = vmatprep.subr.mxu0 0.0
    %3700 = vmatpush1.msra.mxu0 0.0
    %3701 = vmatprep.subr.mxu0 0.0
    %3702 = vmatpush1.msra.mxu0 0.0
    %3703 = vmatprep.subr.mxu0 0.0
    %3704 = vmatpush1.msra.mxu0 %v3661
    %3705 = vmatprep.subr.mxu0 0.0
    %3706 = vmatpush1.msra.mxu0 %v3660
    %3707 = vmatprep.subr.mxu0 0.0
    %3708 = vmatpush1.msra.mxu0 %v3659
    %3709 = vmatprep.subr.mxu0 0.0
    %3710 = vmatpush1.msra.mxu0 %v3658
    %3711 = vmatprep.subr.mxu0 0.0
    %3712 = vmatpush2.msra.mxu0 0.0
    %3713 = vmatprep.subr.mxu0 0.0
    %3714 = vmatpush2.msra.mxu0 0.0
    %3715 = vmatprep.subr.mxu0 0.0
    %3716 = vmatpush2.msra.mxu0 0.0
    %3717 = vmatprep.subr.mxu0 0.0
    %3718 = vmatpush2.msra.mxu0 0.0
    %3719 = vmatprep.subr.mxu0 0.0
    %3720 = vmatpush2.msra.mxu0 0.0
    %3721 = vmatprep.subr.mxu0 0.0
    %3722 = vmatpush2.msra.mxu0 0.0
    %3723 = vmatprep.subr.mxu0 0.0
    %3724 = vmatpush2.msra.mxu0 0.0
    %3725 = vmatprep.subr.mxu0 0.0
    %3726 = vmatpush2.msra.mxu0 0.0
    %3727 = vmatprep.subr.mxu0 0.0
    %3728 = vmatpush2.msra.mxu0 0.0
    %3729 = vmatprep.subr.mxu0 0.0
    %3730 = vmatpush2.msra.mxu0 0.0
    %3731 = vmatprep.subr.mxu0 0.0
    %3732 = vmatpush2.msra.mxu0 0.0
    %3733 = vmatprep.subr.mxu0 0.0
    %3734 = vmatpush2.msra.mxu0 0.0
    %3735 = vmatprep.subr.mxu0 0.0
    %3736 = vmatpush2.msra.mxu0 0.0
    %3737 = vmatprep.subr.mxu0 0.0
    %3738 = vmatpush2.msra.mxu0 0.0
    %3739 = vmatprep.subr.mxu0 0.0
    %3740 = vmatpush2.msra.mxu0 0.0
    %3741 = vmatprep.subr.mxu0 0.0
    %3742 = vmatpush2.msra.mxu0 0.0
    %3743 = vmatprep.mubr.f32.mxu0 0.0
    %3744 = vmatmul.mubr.f32.gmra.mxu0 %v3677
    %v3745 = vpop.f32.mrf.mxu0
    %v3746 = vadd.f32 %v3675, %v3745
    %v3747 = vpop.f32.mrf.mxu0
    %3748 = vdwg.mxu0
    %v3749 = vld [vmem:[%s3 + $0x74] sm:$0x1]
    %v3750 = vlaneseq
    %v3751 = vshrl.u32 %v3750, 7
    %v3752 = vsub.s32 0, %v3751
    %v3753 = vrot.slane %v3749, %v3752
    %v3755 = vsel %vm134, %v3656, 0
    %v3758 = vsel %vm134, %v3657, 0
    %3760 = vmatprep.subr.mxu0 0.0
    %3761 = vmatpush1.msra.mxu0 0.0
    %3762 = vmatprep.subr.mxu0 0.0
    %3763 = vmatpush1.msra.mxu0 0.0
    %3764 = vmatprep.subr.mxu0 0.0
    %3765 = vmatpush1.msra.mxu0 0.0
    %3766 = vmatprep.subr.mxu0 0.0
    %3767 = vmatpush1.msra.mxu0 0.0
    %3768 = vmatprep.subr.mxu0 0.0
    %3769 = vmatpush1.msra.mxu0 0.0
    %3770 = vmatprep.subr.mxu0 0.0
    %3771 = vmatpush1.msra.mxu0 0.0
    %3772 = vmatprep.subr.mxu0 0.0
    %3773 = vmatpush1.msra.mxu0 0.0
    %3774 = vmatprep.subr.mxu0 0.0
    %3775 = vmatpush1.msra.mxu0 0.0
    %3776 = vmatprep.subr.mxu0 0.0
    %3777 = vmatpush1.msra.mxu0 0.0
    %3778 = vmatprep.subr.mxu0 0.0
    %3779 = vmatpush1.msra.mxu0 0.0
    %3780 = vmatprep.subr.mxu0 0.0
    %3781 = vmatpush1.msra.mxu0 0.0
    %3782 = vmatprep.subr.mxu0 0.0
    %3783 = vmatpush1.msra.mxu0 0.0
    %3784 = vmatprep.subr.mxu0 0.0
    %3785 = vmatpush1.msra.mxu0 %v3665
    %3786 = vmatprep.subr.mxu0 0.0
    %3787 = vmatpush1.msra.mxu0 %v3664
    %3788 = vmatprep.subr.mxu0 0.0
    %3789 = vmatpush1.msra.mxu0 %v3663
    %3790 = vmatprep.subr.mxu0 0.0
    %3791 = vmatpush1.msra.mxu0 %v3662
    %3792 = vmatprep.subr.mxu0 0.0
    %3793 = vmatpush2.msra.mxu0 0.0
    %3794 = vmatprep.subr.mxu0 0.0
    %3795 = vmatpush2.msra.mxu0 0.0
    %3796 = vmatprep.subr.mxu0 0.0
    %3797 = vmatpush2.msra.mxu0 0.0
    %3798 = vmatprep.subr.mxu0 0.0
    %3799 = vmatpush2.msra.mxu0 0.0
    %3800 = vmatprep.subr.mxu0 0.0
    %3801 = vmatpush2.msra.mxu0 0.0
    %3802 = vmatprep.subr.mxu0 0.0
    %3803 = vmatpush2.msra.mxu0 0.0
    %3804 = vmatprep.subr.mxu0 0.0
    %3805 = vmatpush2.msra.mxu0 0.0
    %3806 = vmatprep.subr.mxu0 0.0
    %3807 = vmatpush2.msra.mxu0 0.0
    %3808 = vmatprep.subr.mxu0 0.0
    %3809 = vmatpush2.msra.mxu0 0.0
    %3810 = vmatprep.subr.mxu0 0.0
    %3811 = vmatpush2.msra.mxu0 0.0
    %3812 = vmatprep.subr.mxu0 0.0
    %3813 = vmatpush2.msra.mxu0 0.0
    %3814 = vmatprep.subr.mxu0 0.0
    %3815 = vmatpush2.msra.mxu0 0.0
    %3816 = vmatprep.subr.mxu0 0.0
    %3817 = vmatpush2.msra.mxu0 0.0
    %3818 = vmatprep.subr.mxu0 0.0
    %3819 = vmatpush2.msra.mxu0 0.0
    %3820 = vmatprep.subr.mxu0 0.0
    %3821 = vmatpush2.msra.mxu0 0.0
    %3822 = vmatprep.subr.mxu0 0.0
    %3823 = vmatpush2.msra.mxu0 0.0
    %3824 = vmatprep.mubr.f32.mxu0 0.0
    %3825 = vmatmul.mubr.f32.gmra.mxu0 %v3755
    %v3826 = vpop.f32.mrf.mxu0
    %v3827 = vadd.f32 %v3753, %v3826
    %v3828 = vpop.f32.mrf.mxu0
    %3829 = vmatprep.mubr.f32.mxu0 0.0
    %3830 = vmatmul.mubr.f32.gmra.mxu0 %v3758
    %v3831 = vpop.f32.mrf.mxu0
    %v3832 = vadd.f32 %v3753, %v3831
    %v3833 = vpop.f32.mrf.mxu0
    %3834 = vdwg.mxu0
    %v3835 = vld [vmem:[%s3 + $0x75] sm:$0x1]
    %v3836 = vlaneseq
    %v3837 = vshrl.u32 %v3836, 7
    %v3838 = vsub.s32 0, %v3837
    %v3839 = vrot.slane %v3835, %v3838
    %3840 = vmatprep.subr.mxu0 0.0
    %3841 = vmatpush1.msra.mxu0 0.0
    %3842 = vmatprep.subr.mxu0 0.0
    %3843 = vmatpush1.msra.mxu0 0.0
    %3844 = vmatprep.subr.mxu0 0.0
    %3845 = vmatpush1.msra.mxu0 0.0
    %3846 = vmatprep.subr.mxu0 0.0
    %3847 = vmatpush1.msra.mxu0 0.0
    %3848 = vmatprep.subr.mxu0 0.0
    %3849 = vmatpush1.msra.mxu0 0.0
    %3850 = vmatprep.subr.mxu0 0.0
    %3851 = vmatpush1.msra.mxu0 0.0
    %3852 = vmatprep.subr.mxu0 0.0
    %3853 = vmatpush1.msra.mxu0 0.0
    %3854 = vmatprep.subr.mxu0 0.0
    %3855 = vmatpush1.msra.mxu0 0.0
    %3856 = vmatprep.subr.mxu0 0.0
    %3857 = vmatpush1.msra.mxu0 0.0
    %3858 = vmatprep.subr.mxu0 0.0
    %3859 = vmatpush1.msra.mxu0 0.0
    %3860 = vmatprep.subr.mxu0 0.0
    %3861 = vmatpush1.msra.mxu0 0.0
    %3862 = vmatprep.subr.mxu0 0.0
    %3863 = vmatpush1.msra.mxu0 0.0
    %3864 = vmatprep.subr.mxu0 0.0
    %3865 = vmatpush1.msra.mxu0 %v3669
    %3866 = vmatprep.subr.mxu0 0.0
    %3867 = vmatpush1.msra.mxu0 %v3668
    %3868 = vmatprep.subr.mxu0 0.0
    %3869 = vmatpush1.msra.mxu0 %v3667
    %3870 = vmatprep.subr.mxu0 0.0
    %3871 = vmatpush1.msra.mxu0 %v3666
    %3872 = vmatprep.subr.mxu0 0.0
    %3873 = vmatpush2.msra.mxu0 0.0
    %3874 = vmatprep.subr.mxu0 0.0
    %3875 = vmatpush2.msra.mxu0 0.0
    %3876 = vmatprep.subr.mxu0 0.0
    %3877 = vmatpush2.msra.mxu0 0.0
    %3878 = vmatprep.subr.mxu0 0.0
    %3879 = vmatpush2.msra.mxu0 0.0
    %3880 = vmatprep.subr.mxu0 0.0
    %3881 = vmatpush2.msra.mxu0 0.0
    %3882 = vmatprep.subr.mxu0 0.0
    %3883 = vmatpush2.msra.mxu0 0.0
    %3884 = vmatprep.subr.mxu0 0.0
    %3885 = vmatpush2.msra.mxu0 0.0
    %3886 = vmatprep.subr.mxu0 0.0
    %3887 = vmatpush2.msra.mxu0 0.0
    %3888 = vmatprep.subr.mxu0 0.0
    %3889 = vmatpush2.msra.mxu0 0.0
    %3890 = vmatprep.subr.mxu0 0.0
    %3891 = vmatpush2.msra.mxu0 0.0
    %3892 = vmatprep.subr.mxu0 0.0
    %3893 = vmatpush2.msra.mxu0 0.0
    %3894 = vmatprep.subr.mxu0 0.0
    %3895 = vmatpush2.msra.mxu0 0.0
    %3896 = vmatprep.subr.mxu0 0.0
    %3897 = vmatpush2.msra.mxu0 0.0
    %3898 = vmatprep.subr.mxu0 0.0
    %3899 = vmatpush2.msra.mxu0 0.0
    %3900 = vmatprep.subr.mxu0 0.0
    %3901 = vmatpush2.msra.mxu0 0.0
    %3902 = vmatprep.subr.mxu0 0.0
    %3903 = vmatpush2.msra.mxu0 0.0
    %3904 = vmatprep.mubr.f32.mxu0 0.0
    %3905 = vmatmul.mubr.f32.gmra.mxu0 %v3755
    %v3906 = vpop.f32.mrf.mxu0
    %v3907 = vadd.f32 %v3839, %v3906
    %v3908 = vpop.f32.mrf.mxu0
    %3909 = vmatprep.mubr.f32.mxu0 0.0
    %3910 = vmatmul.mubr.f32.gmra.mxu0 %v3758
    %v3911 = vpop.f32.mrf.mxu0
    %v3912 = vadd.f32 %v3839, %v3911
    %v3913 = vpop.f32.mrf.mxu0
    %3914 = vdwg.mxu0
    %v3915 = vlaneseq
    %v3916 = vshrl.u32 %v3915, 7
    %v3917 = vsub.s32 0, %v3916
    %v3918 = vrot.slane %v3746, %v3917
    %v3919 = vmul.f32 %v3827, %v3918
    %v3920 = vmul.f32 %v3832, %v3918
    %v3921 = vsel %vm134, %v3919, 0.0
    %3922 = vadd.xlane.f32.xlu0 %v3921
    %v3923 = vpop.xlane.xlu0 %3922
    %v3924 = vsel %vm134, %v3920, 0.0
    %3925 = vadd.xlane.f32.xlu0 %v3924
    %v3926 = vpop.xlane.xlu0 %3925
    %v3927 = vmul.f32 %v3923, 0.17677669
    %v3928 = vmul.f32 %v3926, 0.17677669
    %v3929 = vrot.slane %v3927, 4
    %v3930 = vmax.f32 %v3927, %v3929
    %v3931 = vrot.slane %v3930, 2
    %v3932 = vmax.f32 %v3930, %v3931
    %v3933 = vrot.slane %v3932, 1
    %v3934 = vmax.f32 %v3932, %v3933
    %v3935 = vrot.slane %v3928, 4
    %v3936 = vmax.f32 %v3928, %v3935
    %v3937 = vrot.slane %v3936, 2
    %v3938 = vmax.f32 %v3936, %v3937
    %v3939 = vrot.slane %v3938, 1
    %v3940 = vmax.f32 %v3938, %v3939
    %v3941 = vsub.f32 %v3927, %v3934
    %v3942 = vsub.f32 %v3928, %v3940
    %v3943 = vmul.f32 %v3941, 1.442695
    %v3944 = vpow.pop %v3943
    %v3945 = vmul.f32 %v3942, 1.442695
    %v3946 = vpow.pop %v3945
    %v3947 = vrot.slane %v3944, 4
    %v3948 = vadd.f32 %v3944, %v3947
    %v3949 = vrot.slane %v3948, 2
    %v3950 = vadd.f32 %v3948, %v3949
    %v3951 = vrot.slane %v3950, 1
    %v3952 = vadd.f32 %v3950, %v3951
    %v3953 = vrot.slane %v3946, 4
    %v3954 = vadd.f32 %v3946, %v3953
    %v3955 = vrot.slane %v3954, 2
    %v3956 = vadd.f32 %v3954, %v3955
    %v3957 = vrot.slane %v3956, 1
    %v3958 = vadd.f32 %v3956, %v3957
    %v3959 = vrcp.pop %v3952
    %v3960 = vmul.f32 %v3944, %v3959
    %v3961 = vrcp.pop %v3958
    %v3962 = vmul.f32 %v3946, %v3961
    %v3963 = vmul.f32 %v3960, %v3907
    %v3964 = vmul.f32 %v3962, %v3912
    %v3965 = vsel %vm134, %v3963, 0.0
    %v3966 = vrot.slane %v3965, 4
    %v3967 = vadd.f32 %v3965, %v3966
    %v3968 = vrot.slane %v3967, 2
    %v3969 = vadd.f32 %v3967, %v3968
    %v3970 = vrot.slane %v3969, 1
    %v3971 = vadd.f32 %v3969, %v3970
    %v3972 = vsel %vm134, %v3964, 0.0
    %v3973 = vrot.slane %v3972, 4
    %v3974 = vadd.f32 %v3972, %v3973
    %v3975 = vrot.slane %v3974, 2
    %v3976 = vadd.f32 %v3974, %v3975
    %v3977 = vrot.slane %v3976, 1
    %v3978 = vadd.f32 %v3976, %v3977
    %v3979 = vld [vmem:[%s3 + $0x76] sm:$0x1]
    %v3980 = vlaneseq
    %v3981 = vshrl.u32 %v3980, 7
    %v3982 = vsub.s32 0, %v3981
    %v3983 = vrot.slane %v3979, %v3982
    %v3986 = vsel %vm1580, %v3978, %v3971
    %v3987 = vsel %vm134, %v3986, 0
    %3989 = vmatprep.subr.mxu0 0.0
    %3990 = vmatpush1.msra.mxu0 0.0
    %3991 = vmatprep.subr.mxu0 0.0
    %3992 = vmatpush1.msra.mxu0 0.0
    %3993 = vmatprep.subr.mxu0 0.0
    %3994 = vmatpush1.msra.mxu0 0.0
    %3995 = vmatprep.subr.mxu0 0.0
    %3996 = vmatpush1.msra.mxu0 0.0
    %3997 = vmatprep.subr.mxu0 0.0
    %3998 = vmatpush1.msra.mxu0 0.0
    %3999 = vmatprep.subr.mxu0 0.0
    %4000 = vmatpush1.msra.mxu0 0.0
    %4001 = vmatprep.subr.mxu0 0.0
    %4002 = vmatpush1.msra.mxu0 0.0
    %4003 = vmatprep.subr.mxu0 0.0
    %4004 = vmatpush1.msra.mxu0 0.0
    %4005 = vmatprep.subr.mxu0 0.0
    %4006 = vmatpush1.msra.mxu0 0.0
    %4007 = vmatprep.subr.mxu0 0.0
    %4008 = vmatpush1.msra.mxu0 0.0
    %4009 = vmatprep.subr.mxu0 0.0
    %4010 = vmatpush1.msra.mxu0 0.0
    %4011 = vmatprep.subr.mxu0 0.0
    %4012 = vmatpush1.msra.mxu0 0.0
    %4013 = vmatprep.subr.mxu0 0.0
    %4014 = vmatpush1.msra.mxu0 %v3673
    %4015 = vmatprep.subr.mxu0 0.0
    %4016 = vmatpush1.msra.mxu0 %v3672
    %4017 = vmatprep.subr.mxu0 0.0
    %4018 = vmatpush1.msra.mxu0 %v3671
    %4019 = vmatprep.subr.mxu0 0.0
    %4020 = vmatpush1.msra.mxu0 %v3670
    %4021 = vmatprep.subr.mxu0 0.0
    %4022 = vmatpush2.msra.mxu0 0.0
    %4023 = vmatprep.subr.mxu0 0.0
    %4024 = vmatpush2.msra.mxu0 0.0
    %4025 = vmatprep.subr.mxu0 0.0
    %4026 = vmatpush2.msra.mxu0 0.0
    %4027 = vmatprep.subr.mxu0 0.0
    %4028 = vmatpush2.msra.mxu0 0.0
    %4029 = vmatprep.subr.mxu0 0.0
    %4030 = vmatpush2.msra.mxu0 0.0
    %4031 = vmatprep.subr.mxu0 0.0
    %4032 = vmatpush2.msra.mxu0 0.0
    %4033 = vmatprep.subr.mxu0 0.0
    %4034 = vmatpush2.msra.mxu0 0.0
    %4035 = vmatprep.subr.mxu0 0.0
    %4036 = vmatpush2.msra.mxu0 0.0
    %4037 = vmatprep.subr.mxu0 0.0
    %4038 = vmatpush2.msra.mxu0 0.0
    %4039 = vmatprep.subr.mxu0 0.0
    %4040 = vmatpush2.msra.mxu0 0.0
    %4041 = vmatprep.subr.mxu0 0.0
    %4042 = vmatpush2.msra.mxu0 0.0
    %4043 = vmatprep.subr.mxu0 0.0
    %4044 = vmatpush2.msra.mxu0 0.0
    %4045 = vmatprep.subr.mxu0 0.0
    %4046 = vmatpush2.msra.mxu0 0.0
    %4047 = vmatprep.subr.mxu0 0.0
    %4048 = vmatpush2.msra.mxu0 0.0
    %4049 = vmatprep.subr.mxu0 0.0
    %4050 = vmatpush2.msra.mxu0 0.0
    %4051 = vmatprep.subr.mxu0 0.0
    %4052 = vmatpush2.msra.mxu0 0.0
    %4053 = vmatprep.mubr.f32.mxu0 0.0
    %4054 = vmatmul.mubr.f32.gmra.mxu0 %v3987
    %v4055 = vpop.f32.mrf.mxu0
    %v4056 = vadd.f32 %v3983, %v4055
    %v4057 = vpop.f32.mrf.mxu0
    %4058 = vdwg.mxu0
    %v4059 = vld [vmem:[%s3 + $0xf8] sm:$0xff]
    %v4060 = vld [vmem:[%s3 + $0x100] sm:$0xff]
    %v4061 = vld [vmem:[%s3 + $0x108] sm:$0xff]
    %v4062 = vld [vmem:[%s3 + $0x110] sm:$0xff]
    %v4063 = vld [vmem:[%s3 + $0x77] sm:$0x1]
    %v4064 = vlaneseq
    %v4065 = vshrl.u32 %v4064, 7
    %v4066 = vsub.s32 0, %v4065
    %v4067 = vrot.slane %v4063, %v4066
    %v4069 = vsel %vm134, %v4056, 0
    %4071 = vmatprep.subr.mxu0 0.0
    %4072 = vmatpush1.msra.mxu0 0.0
    %4073 = vmatprep.subr.mxu0 0.0
    %4074 = vmatpush1.msra.mxu0 0.0
    %4075 = vmatprep.subr.mxu0 0.0
    %4076 = vmatpush1.msra.mxu0 0.0
    %4077 = vmatprep.subr.mxu0 0.0
    %4078 = vmatpush1.msra.mxu0 0.0
    %4079 = vmatprep.subr.mxu0 0.0
    %4080 = vmatpush1.msra.mxu0 0.0
    %4081 = vmatprep.subr.mxu0 0.0
    %4082 = vmatpush1.msra.mxu0 0.0
    %4083 = vmatprep.subr.mxu0 0.0
    %4084 = vmatpush1.msra.mxu0 0.0
    %4085 = vmatprep.subr.mxu0 0.0
    %4086 = vmatpush1.msra.mxu0 0.0
    %4087 = vmatprep.subr.mxu0 0.0
    %4088 = vmatpush1.msra.mxu0 0.0
    %4089 = vmatprep.subr.mxu0 0.0
    %4090 = vmatpush1.msra.mxu0 0.0
    %4091 = vmatprep.subr.mxu0 0.0
    %4092 = vmatpush1.msra.mxu0 0.0
    %4093 = vmatprep.subr.mxu0 0.0
    %4094 = vmatpush1.msra.mxu0 0.0
    %4095 = vmatprep.subr.mxu0 0.0
    %4096 = vmatpush1.msra.mxu0 %v4062
    %4097 = vmatprep.subr.mxu0 0.0
    %4098 = vmatpush1.msra.mxu0 %v4061
    %4099 = vmatprep.subr.mxu0 0.0
    %4100 = vmatpush1.msra.mxu0 %v4060
    %4101 = vmatprep.subr.mxu0 0.0
    %4102 = vmatpush1.msra.mxu0 %v4059
    %4103 = vmatprep.subr.mxu0 0.0
    %4104 = vmatpush2.msra.mxu0 0.0
    %4105 = vmatprep.subr.mxu0 0.0
    %4106 = vmatpush2.msra.mxu0 0.0
    %4107 = vmatprep.subr.mxu0 0.0
    %4108 = vmatpush2.msra.mxu0 0.0
    %4109 = vmatprep.subr.mxu0 0.0
    %4110 = vmatpush2.msra.mxu0 0.0
    %4111 = vmatprep.subr.mxu0 0.0
    %4112 = vmatpush2.msra.mxu0 0.0
    %4113 = vmatprep.subr.mxu0 0.0
    %4114 = vmatpush2.msra.mxu0 0.0
    %4115 = vmatprep.subr.mxu0 0.0
    %4116 = vmatpush2.msra.mxu0 0.0
    %4117 = vmatprep.subr.mxu0 0.0
    %4118 = vmatpush2.msra.mxu0 0.0
    %4119 = vmatprep.subr.mxu0 0.0
    %4120 = vmatpush2.msra.mxu0 0.0
    %4121 = vmatprep.subr.mxu0 0.0
    %4122 = vmatpush2.msra.mxu0 0.0
    %4123 = vmatprep.subr.mxu0 0.0
    %4124 = vmatpush2.msra.mxu0 0.0
    %4125 = vmatprep.subr.mxu0 0.0
    %4126 = vmatpush2.msra.mxu0 0.0
    %4127 = vmatprep.subr.mxu0 0.0
    %4128 = vmatpush2.msra.mxu0 0.0
    %4129 = vmatprep.subr.mxu0 0.0
    %4130 = vmatpush2.msra.mxu0 0.0
    %4131 = vmatprep.subr.mxu0 0.0
    %4132 = vmatpush2.msra.mxu0 0.0
    %4133 = vmatprep.subr.mxu0 0.0
    %4134 = vmatpush2.msra.mxu0 0.0
    %4135 = vmatprep.mubr.f32.mxu0 0.0
    %4136 = vmatmul.mubr.f32.gmra.mxu0 %v4069
    %v4137 = vpop.f32.mrf.mxu0
    %v4138 = vadd.f32 %v4067, %v4137
    %v4139 = vpop.f32.mrf.mxu0
    %4140 = vdwg.mxu0
    %v4141 = vxor.u32 %v4138, 2147483648
    %v4142 = vmul.f32 %v4141, 1.442695
    %v4143 = vpow.pop %v4142
    %v4144 = vadd.f32 %v4143, 1.0
    %v4145 = vrcp.pop %v4144
    %v4146 = vmul.f32 1.0, %v4145
    %vm4147 = vcmask 9216
    %4148 = vst.msk [vmem:[#allocation2] sm:$0x3] %vm4147, %v4146
    // Predicated region
    $region18: #{tpu_custom_call.1} parent=1 // pred_check
      _
    $region19: #{tpu_custom_call.1} parent=1 // pred_check_branch
      %4150 = sbr.rel (0) target = $region21
    $region20: #{tpu_custom_call.1} parent=1 // pred_region
      %s4152 = ssub.s32 32, 32
      %4153 = vsyncadd [#allocation3], %s4152
      %s4155 = sshll.u32 [#allocation2], 4
      %s4156 = int_to_ptr.vmem [resolvable:$true] %s4155
      %4158 = dma.vmem_to_hbm [thread:$0]  %s4156, 32, %s4, [#allocation3]
    $region21: #{tpu_custom_call.1} parent=1 // pred_fallthru
      _
    // Predicated region
    $region22: #{tpu_custom_call.1} parent=1 // pred_check
      _
    $region23: #{tpu_custom_call.1} parent=1 // pred_check_branch
      %4160 = sbr.rel (0) target = $region25
    $region24: #{tpu_custom_call.1} parent=1 // pred_region
      %4161 = dma.done [#allocation3], 32
    $region25: #{tpu_custom_call.1} parent=1 // pred_fallthru
      _
    %4162 = vsyncpa [#allocation3], 1

</llo_original>
